<compile_context>
chip_gen: v7x
topology: tpu7x:2x2x1
jax: 0.10.0
libtpu: 0.0.40
codegen_flags: <defaults>
</compile_context>

<pallas_src>
import functools
import math

import jax
import jax.numpy as jnp
from jax.experimental import pallas as pl
from jax.experimental.pallas import tpu as pltpu


def _cdiv(a, b):
    return -(-a // b)


def _round_up(x, m):
    return ((x + m - 1) // m) * m


def _vmem_capacity_bytes():
    """Physical per-core VMEM, generation-aware; conservative fallback = 64 MiB (v7x)."""
    try:
        info = pltpu.get_tpu_info()
        cap = int(getattr(info, "vmem_capacity_bytes", 0))
        if cap > 0:
            return cap
    except Exception:
        pass
    return 64 << 20


@functools.lru_cache(maxsize=None)
def _single_buffer_supported():
    """One-time feature probe: pipeline_mode=pl.Buffered(1) on a grid-invariant block.

    The probe is a tiny dedicated kernel, so a failure here cannot mask bugs in the
    real MLP kernel (which is built without any try/except).
    """
    if not hasattr(pl, "Buffered"):
        return False

    def _probe_kernel(c_ref, x_ref, o_ref):
        o_ref[...] = x_ref[...] + c_ref[...]

    try:
        f = pl.pallas_call(
            _probe_kernel,
            out_shape=jax.ShapeDtypeStruct((16, 128), jnp.float32),
            grid_spec=pltpu.PrefetchScalarGridSpec(
                num_scalar_prefetch=0,
                grid=(2,),
                in_specs=[
                    pl.BlockSpec((8, 128), lambda i: (0, 0),
                                 pipeline_mode=pl.Buffered(1)),
                    pl.BlockSpec((8, 128), lambda i: (i, 0)),
                ],
                out_specs=pl.BlockSpec((8, 128), lambda i: (i, 0)),
            ),
        )
        jax.block_until_ready(
            f(jnp.zeros((8, 128), jnp.float32), jnp.zeros((16, 128), jnp.float32))
        )
        return True
    except Exception:
        return False


def _mlp_kernel(num_layers_total, compute_dtype, x_ref, *refs):
    """Fused MLP: all parameters resident in VMEM, one batch tile per grid step.

    refs = (w0, b0, w1, b1, ..., w_{L-1}, b_{L-1}, out_ref).
    ReLU after every layer except the last.  Matmul operands are bf16 (compute_dtype),
    accumulation is f32, biases are f32.
    """
    out_ref = refs[-1]
    params = refs[:-1]
    h = x_ref[...].astype(compute_dtype)        # bf16 feed to the MXU
    for i in range(num_layers_total):
        w = params[2 * i][...]                   # already compute_dtype (bf16)
        b = params[2 * i + 1][...]               # (1, d_out) f32, broadcasts over rows
        acc = jnp.dot(h, w, preferred_element_type=jnp.float32)
        acc = acc + b
        if i < num_layers_total - 1:
            # Inter-layer activations in compute dtype: halves vreg/VMEM pressure
            # and feeds the next matmul at full bf16 MXU rate.
            h = jnp.maximum(acc, 0.0).astype(compute_dtype)
        else:
            out_ref[...] = acc.astype(out_ref.dtype)


def mlp_forward(x, weights, biases, *, tile_b=512, compute_dtype=jnp.bfloat16):
    """x: (B, input_dim). weights[i]: (d_in_i, d_out_i). biases[i]: (1, d_out_i)."""
    B, in_dim = x.shape
    num_layers_total = len(weights)
    out_dim = weights[-1].shape[1]
    out_dtype = x.dtype

    # bf16 MXU feed: weights cast here (for repeated jit'd calls, pre-cast them once
    # outside); biases stay f32 and are added into the f32 accumulator.
    weights = [w.astype(compute_dtype) for w in weights]
    biases = [jnp.asarray(b, jnp.float32).reshape(1, -1) for b in biases]

    single_buf = _single_buffer_supported()
    buf_factor = 1 if single_buf else 2

    def _nbytes(shape, dt):
        n = 1
        for s in shape:
            n *= s
        return n * jnp.dtype(dt).itemsize

    weight_bytes = buf_factor * sum(_nbytes(w.shape, w.dtype) for w in weights)
    # (1, d_out) biases are sublane-padded to 8 rows in VMEM.
    bias_bytes = buf_factor * sum(_nbytes((8, b.shape[-1]), jnp.float32) for b in biases)
    max_width = max(w.shape[1] for w in weights)
    x_item = jnp.dtype(x.dtype).itemsize
    out_item = jnp.dtype(out_dtype).itemsize
    c_item = jnp.dtype(compute_dtype).itemsize

    def _budget(tb):
        x_tile = 2 * tb * in_dim * x_item                      # double-buffered input tile
        out_tile = 2 * tb * out_dim * out_item                 # double-buffered output tile
        live = 2 * tb * max_width * 4 + tb * in_dim * c_item   # f32 acc + bf16 activations
        return weight_bytes + bias_bytes + x_tile + out_tile + live + (4 << 20)

    # Generation-aware VMEM cap (~85% of physical, leaving headroom for Mosaic's own
    # scratch): ~109 MiB on v5e/v6e (128 MiB), ~54 MiB per TC on v7x (64 MiB).
    cap = int(0.85 * _vmem_capacity_bytes())

    sublane = 8
    tile_b = max(sublane, min(tile_b, _round_up(B, sublane)))
    tile_b = _round_up(tile_b, sublane)

    # Shrink the batch tile if the budget does not fit this generation's VMEM.
    while _budget(tile_b) > cap and tile_b > sublane:
        tile_b = max(sublane, _round_up(tile_b // 2, sublane))
    if _budget(tile_b) > cap:
        # TODO(synk): stream weight tiles over a layer/K "arbitrary" grid axis with a
        # VMEM f32 accumulator (pl.when init/finalize) for parameter sets exceeding
        # the per-core VMEM budget, instead of requiring full residency.
        raise ValueError(
            f"MLP parameter set ({weight_bytes / 2**20:.1f} MiB resident) exceeds the "
            f"per-core VMEM budget ({cap / 2**20:.1f} MiB); weight streaming not implemented."
        )

    # Prefer an even number of grid steps so v7x megacore (2 TCs) stays balanced.
    steps = _cdiv(B, tile_b)
    if steps % 2 == 1 and B > 2 * sublane:
        even = steps + 1
        tb2 = max(sublane, _round_up(_cdiv(B, even), sublane))
        if _cdiv(B, tb2) == even:
            tile_b, steps = tb2, even
    grid = (steps,)

    vmem_limit = int(min(max(_budget(tile_b), 32 << 20), cap))

    # Ragged B and non-multiple-of-128 out_dim are handled in-kernel by Pallas
    # partial-block semantics (OOB input rows are garbage but each output row depends
    # only on its own input row; OOB output rows are dropped by masked stores), so no
    # wrapper-side pad of x / slice of the output is materialized in HBM.
    # NOTE: padded rows in the last tile produce garbage values before masking -- do
    # not reduce over the raw kernel output block inside the kernel.
    x_spec = pl.BlockSpec((tile_b, in_dim), lambda i: (i, 0))
    out_spec = pl.BlockSpec((tile_b, out_dim), lambda i: (i, 0))

    def _param_spec(shape):
        index_map = lambda i: (0,) * len(shape)
        if single_buf:
            # Grid-invariant block: single buffer halves its VMEM footprint.
            return pl.BlockSpec(shape, index_map, pipeline_mode=pl.Buffered(1))
        return pl.BlockSpec(shape, index_map)

    in_specs = [x_spec]
    args = [x]
    for w, b in zip(weights, biases):
        in_specs += [_param_spec(w.shape), _param_spec(b.shape)]
        args += [w, b]

    kernel = functools.partial(_mlp_kernel, num_layers_total, compute_dtype)
    return pl.pallas_call(
        kernel,
        out_shape=jax.ShapeDtypeStruct((B, out_dim), out_dtype),
        grid_spec=pltpu.PrefetchScalarGridSpec(
            num_scalar_prefetch=0,
            grid=grid,
            in_specs=in_specs,
            out_specs=out_spec,
        ),
        compiler_params=pltpu.CompilerParams(
            dimension_semantics=("parallel",),
            vmem_limit_bytes=vmem_limit,
        ),
    )(*args)


def make_mlp_params(key, input_dim, hidden_dim, output_dim, num_layers=3):
    """Xavier-uniform weights (zero biases), matching the PyTorch init.

    Returns weights already transposed to (d_in, d_out) layout.
    """
    dims = []
    for i in range(num_layers):
        dims.append((input_dim if i == 0 else hidden_dim, hidden_dim))
    dims.append((hidden_dim, output_dim))

    weights, biases = [], []
    for (d_in, d_out) in dims:
        key, sub = jax.random.split(key)
        limit = math.sqrt(6.0 / (d_in + d_out))
        w = jax.random.uniform(sub, (d_in, d_out), jnp.float32, -limit, limit)
        b = jnp.zeros((1, d_out), jnp.float32)
        weights.append(w)
        biases.append(b)
    return weights, biases


def mlp_reference(x, weights, biases, compute_dtype=None):
    """Pure-JAX reference.  If compute_dtype is given, mimics the kernel's precision
    (bf16 matmul operands, f32 accumulation); otherwise full f32 math."""
    h = x
    n = len(weights)
    for i, (w, b) in enumerate(zip(weights, biases)):
        if compute_dtype is not None:
            a, wc = h.astype(compute_dtype), w.astype(compute_dtype)
        else:
            a, wc = h, w
        h = jnp.dot(a, wc, preferred_element_type=jnp.float32) + b.astype(jnp.float32)
        if i < n - 1:
            h = jnp.maximum(h, 0.0)
    return h.astype(x.dtype)


if __name__ == "__main__":
    # Scaled-down shapes consistent with MLP(input_dim=2560, hidden_dim=1280,
    # output_dim=320, num_layers=3).  B=500 exercises the ragged last batch tile
    # (handled in-kernel, no wrapper pad) and OUTPUT_DIM=80 exercises the
    # full-extent (non-128) output width path.
    B, INPUT_DIM, HIDDEN_DIM, OUTPUT_DIM, NUM_LAYERS = 500, 512, 256, 80, 3

    key = jax.random.PRNGKey(0)
    key, xkey = jax.random.split(key)
    x = jax.random.normal(xkey, (B, INPUT_DIM), jnp.float32)

    weights, biases = make_mlp_params(key, INPUT_DIM, HIDDEN_DIM, OUTPUT_DIM, NUM_LAYERS)

    out = jax.block_until_ready(mlp_forward(x, weights, biases, tile_b=512))
    assert out.shape == (B, OUTPUT_DIM), out.shape

    # Precision-matched reference (same bf16 operand cast + f32 accumulation).
    ref_bf16 = mlp_reference(x, weights, biases, compute_dtype=jnp.bfloat16)
    assert jnp.allclose(out, ref_bf16, atol=2e-3, rtol=2e-3), "mismatch vs bf16 reference"

    # Loose sanity check vs full-f32 math (bf16 MXU feed costs ~1e-2 absolute here).
    ref_f32 = mlp_reference(x, weights, biases)
    assert jnp.allclose(out, ref_f32, atol=2e-1, rtol=2e-1), "mismatch vs f32 reference"

    print("KERNEL_OK")
</pallas_src>

<mosaic_0001>
module attributes {stable_mosaic.version = 11 : i64} {
  func.func @_probe_kernel(%arg0: i32, %arg1: memref<8x128xf32, #tpu.memory_space<vmem>>, %arg2: memref<8x128xf32, #tpu.memory_space<vmem>>, %arg3: memref<8x128xf32, #tpu.memory_space<vmem>>) attributes {dimension_semantics = [#tpu.dimension_semantics<arbitrary>], iteration_bounds = array<i64: 2>, scalar_prefetch = 0 : i64, scratch_operands = 0 : i64, tpu.core_type = #tpu.core_type<tc>, window_params = [{pipeline_mode = #tpu.pipeline_mode<synchronous>, transform_indices = @transform_0, window_bounds = array<i64: 8, 128>}, {transform_indices = @transform_1, window_bounds = array<i64: 8, 128>}, {transform_indices = @transform_2, window_bounds = array<i64: 8, 128>}]} {
    %c0 = arith.constant 0 : index
    %c0_0 = arith.constant 0 : index
    %0 = vector.load %arg2[%c0, %c0_0] : memref<8x128xf32, #tpu.memory_space<vmem>>, vector<8x128xf32>
    %c0_1 = arith.constant 0 : index
    %c0_2 = arith.constant 0 : index
    %1 = vector.load %arg1[%c0_1, %c0_2] : memref<8x128xf32, #tpu.memory_space<vmem>>, vector<8x128xf32>
    %2 = arith.addf %0, %1 : vector<8x128xf32>
    %c0_3 = arith.constant 0 : index
    %c0_4 = arith.constant 0 : index
    %3 = vector.load %arg3[%c0_3, %c0_4] : memref<8x128xf32, #tpu.memory_space<vmem>>, vector<8x128xf32>
    tpu.vector_store %arg3[%c0_3, %c0_4], %2 {strides = array<i32>} : memref<8x128xf32, #tpu.memory_space<vmem>>, vector<8x128xf32>,
    return
  }
  func.func @transform_0(%arg0: i32) -> (i32, i32) {
    %c0_i32 = arith.constant 0 : i32
    %c0_i32_0 = arith.constant 0 : i32
    %c0_i32_1 = arith.constant 0 : i32
    return %c0_i32, %c0_i32_0 : i32, i32
  }
  func.func @transform_1(%arg0: i32) -> (i32, i32) {
    %c0_i32 = arith.constant 0 : i32
    %c0_i32_0 = arith.constant 0 : i32
    return %arg0, %c0_i32 : i32, i32
  }
  func.func @transform_2(%arg0: i32) -> (i32, i32) {
    %c0_i32 = arith.constant 0 : i32
    %c0_i32_0 = arith.constant 0 : i32
    return %arg0, %c0_i32 : i32, i32
  }
}

module attributes {stable_mosaic.version = 11 : i64} {
  func.func @_mlp_kernel(%arg0: i32, %arg1: memref<256x512xf32, #tpu.memory_space<vmem>>, %arg2: memref<512x256xbf16, #tpu.memory_space<vmem>>, %arg3: memref<1x256xf32, #tpu.memory_space<vmem>>, %arg4: memref<256x256xbf16, #tpu.memory_space<vmem>>, %arg5: memref<1x256xf32, #tpu.memory_space<vmem>>, %arg6: memref<256x256xbf16, #tpu.memory_space<vmem>>, %arg7: memref<1x256xf32, #tpu.memory_space<vmem>>, %arg8: memref<256x80xbf16, #tpu.memory_space<vmem>>, %arg9: memref<1x80xf32, #tpu.memory_space<vmem>>, %arg10: memref<256x80xf32, #tpu.memory_space<vmem>>) attributes {dimension_semantics = [#tpu.dimension_semantics<parallel>], iteration_bounds = array<i64: 2>, scalar_prefetch = 0 : i64, scratch_operands = 0 : i64, tpu.core_type = #tpu.core_type<tc>, window_params = [{transform_indices = @transform_0, window_bounds = array<i64: 256, 512>}, {pipeline_mode = #tpu.pipeline_mode<synchronous>, transform_indices = @transform_1, window_bounds = array<i64: 512, 256>}, {pipeline_mode = #tpu.pipeline_mode<synchronous>, transform_indices = @transform_2, window_bounds = array<i64: 1, 256>}, {pipeline_mode = #tpu.pipeline_mode<synchronous>, transform_indices = @transform_3, window_bounds = array<i64: 256, 256>}, {pipeline_mode = #tpu.pipeline_mode<synchronous>, transform_indices = @transform_4, window_bounds = array<i64: 1, 256>}, {pipeline_mode = #tpu.pipeline_mode<synchronous>, transform_indices = @transform_5, window_bounds = array<i64: 256, 256>}, {pipeline_mode = #tpu.pipeline_mode<synchronous>, transform_indices = @transform_6, window_bounds = array<i64: 1, 256>}, {pipeline_mode = #tpu.pipeline_mode<synchronous>, transform_indices = @transform_7, window_bounds = array<i64: 256, 80>}, {pipeline_mode = #tpu.pipeline_mode<synchronous>, transform_indices = @transform_8, window_bounds = array<i64: 1, 80>}, {transform_indices = @transform_9, window_bounds = array<i64: 256, 80>}]} {
    %c0 = arith.constant 0 : index
    %c0_0 = arith.constant 0 : index
    %0 = vector.load %arg1[%c0, %c0_0] : memref<256x512xf32, #tpu.memory_space<vmem>>, vector<256x512xf32>
    %1 = arith.truncf %0 : vector<256x512xf32> to vector<256x512xbf16>
    %c0_1 = arith.constant 0 : index
    %c0_2 = arith.constant 0 : index
    %2 = vector.load %arg2[%c0_1, %c0_2] : memref<512x256xbf16, #tpu.memory_space<vmem>>, vector<512x256xbf16>
    %c0_3 = arith.constant 0 : index
    %c0_4 = arith.constant 0 : index
    %3 = vector.load %arg3[%c0_3, %c0_4] : memref<1x256xf32, #tpu.memory_space<vmem>>, vector<1x256xf32>
    %cst = arith.constant dense<0.000000e+00> : vector<256x256xf32>
    %4 = tpu.matmul %1, %2, %cst {dimension_numbers = #tpu.dot_dimension_numbers<[1], [0], [0], [1], [0, 0, 1, 1], [], []>} : vector<256x512xbf16>, vector<512x256xbf16>, vector<256x256xf32> -> vector<256x256xf32>
    %5 = vector.broadcast %3 : vector<1x256xf32> to vector<256x256xf32>
    %6 = arith.addf %4, %5 : vector<256x256xf32>
    %cst_5 = arith.constant 0.000000e+00 : f32
    %7 = vector.broadcast %cst_5 : f32 to vector<256x256xf32>
    %8 = arith.maximumf %6, %7 : vector<256x256xf32>
    %9 = arith.truncf %8 : vector<256x256xf32> to vector<256x256xbf16>
    %c0_6 = arith.constant 0 : index
    %c0_7 = arith.constant 0 : index
    %10 = vector.load %arg4[%c0_6, %c0_7] : memref<256x256xbf16, #tpu.memory_space<vmem>>, vector<256x256xbf16>
    %c0_8 = arith.constant 0 : index
    %c0_9 = arith.constant 0 : index
    %11 = vector.load %arg5[%c0_8, %c0_9] : memref<1x256xf32, #tpu.memory_space<vmem>>, vector<1x256xf32>
    %cst_10 = arith.constant dense<0.000000e+00> : vector<256x256xf32>
    %12 = tpu.matmul %9, %10, %cst_10 {dimension_numbers = #tpu.dot_dimension_numbers<[1], [0], [0], [1], [0, 0, 1, 1], [], []>} : vector<256x256xbf16>, vector<256x256xbf16>, vector<256x256xf32> -> vector<256x256xf32>
    %13 = vector.broadcast %11 : vector<1x256xf32> to vector<256x256xf32>
    %14 = arith.addf %12, %13 : vector<256x256xf32>
    %cst_11 = arith.constant 0.000000e+00 : f32
    %15 = vector.broadcast %cst_11 : f32 to vector<256x256xf32>
    %16 = arith.maximumf %14, %15 : vector<256x256xf32>
    %17 = arith.truncf %16 : vector<256x256xf32> to vector<256x256xbf16>
    %c0_12 = arith.constant 0 : index
    %c0_13 = arith.constant 0 : index
    %18 = vector.load %arg6[%c0_12, %c0_13] : memref<256x256xbf16, #tpu.memory_space<vmem>>, vector<256x256xbf16>
    %c0_14 = arith.constant 0 : index
    %c0_15 = arith.constant 0 : index
    %19 = vector.load %arg7[%c0_14, %c0_15] : memref<1x256xf32, #tpu.memory_space<vmem>>, vector<1x256xf32>
    %cst_16 = arith.constant dense<0.000000e+00> : vector<256x256xf32>
    %20 = tpu.matmul %17, %18, %cst_16 {dimension_numbers = #tpu.dot_dimension_numbers<[1], [0], [0], [1], [0, 0, 1, 1], [], []>} : vector<256x256xbf16>, vector<256x256xbf16>, vector<256x256xf32> -> vector<256x256xf32>
    %21 = vector.broadcast %19 : vector<1x256xf32> to vector<256x256xf32>
    %22 = arith.addf %20, %21 : vector<256x256xf32>
    %cst_17 = arith.constant 0.000000e+00 : f32
    %23 = vector.broadcast %cst_17 : f32 to vector<256x256xf32>
    %24 = arith.maximumf %22, %23 : vector<256x256xf32>
    %25 = arith.truncf %24 : vector<256x256xf32> to vector<256x256xbf16>
    %c0_18 = arith.constant 0 : index
    %c0_19 = arith.constant 0 : index
    %26 = vector.load %arg8[%c0_18, %c0_19] : memref<256x80xbf16, #tpu.memory_space<vmem>>, vector<256x80xbf16>
    %c0_20 = arith.constant 0 : index
    %c0_21 = arith.constant 0 : index
    %27 = vector.load %arg9[%c0_20, %c0_21] : memref<1x80xf32, #tpu.memory_space<vmem>>, vector<1x80xf32>
    %cst_22 = arith.constant dense<0.000000e+00> : vector<256x80xf32>
    %28 = tpu.matmul %25, %26, %cst_22 {dimension_numbers = #tpu.dot_dimension_numbers<[1], [0], [0], [1], [0, 0, 1, 1], [], []>} : vector<256x256xbf16>, vector<256x80xbf16>, vector<256x80xf32> -> vector<256x80xf32>
    %29 = vector.broadcast %27 : vector<1x80xf32> to vector<256x80xf32>
    %30 = arith.addf %28, %29 : vector<256x80xf32>
    %c0_23 = arith.constant 0 : index
    %c0_24 = arith.constant 0 : index
    %31 = vector.load %arg10[%c0_23, %c0_24] : memref<256x80xf32, #tpu.memory_space<vmem>>, vector<256x80xf32>
    tpu.vector_store %arg10[%c0_23, %c0_24], %30 {strides = array<i32>} : memref<256x80xf32, #tpu.memory_space<vmem>>, vector<256x80xf32>,
    return
  }
  func.func @transform_0(%arg0: i32) -> (i32, i32) {
    %c0_i32 = arith.constant 0 : i32
    %c0_i32_0 = arith.constant 0 : i32
    return %arg0, %c0_i32 : i32, i32
  }
  func.func @transform_1(%arg0: i32) -> (i32, i32) {
    %c0_i32 = arith.constant 0 : i32
    %c0_i32_0 = arith.constant 0 : i32
    %c0_i32_1 = arith.constant 0 : i32
    return %c0_i32, %c0_i32_0 : i32, i32
  }
  func.func @transform_2(%arg0: i32) -> (i32, i32) {
    %c0_i32 = arith.constant 0 : i32
    %c0_i32_0 = arith.constant 0 : i32
    %c0_i32_1 = arith.constant 0 : i32
    return %c0_i32, %c0_i32_0 : i32, i32
  }
  func.func @transform_3(%arg0: i32) -> (i32, i32) {
    %c0_i32 = arith.constant 0 : i32
    %c0_i32_0 = arith.constant 0 : i32
    %c0_i32_1 = arith.constant 0 : i32
    return %c0_i32, %c0_i32_0 : i32, i32
  }
  func.func @transform_4(%arg0: i32) -> (i32, i32) {
    %c0_i32 = arith.constant 0 : i32
    %c0_i32_0 = arith.constant 0 : i32
    %c0_i32_1 = arith.constant 0 : i32
    return %c0_i32, %c0_i32_0 : i32, i32
  }
  func.func @transform_5(%arg0: i32) -> (i32, i32) {
    %c0_i32 = arith.constant 0 : i32
    %c0_i32_0 = arith.constant 0 : i32
    %c0_i32_1 = arith.constant 0 : i32
    return %c0_i32, %c0_i32_0 : i32, i32
  }
  func.func @transform_6(%arg0: i32) -> (i32, i32) {
    %c0_i32 = arith.constant 0 : i32
    %c0_i32_0 = arith.constant 0 : i32
    %c0_i32_1 = arith.constant 0 : i32
    return %c0_i32, %c0_i32_0 : i32, i32
  }
  func.func @transform_7(%arg0: i32) -> (i32, i32) {
    %c0_i32 = arith.constant 0 : i32
    %c0_i32_0 = arith.constant 0 : i32
    %c0_i32_1 = arith.constant 0 : i32
    return %c0_i32, %c0_i32_0 : i32, i32
  }
  func.func @transform_8(%arg0: i32) -> (i32, i32) {
    %c0_i32 = arith.constant 0 : i32
    %c0_i32_0 = arith.constant 0 : i32
    %c0_i32_1 = arith.constant 0 : i32
    return %c0_i32, %c0_i32_0 : i32, i32
  }
  func.func @transform_9(%arg0: i32) -> (i32, i32) {
    %c0_i32 = arith.constant 0 : i32
    %c0_i32_0 = arith.constant 0 : i32
    return %arg0, %c0_i32 : i32, i32
  }
}

</mosaic_0001>

<llo_original>
// kernel: tpu_custom_call.1
$region0: #{tpu_custom_call.1}
  #allocation0 [shape = 'u32[]', space=smem, size = 0x4, offset = 0x4, fixed_abs, tag = 'smem constant byte address 0x4 - core index']
  #allocation1 [shape = 'u32[144,128]{1,0:T(1,128)}', space=vmem, size = 0x12000, scoped, tag = 'internal scratch']
  %s0 = inlined_call_operand.hbm [shape: f32[8,128], index: 0, kind: input, shape index: {}]
  %s1 = inlined_call_operand.hbm [shape: f32[16,128], index: 1, kind: input, shape index: {}]
  %s2 = inlined_call_operand.hbm [shape: f32[16,128], index: 2, kind: output, shape index: {}]
  %s3 = sld [smem:[#allocation0]]
  $region49: #{tpu_custom_call.1} parent=0
    _
  %s5 = ssub.s32 1, %s3
  %s6 = scalar_select 0, %s5, %s3
  $region1: #{tpu_custom_call.1} parent=0
    #allocation2 [shape = 'u8[4096]{0}', space=vmem, size = 0x1000, scoped, tag = 'input window, operand 0, single buffered']
    #allocation3 [shape = 's32[2]{0}', space=sflag, size = 0x8, scoped, tag = 'scoped memory for tpu_custom_call.1']
    #allocation4 [shape = 's32[2]{0}', space=sflag, size = 0x8, scoped, tag = 'scoped memory for tpu_custom_call.1']
    #allocation5 [shape = 'u8[8192]{0}', space=vmem, size = 0x2000, scoped, tag = 'input window, operand 1']
    #allocation6 [shape = 's32[2]{0}', space=sflag, size = 0x8, scoped, tag = 'scoped memory for tpu_custom_call.1']
    #allocation7 [shape = 'u8[8192]{0}', space=vmem, size = 0x2000, scoped, tag = 'output window, operand 0']
    %7 = vsyncpa [#allocation3], 0
    %8 = vsyncpa [#allocation6], 0
    %s9 = scalar_lea.sflag [#allocation6], 1
    %10 = vsyncpa %s9, 0
    %11 = vsyncpa [#allocation4], 0
    %s12 = scalar_lea.sflag [#allocation4], 1
    %13 = vsyncpa %s12, 0
    loop: start=0, step=1, limit=4
    $region2: #{tpu_custom_call.1} parent=1 // loop_pre_header
      _
    $region3: #{tpu_custom_call.1} parent=1 // loop_header
      %s15 = sphi 0, %s19
      %p16 = scmp.ge.s32.totalorder %s15, 4
      %s23 = sphi 0, %s23
      %s25 = sphi 0, %s23
      %s26 = sphi 0, %s25
      %s40 = sphi 0, %s26
      %s46 = sphi 0, %s48
      %s49 = sphi 0, %s46
      %s50 = sphi 0, %s49
      %s66 = sphi 0, %s50
      %s72 = sphi 0, %s74
      %s75 = sphi 0, %s72
      %s76 = sphi 0, %s75
      %s92 = sphi 0, %s76
    $region4: #{tpu_custom_call.1} parent=1 // loop_header_branch
      %18 = sbr.rel (%p16) target = $region8
    $region5: #{tpu_custom_call.1} parent=1 // loop_body
      %s20 = ssub.s32 %s15, 1
      %s21 = ssub.s32 %s15, 2
      %s22 = sadd.s32 %s15, 1
      %s24 = sadd.s32 %s23, 1
      %p27 = scmp.eq.s32.totalorder %s15, 1
      %p28 = scmp.ne.s32.totalorder %s23, %s25
      %p29 = scmp.eq.s32.totalorder %s15, 0
      %p30 = por %p28, %p29
      %p31 = scmp.ne.s32.totalorder %s23, %s25
      %p32 = scmp.eq.s32.totalorder %s20, 1
      %p33 = por %p31, %p32
      %p34 = scmp.ne.s32.totalorder %s25, %s26
      %p35 = scmp.eq.s32.totalorder %s20, 0
      %p36 = por %p34, %p35
      %p37 = scmp.ne.s32.totalorder %s25, %s26
      %p38 = scmp.eq.s32.totalorder %s21, 1
      %p39 = por %p37, %p38
      %p41 = scmp.ne.s32.totalorder %s26, %s40
      %p42 = scmp.eq.s32.totalorder %s21, 0
      %p43 = por %p41, %p42
      %s44 = ssub.s32 %s15, %s22
      %p45 = scmp.eq.s32.totalorder %s44, 0
      %s47 = sadd.s32 %s46, 1
      %s48 = scalar_select %p45, %s46, %s47
      %p51 = pneg %p45
      %p52 = scmp.eq.s32.totalorder %s15, 1
      %p53 = por %p51, %p52
      %p54 = scmp.ne.s32.totalorder %s46, %s49
      %p55 = scmp.eq.s32.totalorder %s15, 0
      %p56 = por %p54, %p55
      %p57 = scmp.ne.s32.totalorder %s46, %s49
      %p58 = scmp.eq.s32.totalorder %s20, 1
      %p59 = por %p57, %p58
      %p60 = scmp.ne.s32.totalorder %s49, %s50
      %p61 = scmp.eq.s32.totalorder %s20, 0
      %p62 = por %p60, %p61
      %p63 = scmp.ne.s32.totalorder %s49, %s50
      %p64 = scmp.eq.s32.totalorder %s21, 1
      %p65 = por %p63, %p64
      %p67 = scmp.ne.s32.totalorder %s50, %s66
      %p68 = scmp.eq.s32.totalorder %s21, 0
      %p69 = por %p67, %p68
      %s70 = ssub.s32 %s15, %s22
      %p71 = scmp.eq.s32.totalorder %s70, 0
      %s73 = sadd.s32 %s72, 1
      %s74 = scalar_select %p71, %s72, %s73
      %p77 = pneg %p71
      %p78 = scmp.eq.s32.totalorder %s15, 1
      %p79 = por %p77, %p78
      %p80 = scmp.ne.s32.totalorder %s72, %s75
      %p81 = scmp.eq.s32.totalorder %s15, 0
      %p82 = por %p80, %p81
      %p83 = scmp.ne.s32.totalorder %s72, %s75
      %p84 = scmp.eq.s32.totalorder %s20, 1
      %p85 = por %p83, %p84
      %p86 = scmp.ne.s32.totalorder %s75, %s76
      %p87 = scmp.eq.s32.totalorder %s20, 0
      %p88 = por %p86, %p87
      %p89 = scmp.ne.s32.totalorder %s75, %s76
      %p90 = scmp.eq.s32.totalorder %s21, 1
      %p91 = por %p89, %p90
      %p93 = scmp.ne.s32.totalorder %s76, %s92
      %p94 = scmp.eq.s32.totalorder %s21, 0
      %p95 = por %p93, %p94
      %p96 = scmp.le.s32.totalorder 1, %s15
      %p97 = scmp.lt.s32.totalorder %s15, 3
      %p98 = pnand %p96, %p97
      %p99 = pneg %p98
      // Predicated region
      $region9: #{tpu_custom_call.1} parent=5 // pred_check
        _
      $region10: #{tpu_custom_call.1} parent=5 // pred_check_branch
        %101 = sbr.rel (%p98) target = $region12
      $region11: #{tpu_custom_call.1} parent=5 // pred_region
        %s102 = ssub.s32 %s15, 1
        // Predicated region
        $region13: #{tpu_custom_call.1} parent=11 // pred_check
          %p103 = pneg %p36
        $region14: #{tpu_custom_call.1} parent=11 // pred_check_branch
          %105 = sbr.rel (%p103) target = $region16
        $region15: #{tpu_custom_call.1} parent=11 // pred_region
          %s107 = ssub.s32 128, 128
          %108 = vsyncadd [#allocation3], %s107
          %s110 = sshll.u32 [#allocation2], 4
          %s111 = int_to_ptr.vmem [resolvable:$true] %s110
          %113 = dma.hbm_to_vmem [thread:$0]  %s0, 128, %s111, [#allocation3]
        $region16: #{tpu_custom_call.1} parent=11 // pred_fallthru
          _
      $region12: #{tpu_custom_call.1} parent=5 // pred_fallthru
        _
      %p114 = scmp.lt.s32.totalorder %s15, 2
      // Predicated region
      $region17: #{tpu_custom_call.1} parent=5 // pred_check
        %p115 = pneg %p114
      $region18: #{tpu_custom_call.1} parent=5 // pred_check_branch
        %117 = sbr.rel (%p115) target = $region20
      $region19: #{tpu_custom_call.1} parent=5 // pred_region
        // Predicated region
        $region21: #{tpu_custom_call.1} parent=19 // pred_check
          %p118 = pneg %p56
        $region22: #{tpu_custom_call.1} parent=19 // pred_check_branch
          %120 = sbr.rel (%p118) target = $region24
        $region23: #{tpu_custom_call.1} parent=19 // pred_region
          %s121 = sand.u32 %s46, 1
          %s122 = scalar_lea.sflag [#allocation6], %s121
          %s123 = sand.u32 %s46, 1
          %s124 = smul.addr %s123, 8
          %s125 = scalar_lea.vmem [#allocation5], %s124
          %s127 = ssub.s32 128, 128
          %128 = vsyncadd %s122, %s127
          %s129 = smul.addr %s15, 128
          %s130 = scalar_lea.hbm %s1, %s129
          %s132 = sshll.u32 %s125, 4
          %s133 = int_to_ptr.vmem [resolvable:$true] %s132
          %135 = dma.hbm_to_vmem [thread:$0]  %s130, 128, %s133, %s122
        $region24: #{tpu_custom_call.1} parent=19 // pred_fallthru
          _
      $region20: #{tpu_custom_call.1} parent=5 // pred_fallthru
        _
      %p136 = scmp.le.s32.totalorder 1, %s15
      %p137 = scmp.lt.s32.totalorder %s15, 3
      %p138 = pnand %p136, %p137
      %p139 = pneg %p138
      // Predicated region
      $region25: #{tpu_custom_call.1} parent=5 // pred_check
        _
      $region26: #{tpu_custom_call.1} parent=5 // pred_check_branch
        %141 = sbr.rel (%p138) target = $region28
      $region27: #{tpu_custom_call.1} parent=5 // pred_region
        %s142 = ssub.s32 %s15, 1
        // Predicated region
        $region29: #{tpu_custom_call.1} parent=27 // pred_check
          %p143 = pneg %p36
        $region30: #{tpu_custom_call.1} parent=27 // pred_check_branch
          %145 = sbr.rel (%p143) target = $region32
        $region31: #{tpu_custom_call.1} parent=27 // pred_region
          %146 = dma.done [#allocation3], 128
        $region32: #{tpu_custom_call.1} parent=27 // pred_fallthru
          _
        %s147 = sand.u32 %s49, 1
        %s148 = scalar_lea.sflag [#allocation6], %s147
        %s149 = sand.u32 %s49, 1
        %s150 = smul.addr %s149, 8
        %s151 = scalar_lea.vmem [#allocation5], %s150
        // Predicated region
        $region33: #{tpu_custom_call.1} parent=27 // pred_check
          %p152 = pneg %p62
        $region34: #{tpu_custom_call.1} parent=27 // pred_check_branch
          %154 = sbr.rel (%p152) target = $region36
        $region35: #{tpu_custom_call.1} parent=27 // pred_region
          %155 = dma.done %s148, 128
        $region36: #{tpu_custom_call.1} parent=27 // pred_fallthru
          _
        %p156 = pneg %p36
        %p157 = pneg %p33
        %s158 = sand.u32 %s49, 1
        %s159 = scalar_lea.sflag [#allocation6], %s158
        %s160 = sand.u32 %s49, 1
        %s161 = smul.addr %s160, 8
        %s162 = scalar_lea.vmem [#allocation5], %s161
        %p163 = pneg %p62
        %p164 = pneg %p59
        %p165 = pneg %p88
        %p166 = pneg %p85
        %s167 = sand.u32 %s75, 1
        %s168 = scalar_lea.sflag [#allocation4], %s167
        %s169 = sand.u32 %s75, 1
        %s170 = smul.addr %s169, 8
        %s171 = scalar_lea.vmem [#allocation7], %s170
        %v172 = vld [vmem:[%s151] sm:$0xff]
        %v173 = vld [vmem:[#allocation2] sm:$0xff]
        %v174 = vadd.f32 %v172, %v173
        %175 = vst [vmem:[%s171] sm:$0xff] %v174
        %s176 = sand.u32 %s75, 1
        %s177 = scalar_lea.sflag [#allocation4], %s176
        %s178 = sand.u32 %s75, 1
        %s179 = smul.addr %s178, 8
        %s180 = scalar_lea.vmem [#allocation7], %s179
        // Predicated region
        $region37: #{tpu_custom_call.1} parent=27 // pred_check
          %p181 = pneg %p85
        $region38: #{tpu_custom_call.1} parent=27 // pred_check_branch
          %183 = sbr.rel (%p181) target = $region40
        $region39: #{tpu_custom_call.1} parent=27 // pred_region
          %s185 = ssub.s32 128, 128
          %186 = vsyncadd %s177, %s185
          %s187 = smul.addr %s20, 128
          %s188 = scalar_lea.hbm %s2, %s187
          %s190 = sshll.u32 %s180, 4
          %s191 = int_to_ptr.vmem [resolvable:$true] %s190
          %193 = dma.vmem_to_hbm [thread:$0]  %s191, 128, %s188, %s177
        $region40: #{tpu_custom_call.1} parent=27 // pred_fallthru
          _
      $region28: #{tpu_custom_call.1} parent=5 // pred_fallthru
        _
      %p194 = scmp.le.s32.totalorder 2, %s15
      // Predicated region
      $region41: #{tpu_custom_call.1} parent=5 // pred_check
        %p195 = pneg %p194
      $region42: #{tpu_custom_call.1} parent=5 // pred_check_branch
        %197 = sbr.rel (%p195) target = $region44
      $region43: #{tpu_custom_call.1} parent=5 // pred_region
        %s198 = ssub.s32 %s15, 2
        // Predicated region
        $region45: #{tpu_custom_call.1} parent=43 // pred_check
          %p199 = pneg %p91
        $region46: #{tpu_custom_call.1} parent=43 // pred_check_branch
          %201 = sbr.rel (%p199) target = $region48
        $region47: #{tpu_custom_call.1} parent=43 // pred_region
          %s202 = sand.u32 %s76, 1
          %s203 = scalar_lea.sflag [#allocation4], %s202
          %s204 = sand.u32 %s76, 1
          %s205 = smul.addr %s204, 8
          %s206 = scalar_lea.vmem [#allocation7], %s205
          %207 = dma.done %s203, 128
        $region48: #{tpu_custom_call.1} parent=43 // pred_fallthru
          _
      $region44: #{tpu_custom_call.1} parent=5 // pred_fallthru
        _
    $region6: #{tpu_custom_call.1} parent=1 // loop_footer
      %s19 = sadd.s32 1, %s15
    $region7: #{tpu_custom_call.1} parent=1 // loop_footer_branch
      %14 = sbr.rel target = $region3
    $region8: #{tpu_custom_call.1} parent=1 // loop_exit
      _
    %208 = vsyncpa [#allocation3], 1
    %s209 = scalar_lea.sflag [#allocation3], 1
    %210 = vsyncpa %s209, 1
    %211 = vsyncpa [#allocation6], 1
    %s212 = scalar_lea.sflag [#allocation6], 1
    %213 = vsyncpa %s212, 1
    %214 = vsyncpa [#allocation4], 1
    %s215 = scalar_lea.sflag [#allocation4], 1
    %216 = vsyncpa %s215, 1

// kernel: tpu_custom_call.1
$region0: #{tpu_custom_call.1}
  #allocation0 [shape = 'u32[]', space=smem, size = 0x4, offset = 0x4, fixed_abs, tag = 'smem constant byte address 0x4 - core index']
  #allocation1 [shape = 'u32[144,128]{1,0:T(1,128)}', space=vmem, size = 0x12000, scoped, tag = 'internal scratch']
  %s0 = inlined_call_operand.hbm [shape: f32[500,512], index: 0, kind: input, shape index: {}]
  %s1 = inlined_call_operand.hbm [shape: bf16[512,256], index: 1, kind: input, shape index: {}]
  %s2 = inlined_call_operand.vmem [shape: f32[1,256], index: 2, kind: input, shape index: {}]
  %s3 = inlined_call_operand.hbm [shape: bf16[256,256], index: 3, kind: input, shape index: {}]
  %s4 = inlined_call_operand.vmem [shape: f32[1,256], index: 4, kind: input, shape index: {}]
  %s5 = inlined_call_operand.hbm [shape: bf16[256,256], index: 5, kind: input, shape index: {}]
  %s6 = inlined_call_operand.vmem [shape: f32[1,256], index: 6, kind: input, shape index: {}]
  %s7 = inlined_call_operand.vmem [shape: bf16[256,80], index: 7, kind: input, shape index: {}]
  %s8 = inlined_call_operand.vmem [shape: f32[1,80], index: 8, kind: input, shape index: {}]
  %s9 = inlined_call_operand.vmem [shape: f32[500,80], index: 9, kind: output, shape index: {}]
  %s10 = sld [smem:[#allocation0]]
  $region133: #{tpu_custom_call.1} parent=0
    _
  %s12 = ssub.s32 1, %s10
  %s13 = scalar_select 0, %s12, %s10
  $region1: #{tpu_custom_call.1} parent=0
    #allocation2 [shape = 'u8[1048576]{0}', space=vmem, size = 0x100000, scoped, tag = 'input window, operand 0']
    #allocation3 [shape = 's32[2]{0}', space=sflag, size = 0x8, scoped, tag = 'scoped memory for tpu_custom_call.1']
    #allocation4 [shape = 'u8[262144]{0}', space=vmem, size = 0x40000, scoped, tag = 'input window, operand 1, single buffered']
    #allocation5 [shape = 's32[1]{0}', space=sflag, size = 0x4, scoped, tag = 'scoped memory for tpu_custom_call.1']
    #allocation6 [shape = 'u8[131072]{0}', space=vmem, size = 0x20000, scoped, tag = 'input window, operand 3, single buffered']
    #allocation7 [shape = 'u8[131072]{0}', space=vmem, size = 0x20000, scoped, tag = 'input window, operand 5, single buffered']
    #allocation8 [shape = 's32[1]{0}', space=sflag, size = 0x4, scoped, tag = 'scoped memory for tpu_custom_call.1']
    #allocation9 [shape = 'u8[262144]{0}', space=vmem, size = 0x40000, scoped, tag = 'output window, operand 0']
    %14 = vsyncpa [#allocation3], 0
    %s15 = scalar_lea.sflag [#allocation3], 1
    %16 = vsyncpa %s15, 0
    %17 = vsyncpa [#allocation5], 0
    %18 = vsyncpa [#allocation8], 0
    loop: start=0, step=1, limit=4
    $region2: #{tpu_custom_call.1} parent=1 // loop_pre_header
      _
    $region3: #{tpu_custom_call.1} parent=1 // loop_header
      %s20 = sphi 0, %s24
      %p21 = scmp.ge.s32.totalorder %s20, 4
      %s30 = sphi 0, %s32
      %s33 = sphi 0, %s30
      %s34 = sphi 0, %s33
      %s50 = sphi 0, %s34
      %s54 = sphi 0, %s54
      %s56 = sphi 0, %s54
      %s57 = sphi 0, %s56
      %s71 = sphi 0, %s57
      %s75 = sphi 0, %s75
      %s77 = sphi 0, %s75
      %s78 = sphi 0, %s77
      %s92 = sphi 0, %s78
      %s96 = sphi 0, %s96
      %s98 = sphi 0, %s96
      %s99 = sphi 0, %s98
      %s113 = sphi 0, %s99
      %s117 = sphi 0, %s117
      %s119 = sphi 0, %s117
      %s120 = sphi 0, %s119
      %s134 = sphi 0, %s120
      %s138 = sphi 0, %s138
      %s140 = sphi 0, %s138
      %s141 = sphi 0, %s140
      %s155 = sphi 0, %s141
      %s159 = sphi 0, %s159
      %s161 = sphi 0, %s159
      %s162 = sphi 0, %s161
      %s176 = sphi 0, %s162
      %s180 = sphi 0, %s180
      %s182 = sphi 0, %s180
      %s183 = sphi 0, %s182
      %s197 = sphi 0, %s183
      %s201 = sphi 0, %s201
      %s203 = sphi 0, %s201
      %s204 = sphi 0, %s203
      %s218 = sphi 0, %s204
      %s224 = sphi 0, %s226
      %s227 = sphi 0, %s224
      %s228 = sphi 0, %s227
      %s244 = sphi 0, %s228
    $region4: #{tpu_custom_call.1} parent=1 // loop_header_branch
      %23 = sbr.rel (%p21) target = $region8
    $region5: #{tpu_custom_call.1} parent=1 // loop_body
      %s25 = ssub.s32 %s20, 1
      %s26 = ssub.s32 %s20, 2
      %s27 = sadd.s32 %s20, 1
      %s28 = ssub.s32 %s20, %s27
      %p29 = scmp.eq.s32.totalorder %s28, 0
      %s31 = sadd.s32 %s30, 1
      %s32 = scalar_select %p29, %s30, %s31
      %p35 = pneg %p29
      %p36 = scmp.eq.s32.totalorder %s20, 1
      %p37 = por %p35, %p36
      %p38 = scmp.ne.s32.totalorder %s30, %s33
      %p39 = scmp.eq.s32.totalorder %s20, 0
      %p40 = por %p38, %p39
      %p41 = scmp.ne.s32.totalorder %s30, %s33
      %p42 = scmp.eq.s32.totalorder %s25, 1
      %p43 = por %p41, %p42
      %p44 = scmp.ne.s32.totalorder %s33, %s34
      %p45 = scmp.eq.s32.totalorder %s25, 0
      %p46 = por %p44, %p45
      %p47 = scmp.ne.s32.totalorder %s33, %s34
      %p48 = scmp.eq.s32.totalorder %s26, 1
      %p49 = por %p47, %p48
      %p51 = scmp.ne.s32.totalorder %s34, %s50
      %p52 = scmp.eq.s32.totalorder %s26, 0
      %p53 = por %p51, %p52
      %s55 = sadd.s32 %s54, 1
      %p58 = scmp.eq.s32.totalorder %s20, 1
      %p59 = scmp.ne.s32.totalorder %s54, %s56
      %p60 = scmp.eq.s32.totalorder %s20, 0
      %p61 = por %p59, %p60
      %p62 = scmp.ne.s32.totalorder %s54, %s56
      %p63 = scmp.eq.s32.totalorder %s25, 1
      %p64 = por %p62, %p63
      %p65 = scmp.ne.s32.totalorder %s56, %s57
      %p66 = scmp.eq.s32.totalorder %s25, 0
      %p67 = por %p65, %p66
      %p68 = scmp.ne.s32.totalorder %s56, %s57
      %p69 = scmp.eq.s32.totalorder %s26, 1
      %p70 = por %p68, %p69
      %p72 = scmp.ne.s32.totalorder %s57, %s71
      %p73 = scmp.eq.s32.totalorder %s26, 0
      %p74 = por %p72, %p73
      %s76 = sadd.s32 %s75, 1
      %p79 = scmp.eq.s32.totalorder %s20, 1
      %p80 = scmp.ne.s32.totalorder %s75, %s77
      %p81 = scmp.eq.s32.totalorder %s20, 0
      %p82 = por %p80, %p81
      %p83 = scmp.ne.s32.totalorder %s75, %s77
      %p84 = scmp.eq.s32.totalorder %s25, 1
      %p85 = por %p83, %p84
      %p86 = scmp.ne.s32.totalorder %s77, %s78
      %p87 = scmp.eq.s32.totalorder %s25, 0
      %p88 = por %p86, %p87
      %p89 = scmp.ne.s32.totalorder %s77, %s78
      %p90 = scmp.eq.s32.totalorder %s26, 1
      %p91 = por %p89, %p90
      %p93 = scmp.ne.s32.totalorder %s78, %s92
      %p94 = scmp.eq.s32.totalorder %s26, 0
      %p95 = por %p93, %p94
      %s97 = sadd.s32 %s96, 1
      %p100 = scmp.eq.s32.totalorder %s20, 1
      %p101 = scmp.ne.s32.totalorder %s96, %s98
      %p102 = scmp.eq.s32.totalorder %s20, 0
      %p103 = por %p101, %p102
      %p104 = scmp.ne.s32.totalorder %s96, %s98
      %p105 = scmp.eq.s32.totalorder %s25, 1
      %p106 = por %p104, %p105
      %p107 = scmp.ne.s32.totalorder %s98, %s99
      %p108 = scmp.eq.s32.totalorder %s25, 0
      %p109 = por %p107, %p108
      %p110 = scmp.ne.s32.totalorder %s98, %s99
      %p111 = scmp.eq.s32.totalorder %s26, 1
      %p112 = por %p110, %p111
      %p114 = scmp.ne.s32.totalorder %s99, %s113
      %p115 = scmp.eq.s32.totalorder %s26, 0
      %p116 = por %p114, %p115
      %s118 = sadd.s32 %s117, 1
      %p121 = scmp.eq.s32.totalorder %s20, 1
      %p122 = scmp.ne.s32.totalorder %s117, %s119
      %p123 = scmp.eq.s32.totalorder %s20, 0
      %p124 = por %p122, %p123
      %p125 = scmp.ne.s32.totalorder %s117, %s119
      %p126 = scmp.eq.s32.totalorder %s25, 1
      %p127 = por %p125, %p126
      %p128 = scmp.ne.s32.totalorder %s119, %s120
      %p129 = scmp.eq.s32.totalorder %s25, 0
      %p130 = por %p128, %p129
      %p131 = scmp.ne.s32.totalorder %s119, %s120
      %p132 = scmp.eq.s32.totalorder %s26, 1
      %p133 = por %p131, %p132
      %p135 = scmp.ne.s32.totalorder %s120, %s134
      %p136 = scmp.eq.s32.totalorder %s26, 0
      %p137 = por %p135, %p136
      %s139 = sadd.s32 %s138, 1
      %p142 = scmp.eq.s32.totalorder %s20, 1
      %p143 = scmp.ne.s32.totalorder %s138, %s140
      %p144 = scmp.eq.s32.totalorder %s20, 0
      %p145 = por %p143, %p144
      %p146 = scmp.ne.s32.totalorder %s138, %s140
      %p147 = scmp.eq.s32.totalorder %s25, 1
      %p148 = por %p146, %p147
      %p149 = scmp.ne.s32.totalorder %s140, %s141
      %p150 = scmp.eq.s32.totalorder %s25, 0
      %p151 = por %p149, %p150
      %p152 = scmp.ne.s32.totalorder %s140, %s141
      %p153 = scmp.eq.s32.totalorder %s26, 1
      %p154 = por %p152, %p153
      %p156 = scmp.ne.s32.totalorder %s141, %s155
      %p157 = scmp.eq.s32.totalorder %s26, 0
      %p158 = por %p156, %p157
      %s160 = sadd.s32 %s159, 1
      %p163 = scmp.eq.s32.totalorder %s20, 1
      %p164 = scmp.ne.s32.totalorder %s159, %s161
      %p165 = scmp.eq.s32.totalorder %s20, 0
      %p166 = por %p164, %p165
      %p167 = scmp.ne.s32.totalorder %s159, %s161
      %p168 = scmp.eq.s32.totalorder %s25, 1
      %p169 = por %p167, %p168
      %p170 = scmp.ne.s32.totalorder %s161, %s162
      %p171 = scmp.eq.s32.totalorder %s25, 0
      %p172 = por %p170, %p171
      %p173 = scmp.ne.s32.totalorder %s161, %s162
      %p174 = scmp.eq.s32.totalorder %s26, 1
      %p175 = por %p173, %p174
      %p177 = scmp.ne.s32.totalorder %s162, %s176
      %p178 = scmp.eq.s32.totalorder %s26, 0
      %p179 = por %p177, %p178
      %s181 = sadd.s32 %s180, 1
      %p184 = scmp.eq.s32.totalorder %s20, 1
      %p185 = scmp.ne.s32.totalorder %s180, %s182
      %p186 = scmp.eq.s32.totalorder %s20, 0
      %p187 = por %p185, %p186
      %p188 = scmp.ne.s32.totalorder %s180, %s182
      %p189 = scmp.eq.s32.totalorder %s25, 1
      %p190 = por %p188, %p189
      %p191 = scmp.ne.s32.totalorder %s182, %s183
      %p192 = scmp.eq.s32.totalorder %s25, 0
      %p193 = por %p191, %p192
      %p194 = scmp.ne.s32.totalorder %s182, %s183
      %p195 = scmp.eq.s32.totalorder %s26, 1
      %p196 = por %p194, %p195
      %p198 = scmp.ne.s32.totalorder %s183, %s197
      %p199 = scmp.eq.s32.totalorder %s26, 0
      %p200 = por %p198, %p199
      %s202 = sadd.s32 %s201, 1
      %p205 = scmp.eq.s32.totalorder %s20, 1
      %p206 = scmp.ne.s32.totalorder %s201, %s203
      %p207 = scmp.eq.s32.totalorder %s20, 0
      %p208 = por %p206, %p207
      %p209 = scmp.ne.s32.totalorder %s201, %s203
      %p210 = scmp.eq.s32.totalorder %s25, 1
      %p211 = por %p209, %p210
      %p212 = scmp.ne.s32.totalorder %s203, %s204
      %p213 = scmp.eq.s32.totalorder %s25, 0
      %p214 = por %p212, %p213
      %p215 = scmp.ne.s32.totalorder %s203, %s204
      %p216 = scmp.eq.s32.totalorder %s26, 1
      %p217 = por %p215, %p216
      %p219 = scmp.ne.s32.totalorder %s204, %s218
      %p220 = scmp.eq.s32.totalorder %s26, 0
      %p221 = por %p219, %p220
      %s222 = ssub.s32 %s20, %s27
      %p223 = scmp.eq.s32.totalorder %s222, 0
      %s225 = sadd.s32 %s224, 1
      %s226 = scalar_select %p223, %s224, %s225
      %p229 = pneg %p223
      %p230 = scmp.eq.s32.totalorder %s20, 1
      %p231 = por %p229, %p230
      %p232 = scmp.ne.s32.totalorder %s224, %s227
      %p233 = scmp.eq.s32.totalorder %s20, 0
      %p234 = por %p232, %p233
      %p235 = scmp.ne.s32.totalorder %s224, %s227
      %p236 = scmp.eq.s32.totalorder %s25, 1
      %p237 = por %p235, %p236
      %p238 = scmp.ne.s32.totalorder %s227, %s228
      %p239 = scmp.eq.s32.totalorder %s25, 0
      %p240 = por %p238, %p239
      %p241 = scmp.ne.s32.totalorder %s227, %s228
      %p242 = scmp.eq.s32.totalorder %s26, 1
      %p243 = por %p241, %p242
      %p245 = scmp.ne.s32.totalorder %s228, %s244
      %p246 = scmp.eq.s32.totalorder %s26, 0
      %p247 = por %p245, %p246
      %p248 = scmp.le.s32.totalorder 1, %s20
      %p249 = scmp.lt.s32.totalorder %s20, 3
      %p250 = pnand %p248, %p249
      %p251 = pneg %p250
      // Predicated region
      $region9: #{tpu_custom_call.1} parent=5 // pred_check
        _
      $region10: #{tpu_custom_call.1} parent=5 // pred_check_branch
        %253 = sbr.rel (%p250) target = $region12
      $region11: #{tpu_custom_call.1} parent=5 // pred_region
        %s254 = ssub.s32 %s20, 1
        // Predicated region
        $region13: #{tpu_custom_call.1} parent=11 // pred_check
          %p255 = pneg %p67
        $region14: #{tpu_custom_call.1} parent=11 // pred_check_branch
          %257 = sbr.rel (%p255) target = $region16
        $region15: #{tpu_custom_call.1} parent=11 // pred_region
          %s259 = ssub.s32 8192, 8192
          %260 = vsyncadd [#allocation5], %s259
          %s261 = sshll.u32 [#allocation4], 4
          %s262 = int_to_ptr.vmem [resolvable:$true] %s261
          %267 = dma.hbm_to_vmem [thread:$0]  %s1, 8192, %s262, [#allocation5], 128, 128, 8
        $region16: #{tpu_custom_call.1} parent=11 // pred_fallthru
          _
        // Predicated region
        $region17: #{tpu_custom_call.1} parent=11 // pred_check
          %p268 = pneg %p88
        $region18: #{tpu_custom_call.1} parent=11 // pred_check_branch
          %270 = sbr.rel (%p268) target = $region20
        $region19: #{tpu_custom_call.1} parent=11 // pred_region
          _
        $region20: #{tpu_custom_call.1} parent=11 // pred_fallthru
          _
        // Predicated region
        $region21: #{tpu_custom_call.1} parent=11 // pred_check
          %p271 = pneg %p109
        $region22: #{tpu_custom_call.1} parent=11 // pred_check_branch
          %273 = sbr.rel (%p271) target = $region24
        $region23: #{tpu_custom_call.1} parent=11 // pred_region
          %s275 = ssub.s32 4096, 4096
          %276 = vsyncadd [#allocation5], %s275
          %s277 = sshll.u32 [#allocation6], 4
          %s278 = int_to_ptr.vmem [resolvable:$true] %s277
          %283 = dma.hbm_to_vmem [thread:$0]  %s3, 4096, %s278, [#allocation5], 128, 128, 8
        $region24: #{tpu_custom_call.1} parent=11 // pred_fallthru
          _
        // Predicated region
        $region25: #{tpu_custom_call.1} parent=11 // pred_check
          %p284 = pneg %p130
        $region26: #{tpu_custom_call.1} parent=11 // pred_check_branch
          %286 = sbr.rel (%p284) target = $region28
        $region27: #{tpu_custom_call.1} parent=11 // pred_region
          _
        $region28: #{tpu_custom_call.1} parent=11 // pred_fallthru
          _
        // Predicated region
        $region29: #{tpu_custom_call.1} parent=11 // pred_check
          %p287 = pneg %p151
        $region30: #{tpu_custom_call.1} parent=11 // pred_check_branch
          %289 = sbr.rel (%p287) target = $region32
        $region31: #{tpu_custom_call.1} parent=11 // pred_region
          %s291 = ssub.s32 4096, 4096
          %292 = vsyncadd [#allocation8], %s291
          %s293 = sshll.u32 [#allocation7], 4
          %s294 = int_to_ptr.vmem [resolvable:$true] %s293
          %299 = dma.hbm_to_vmem [thread:$0]  %s5, 4096, %s294, [#allocation8], 128, 128, 8
        $region32: #{tpu_custom_call.1} parent=11 // pred_fallthru
          _
        // Predicated region
        $region33: #{tpu_custom_call.1} parent=11 // pred_check
          %p300 = pneg %p172
        $region34: #{tpu_custom_call.1} parent=11 // pred_check_branch
          %302 = sbr.rel (%p300) target = $region36
        $region35: #{tpu_custom_call.1} parent=11 // pred_region
          _
        $region36: #{tpu_custom_call.1} parent=11 // pred_fallthru
          _
        // Predicated region
        $region37: #{tpu_custom_call.1} parent=11 // pred_check
          %p303 = pneg %p193
        $region38: #{tpu_custom_call.1} parent=11 // pred_check_branch
          %305 = sbr.rel (%p303) target = $region40
        $region39: #{tpu_custom_call.1} parent=11 // pred_region
          _
        $region40: #{tpu_custom_call.1} parent=11 // pred_fallthru
          _
        // Predicated region
        $region41: #{tpu_custom_call.1} parent=11 // pred_check
          %p306 = pneg %p214
        $region42: #{tpu_custom_call.1} parent=11 // pred_check_branch
          %308 = sbr.rel (%p306) target = $region44
        $region43: #{tpu_custom_call.1} parent=11 // pred_region
          _
        $region44: #{tpu_custom_call.1} parent=11 // pred_fallthru
          _
      $region12: #{tpu_custom_call.1} parent=5 // pred_fallthru
        _
      %p309 = scmp.lt.s32.totalorder %s20, 2
      // Predicated region
      $region45: #{tpu_custom_call.1} parent=5 // pred_check
        %p310 = pneg %p309
      $region46: #{tpu_custom_call.1} parent=5 // pred_check_branch
        %312 = sbr.rel (%p310) target = $region48
      $region47: #{tpu_custom_call.1} parent=5 // pred_region
        // Predicated region
        $region49: #{tpu_custom_call.1} parent=47 // pred_check
          %p313 = pneg %p40
        $region50: #{tpu_custom_call.1} parent=47 // pred_check_branch
          %315 = sbr.rel (%p313) target = $region52
        $region51: #{tpu_custom_call.1} parent=47 // pred_region
          %s316 = sand.u32 %s30, 1
          %s317 = scalar_lea.sflag [#allocation3], %s316
          %s318 = sand.u32 %s30, 1
          %s319 = smul.addr %s318, 1024
          %s320 = scalar_lea.vmem [#allocation2], %s319
          %s321 = smul.u32 32, %s20
          %s322 = ssub.s32 63, %s321
          %p323 = scmp.lt.s32.totalorder %s322, 32
          %s324 = scalar_select %p323, %s322, 32
          %s325 = smul.u32 128, %s324
          %s326 = smul.u32 %s325, 4
          %s328 = ssub.s32 16384, %s326
          %329 = vsyncadd %s317, %s328
          %p330 = scmp.ne.s32.totalorder 0, %s326
          %s331 = smul.addr %s321, 4
          %s332 = smul.addr %s331, 128
          %s333 = scalar_lea.hbm %s0, %s332
          %s334 = smul.u32 32, %s324
          %s335 = sshll.u32 %s320, 4
          %s336 = int_to_ptr.vmem [resolvable:$true] %s335
          %s337 = sshll.u32 %s334, 4
          %341 = dma.hbm_to_vmem [thread:$0]  (%p330), %s333, %s337, %s336, %s317, 512, 512, 32
        $region52: #{tpu_custom_call.1} parent=47 // pred_fallthru
          _
      $region48: #{tpu_custom_call.1} parent=5 // pred_fallthru
        _
      %p342 = scmp.le.s32.totalorder 1, %s20
      %p343 = scmp.lt.s32.totalorder %s20, 3
      %p344 = pnand %p342, %p343
      %p345 = pneg %p344
      // Predicated region
      $region53: #{tpu_custom_call.1} parent=5 // pred_check
        _
      $region54: #{tpu_custom_call.1} parent=5 // pred_check_branch
        %347 = sbr.rel (%p344) target = $region56
      $region55: #{tpu_custom_call.1} parent=5 // pred_region
        %s348 = ssub.s32 %s20, 1
        %s349 = sand.u32 %s33, 1
        %s350 = scalar_lea.sflag [#allocation3], %s349
        %s351 = sand.u32 %s33, 1
        %s352 = smul.addr %s351, 1024
        %s353 = scalar_lea.vmem [#allocation2], %s352
        // Predicated region
        $region57: #{tpu_custom_call.1} parent=55 // pred_check
          %p354 = pneg %p46
        $region58: #{tpu_custom_call.1} parent=55 // pred_check_branch
          %356 = sbr.rel (%p354) target = $region60
        $region59: #{tpu_custom_call.1} parent=55 // pred_region
          %357 = dma.done %s350, 16384
        $region60: #{tpu_custom_call.1} parent=55 // pred_fallthru
          _
        // Predicated region
        $region61: #{tpu_custom_call.1} parent=55 // pred_check
          %p358 = pneg %p67
        $region62: #{tpu_custom_call.1} parent=55 // pred_check_branch
          %360 = sbr.rel (%p358) target = $region64
        $region63: #{tpu_custom_call.1} parent=55 // pred_region
          %361 = dma.done [#allocation5], 8192
        $region64: #{tpu_custom_call.1} parent=55 // pred_fallthru
          _
        // Predicated region
        $region65: #{tpu_custom_call.1} parent=55 // pred_check
          %p362 = pneg %p109
        $region66: #{tpu_custom_call.1} parent=55 // pred_check_branch
          %364 = sbr.rel (%p362) target = $region68
        $region67: #{tpu_custom_call.1} parent=55 // pred_region
          %365 = dma.done [#allocation5], 4096
        $region68: #{tpu_custom_call.1} parent=55 // pred_fallthru
          _
        // Predicated region
        $region69: #{tpu_custom_call.1} parent=55 // pred_check
          %p366 = pneg %p151
        $region70: #{tpu_custom_call.1} parent=55 // pred_check_branch
          %368 = sbr.rel (%p366) target = $region72
        $region71: #{tpu_custom_call.1} parent=55 // pred_region
          %369 = dma.done [#allocation8], 4096
        $region72: #{tpu_custom_call.1} parent=55 // pred_fallthru
          _
        %s370 = sand.u32 %s33, 1
        %s371 = scalar_lea.sflag [#allocation3], %s370
        %s372 = sand.u32 %s33, 1
        %s373 = smul.addr %s372, 1024
        %s374 = scalar_lea.vmem [#allocation2], %s373
        %p375 = pneg %p46
        %p376 = pneg %p43
        %p377 = pneg %p67
        %p378 = pneg %p64
        %p379 = pneg %p88
        %p380 = pneg %p85
        %p381 = pneg %p109
        %p382 = pneg %p106
        %p383 = pneg %p130
        %p384 = pneg %p127
        %p385 = pneg %p151
        %p386 = pneg %p148
        %p387 = pneg %p172
        %p388 = pneg %p169
        %p389 = pneg %p193
        %p390 = pneg %p190
        %p391 = pneg %p214
        %p392 = pneg %p211
        %p393 = pneg %p240
        %p394 = pneg %p237
        %s395 = sand.u32 %s227, 1
        %s396 = sand.u32 %s227, 1
        %s397 = smul.addr %s396, 256
        %s398 = scalar_lea.vmem [#allocation9], %s397
        %s399 = smul.u32 32, %s25
        %s400 = ssub.s32 63, %s399
        %p401 = scmp.lt.s32.totalorder %s400, 32
        %s402 = scalar_select %p401, %s400, 32
        %s403 = smul.u32 128, %s402
        %s404 = smul.u32 %s403, 4
        %s405 = smul.u32 32, %s25
        %s406 = ssub.s32 63, %s405
        %p407 = scmp.lt.s32.totalorder %s406, 32
        %s408 = scalar_select %p407, %s406, 32
        %s409 = smul.u32 128, %s408
        %v411 = vld [vmem:[%s353] sm:$0xff]
        %v412 = vld [vmem:[%s353 + $0x8] sm:$0xff]
        %v413 = vld [vmem:[%s353 + $0x10] sm:$0xff]
        %v414 = vld [vmem:[%s353 + $0x18] sm:$0xff]
        %v415 = vld [vmem:[%s353 + $0x20] sm:$0xff]
        %v416 = vld [vmem:[%s353 + $0x28] sm:$0xff]
        %v417 = vld [vmem:[%s353 + $0x30] sm:$0xff]
        %v418 = vld [vmem:[%s353 + $0x38] sm:$0xff]
        %v419 = vld [vmem:[%s353 + $0x40] sm:$0xff]
        %v420 = vld [vmem:[%s353 + $0x48] sm:$0xff]
        %v421 = vld [vmem:[%s353 + $0x50] sm:$0xff]
        %v422 = vld [vmem:[%s353 + $0x58] sm:$0xff]
        %v423 = vld [vmem:[%s353 + $0x60] sm:$0xff]
        %v424 = vld [vmem:[%s353 + $0x68] sm:$0xff]
        %v425 = vld [vmem:[%s353 + $0x70] sm:$0xff]
        %v426 = vld [vmem:[%s353 + $0x78] sm:$0xff]
        %v427 = vld [vmem:[%s353 + $0x80] sm:$0xff]
        %v428 = vld [vmem:[%s353 + $0x88] sm:$0xff]
        %v429 = vld [vmem:[%s353 + $0x90] sm:$0xff]
        %v430 = vld [vmem:[%s353 + $0x98] sm:$0xff]
        %v431 = vld [vmem:[%s353 + $0xa0] sm:$0xff]
        %v432 = vld [vmem:[%s353 + $0xa8] sm:$0xff]
        %v433 = vld [vmem:[%s353 + $0xb0] sm:$0xff]
        %v434 = vld [vmem:[%s353 + $0xb8] sm:$0xff]
        %v435 = vld [vmem:[%s353 + $0xc0] sm:$0xff]
        %v436 = vld [vmem:[%s353 + $0xc8] sm:$0xff]
        %v437 = vld [vmem:[%s353 + $0xd0] sm:$0xff]
        %v438 = vld [vmem:[%s353 + $0xd8] sm:$0xff]
        %v439 = vld [vmem:[%s353 + $0xe0] sm:$0xff]
        %v440 = vld [vmem:[%s353 + $0xe8] sm:$0xff]
        %v441 = vld [vmem:[%s353 + $0xf0] sm:$0xff]
        %v442 = vld [vmem:[%s353 + $0xf8] sm:$0xff]
        %v443 = vld [vmem:[%s353 + $0x100] sm:$0xff]
        %v444 = vld [vmem:[%s353 + $0x108] sm:$0xff]
        %v445 = vld [vmem:[%s353 + $0x110] sm:$0xff]
        %v446 = vld [vmem:[%s353 + $0x118] sm:$0xff]
        %v447 = vld [vmem:[%s353 + $0x120] sm:$0xff]
        %v448 = vld [vmem:[%s353 + $0x128] sm:$0xff]
        %v449 = vld [vmem:[%s353 + $0x130] sm:$0xff]
        %v450 = vld [vmem:[%s353 + $0x138] sm:$0xff]
        %v451 = vld [vmem:[%s353 + $0x140] sm:$0xff]
        %v452 = vld [vmem:[%s353 + $0x148] sm:$0xff]
        %v453 = vld [vmem:[%s353 + $0x150] sm:$0xff]
        %v454 = vld [vmem:[%s353 + $0x158] sm:$0xff]
        %v455 = vld [vmem:[%s353 + $0x160] sm:$0xff]
        %v456 = vld [vmem:[%s353 + $0x168] sm:$0xff]
        %v457 = vld [vmem:[%s353 + $0x170] sm:$0xff]
        %v458 = vld [vmem:[%s353 + $0x178] sm:$0xff]
        %v459 = vld [vmem:[%s353 + $0x180] sm:$0xff]
        %v460 = vld [vmem:[%s353 + $0x188] sm:$0xff]
        %v461 = vld [vmem:[%s353 + $0x190] sm:$0xff]
        %v462 = vld [vmem:[%s353 + $0x198] sm:$0xff]
        %v463 = vld [vmem:[%s353 + $0x1a0] sm:$0xff]
        %v464 = vld [vmem:[%s353 + $0x1a8] sm:$0xff]
        %v465 = vld [vmem:[%s353 + $0x1b0] sm:$0xff]
        %v466 = vld [vmem:[%s353 + $0x1b8] sm:$0xff]
        %v467 = vld [vmem:[%s353 + $0x1c0] sm:$0xff]
        %v468 = vld [vmem:[%s353 + $0x1c8] sm:$0xff]
        %v469 = vld [vmem:[%s353 + $0x1d0] sm:$0xff]
        %v470 = vld [vmem:[%s353 + $0x1d8] sm:$0xff]
        %v471 = vld [vmem:[%s353 + $0x1e0] sm:$0xff]
        %v472 = vld [vmem:[%s353 + $0x1e8] sm:$0xff]
        %v473 = vld [vmem:[%s353 + $0x1f0] sm:$0xff]
        %v474 = vld [vmem:[%s353 + $0x1f8] sm:$0xff]
        %v475 = vld [vmem:[%s353 + $0x200] sm:$0xff]
        %v476 = vld [vmem:[%s353 + $0x208] sm:$0xff]
        %v477 = vld [vmem:[%s353 + $0x210] sm:$0xff]
        %v478 = vld [vmem:[%s353 + $0x218] sm:$0xff]
        %v479 = vld [vmem:[%s353 + $0x220] sm:$0xff]
        %v480 = vld [vmem:[%s353 + $0x228] sm:$0xff]
        %v481 = vld [vmem:[%s353 + $0x230] sm:$0xff]
        %v482 = vld [vmem:[%s353 + $0x238] sm:$0xff]
        %v483 = vld [vmem:[%s353 + $0x240] sm:$0xff]
        %v484 = vld [vmem:[%s353 + $0x248] sm:$0xff]
        %v485 = vld [vmem:[%s353 + $0x250] sm:$0xff]
        %v486 = vld [vmem:[%s353 + $0x258] sm:$0xff]
        %v487 = vld [vmem:[%s353 + $0x260] sm:$0xff]
        %v488 = vld [vmem:[%s353 + $0x268] sm:$0xff]
        %v489 = vld [vmem:[%s353 + $0x270] sm:$0xff]
        %v490 = vld [vmem:[%s353 + $0x278] sm:$0xff]
        %v491 = vld [vmem:[%s353 + $0x280] sm:$0xff]
        %v492 = vld [vmem:[%s353 + $0x288] sm:$0xff]
        %v493 = vld [vmem:[%s353 + $0x290] sm:$0xff]
        %v494 = vld [vmem:[%s353 + $0x298] sm:$0xff]
        %v495 = vld [vmem:[%s353 + $0x2a0] sm:$0xff]
        %v496 = vld [vmem:[%s353 + $0x2a8] sm:$0xff]
        %v497 = vld [vmem:[%s353 + $0x2b0] sm:$0xff]
        %v498 = vld [vmem:[%s353 + $0x2b8] sm:$0xff]
        %v499 = vld [vmem:[%s353 + $0x2c0] sm:$0xff]
        %v500 = vld [vmem:[%s353 + $0x2c8] sm:$0xff]
        %v501 = vld [vmem:[%s353 + $0x2d0] sm:$0xff]
        %v502 = vld [vmem:[%s353 + $0x2d8] sm:$0xff]
        %v503 = vld [vmem:[%s353 + $0x2e0] sm:$0xff]
        %v504 = vld [vmem:[%s353 + $0x2e8] sm:$0xff]
        %v505 = vld [vmem:[%s353 + $0x2f0] sm:$0xff]
        %v506 = vld [vmem:[%s353 + $0x2f8] sm:$0xff]
        %v507 = vld [vmem:[%s353 + $0x300] sm:$0xff]
        %v508 = vld [vmem:[%s353 + $0x308] sm:$0xff]
        %v509 = vld [vmem:[%s353 + $0x310] sm:$0xff]
        %v510 = vld [vmem:[%s353 + $0x318] sm:$0xff]
        %v511 = vld [vmem:[%s353 + $0x320] sm:$0xff]
        %v512 = vld [vmem:[%s353 + $0x328] sm:$0xff]
        %v513 = vld [vmem:[%s353 + $0x330] sm:$0xff]
        %v514 = vld [vmem:[%s353 + $0x338] sm:$0xff]
        %v515 = vld [vmem:[%s353 + $0x340] sm:$0xff]
        %v516 = vld [vmem:[%s353 + $0x348] sm:$0xff]
        %v517 = vld [vmem:[%s353 + $0x350] sm:$0xff]
        %v518 = vld [vmem:[%s353 + $0x358] sm:$0xff]
        %v519 = vld [vmem:[%s353 + $0x360] sm:$0xff]
        %v520 = vld [vmem:[%s353 + $0x368] sm:$0xff]
        %v521 = vld [vmem:[%s353 + $0x370] sm:$0xff]
        %v522 = vld [vmem:[%s353 + $0x378] sm:$0xff]
        %v523 = vld [vmem:[%s353 + $0x380] sm:$0xff]
        %v524 = vld [vmem:[%s353 + $0x388] sm:$0xff]
        %v525 = vld [vmem:[%s353 + $0x390] sm:$0xff]
        %v526 = vld [vmem:[%s353 + $0x398] sm:$0xff]
        %v527 = vld [vmem:[%s353 + $0x3a0] sm:$0xff]
        %v528 = vld [vmem:[%s353 + $0x3a8] sm:$0xff]
        %v529 = vld [vmem:[%s353 + $0x3b0] sm:$0xff]
        %v530 = vld [vmem:[%s353 + $0x3b8] sm:$0xff]
        %v531 = vld [vmem:[%s353 + $0x3c0] sm:$0xff]
        %v532 = vld [vmem:[%s353 + $0x3c8] sm:$0xff]
        %v533 = vld [vmem:[%s353 + $0x3d0] sm:$0xff]
        %v534 = vld [vmem:[%s353 + $0x3d8] sm:$0xff]
        %v535 = vld [vmem:[%s353 + $0x3e0] sm:$0xff]
        %v536 = vld [vmem:[%s353 + $0x3e8] sm:$0xff]
        %v537 = vld [vmem:[%s353 + $0x3f0] sm:$0xff]
        %v538 = vld [vmem:[%s353 + $0x3f8] sm:$0xff]
        %v539 = vpack.c.bf16 %v415, %v411
        %v540 = vpack.c.bf16 %v416, %v412
        %v541 = vpack.c.bf16 %v417, %v413
        %v542 = vpack.c.bf16 %v418, %v414
        %v543 = vpack.c.bf16 %v423, %v419
        %v544 = vpack.c.bf16 %v424, %v420
        %v545 = vpack.c.bf16 %v425, %v421
        %v546 = vpack.c.bf16 %v426, %v422
        %v547 = vpack.c.bf16 %v431, %v427
        %v548 = vpack.c.bf16 %v432, %v428
        %v549 = vpack.c.bf16 %v433, %v429
        %v550 = vpack.c.bf16 %v434, %v430
        %v551 = vpack.c.bf16 %v439, %v435
        %v552 = vpack.c.bf16 %v440, %v436
        %v553 = vpack.c.bf16 %v441, %v437
        %v554 = vpack.c.bf16 %v442, %v438
        %v555 = vpack.c.bf16 %v447, %v443
        %v556 = vpack.c.bf16 %v448, %v444
        %v557 = vpack.c.bf16 %v449, %v445
        %v558 = vpack.c.bf16 %v450, %v446
        %v559 = vpack.c.bf16 %v455, %v451
        %v560 = vpack.c.bf16 %v456, %v452
        %v561 = vpack.c.bf16 %v457, %v453
        %v562 = vpack.c.bf16 %v458, %v454
        %v563 = vpack.c.bf16 %v463, %v459
        %v564 = vpack.c.bf16 %v464, %v460
        %v565 = vpack.c.bf16 %v465, %v461
        %v566 = vpack.c.bf16 %v466, %v462
        %v567 = vpack.c.bf16 %v471, %v467
        %v568 = vpack.c.bf16 %v472, %v468
        %v569 = vpack.c.bf16 %v473, %v469
        %v570 = vpack.c.bf16 %v474, %v470
        %v571 = vpack.c.bf16 %v479, %v475
        %v572 = vpack.c.bf16 %v480, %v476
        %v573 = vpack.c.bf16 %v481, %v477
        %v574 = vpack.c.bf16 %v482, %v478
        %v575 = vpack.c.bf16 %v487, %v483
        %v576 = vpack.c.bf16 %v488, %v484
        %v577 = vpack.c.bf16 %v489, %v485
        %v578 = vpack.c.bf16 %v490, %v486
        %v579 = vpack.c.bf16 %v495, %v491
        %v580 = vpack.c.bf16 %v496, %v492
        %v581 = vpack.c.bf16 %v497, %v493
        %v582 = vpack.c.bf16 %v498, %v494
        %v583 = vpack.c.bf16 %v503, %v499
        %v584 = vpack.c.bf16 %v504, %v500
        %v585 = vpack.c.bf16 %v505, %v501
        %v586 = vpack.c.bf16 %v506, %v502
        %v587 = vpack.c.bf16 %v511, %v507
        %v588 = vpack.c.bf16 %v512, %v508
        %v589 = vpack.c.bf16 %v513, %v509
        %v590 = vpack.c.bf16 %v514, %v510
        %v591 = vpack.c.bf16 %v519, %v515
        %v592 = vpack.c.bf16 %v520, %v516
        %v593 = vpack.c.bf16 %v521, %v517
        %v594 = vpack.c.bf16 %v522, %v518
        %v595 = vpack.c.bf16 %v527, %v523
        %v596 = vpack.c.bf16 %v528, %v524
        %v597 = vpack.c.bf16 %v529, %v525
        %v598 = vpack.c.bf16 %v530, %v526
        %v599 = vpack.c.bf16 %v535, %v531
        %v600 = vpack.c.bf16 %v536, %v532
        %v601 = vpack.c.bf16 %v537, %v533
        %v602 = vpack.c.bf16 %v538, %v534
        %v603 = vld [vmem:[#allocation4] sm:$0xff]
        %v604 = vld [vmem:[#allocation4 + $0x8] sm:$0xff]
        %v605 = vld [vmem:[#allocation4 + $0x10] sm:$0xff]
        %v606 = vld [vmem:[#allocation4 + $0x18] sm:$0xff]
        %v607 = vld [vmem:[#allocation4 + $0x20] sm:$0xff]
        %v608 = vld [vmem:[#allocation4 + $0x28] sm:$0xff]
        %v609 = vld [vmem:[#allocation4 + $0x30] sm:$0xff]
        %v610 = vld [vmem:[#allocation4 + $0x38] sm:$0xff]
        %v611 = vld [vmem:[#allocation4 + $0x40] sm:$0xff]
        %v612 = vld [vmem:[#allocation4 + $0x48] sm:$0xff]
        %v613 = vld [vmem:[#allocation4 + $0x50] sm:$0xff]
        %v614 = vld [vmem:[#allocation4 + $0x58] sm:$0xff]
        %v615 = vld [vmem:[#allocation4 + $0x60] sm:$0xff]
        %v616 = vld [vmem:[#allocation4 + $0x68] sm:$0xff]
        %v617 = vld [vmem:[#allocation4 + $0x70] sm:$0xff]
        %v618 = vld [vmem:[#allocation4 + $0x78] sm:$0xff]
        %v619 = vld [vmem:[#allocation4 + $0x80] sm:$0xff]
        %v620 = vld [vmem:[#allocation4 + $0x88] sm:$0xff]
        %v621 = vld [vmem:[#allocation4 + $0x90] sm:$0xff]
        %v622 = vld [vmem:[#allocation4 + $0x98] sm:$0xff]
        %v623 = vld [vmem:[#allocation4 + $0xa0] sm:$0xff]
        %v624 = vld [vmem:[#allocation4 + $0xa8] sm:$0xff]
        %v625 = vld [vmem:[#allocation4 + $0xb0] sm:$0xff]
        %v626 = vld [vmem:[#allocation4 + $0xb8] sm:$0xff]
        %v627 = vld [vmem:[#allocation4 + $0xc0] sm:$0xff]
        %v628 = vld [vmem:[#allocation4 + $0xc8] sm:$0xff]
        %v629 = vld [vmem:[#allocation4 + $0xd0] sm:$0xff]
        %v630 = vld [vmem:[#allocation4 + $0xd8] sm:$0xff]
        %v631 = vld [vmem:[#allocation4 + $0xe0] sm:$0xff]
        %v632 = vld [vmem:[#allocation4 + $0xe8] sm:$0xff]
        %v633 = vld [vmem:[#allocation4 + $0xf0] sm:$0xff]
        %v634 = vld [vmem:[#allocation4 + $0xf8] sm:$0xff]
        %v635 = vld [vmem:[#allocation4 + $0x100] sm:$0xff]
        %v636 = vld [vmem:[#allocation4 + $0x108] sm:$0xff]
        %v637 = vld [vmem:[#allocation4 + $0x110] sm:$0xff]
        %v638 = vld [vmem:[#allocation4 + $0x118] sm:$0xff]
        %v639 = vld [vmem:[#allocation4 + $0x120] sm:$0xff]
        %v640 = vld [vmem:[#allocation4 + $0x128] sm:$0xff]
        %v641 = vld [vmem:[#allocation4 + $0x130] sm:$0xff]
        %v642 = vld [vmem:[#allocation4 + $0x138] sm:$0xff]
        %v643 = vld [vmem:[#allocation4 + $0x140] sm:$0xff]
        %v644 = vld [vmem:[#allocation4 + $0x148] sm:$0xff]
        %v645 = vld [vmem:[#allocation4 + $0x150] sm:$0xff]
        %v646 = vld [vmem:[#allocation4 + $0x158] sm:$0xff]
        %v647 = vld [vmem:[#allocation4 + $0x160] sm:$0xff]
        %v648 = vld [vmem:[#allocation4 + $0x168] sm:$0xff]
        %v649 = vld [vmem:[#allocation4 + $0x170] sm:$0xff]
        %v650 = vld [vmem:[#allocation4 + $0x178] sm:$0xff]
        %v651 = vld [vmem:[#allocation4 + $0x180] sm:$0xff]
        %v652 = vld [vmem:[#allocation4 + $0x188] sm:$0xff]
        %v653 = vld [vmem:[#allocation4 + $0x190] sm:$0xff]
        %v654 = vld [vmem:[#allocation4 + $0x198] sm:$0xff]
        %v655 = vld [vmem:[#allocation4 + $0x1a0] sm:$0xff]
        %v656 = vld [vmem:[#allocation4 + $0x1a8] sm:$0xff]
        %v657 = vld [vmem:[#allocation4 + $0x1b0] sm:$0xff]
        %v658 = vld [vmem:[#allocation4 + $0x1b8] sm:$0xff]
        %v659 = vld [vmem:[#allocation4 + $0x1c0] sm:$0xff]
        %v660 = vld [vmem:[#allocation4 + $0x1c8] sm:$0xff]
        %v661 = vld [vmem:[#allocation4 + $0x1d0] sm:$0xff]
        %v662 = vld [vmem:[#allocation4 + $0x1d8] sm:$0xff]
        %v663 = vld [vmem:[#allocation4 + $0x1e0] sm:$0xff]
        %v664 = vld [vmem:[#allocation4 + $0x1e8] sm:$0xff]
        %v665 = vld [vmem:[#allocation4 + $0x1f0] sm:$0xff]
        %v666 = vld [vmem:[#allocation4 + $0x1f8] sm:$0xff]
        %v667 = vld [vmem:[%s2] sm:$0x3]
        %v669 = vlaneseq
        %v670 = vshrl.u32 %v669, 7
        %v671 = vsub.s32 0, %v670
        %v672 = vrot.slane %v667, %v671
        %v673 = vlaneseq
        %v674 = vshrl.u32 %v673, 7
        %v675 = vsub.s32 1, %v674
        %v676 = vrot.slane %v667, %v675
        %v743 = vunpack.c.l.b16 %v603
        %v744 = vunpack.c.h.b16 %v603
        %v745 = vunpack.c.l.b16 %v604
        %v746 = vunpack.c.h.b16 %v604
        %v747 = vunpack.c.l.b16 %v605
        %v748 = vunpack.c.h.b16 %v605
        %v749 = vunpack.c.l.b16 %v606
        %v750 = vunpack.c.h.b16 %v606
        %v751 = vunpack.c.l.b16 %v607
        %v752 = vunpack.c.h.b16 %v607
        %v753 = vunpack.c.l.b16 %v608
        %v754 = vunpack.c.h.b16 %v608
        %v755 = vunpack.c.l.b16 %v609
        %v756 = vunpack.c.h.b16 %v609
        %v757 = vunpack.c.l.b16 %v610
        %v758 = vunpack.c.h.b16 %v610
        %v759 = vunpack.c.l.b16 %v611
        %v760 = vunpack.c.h.b16 %v611
        %v761 = vunpack.c.l.b16 %v612
        %v762 = vunpack.c.h.b16 %v612
        %v763 = vunpack.c.l.b16 %v613
        %v764 = vunpack.c.h.b16 %v613
        %v765 = vunpack.c.l.b16 %v614
        %v766 = vunpack.c.h.b16 %v614
        %v767 = vunpack.c.l.b16 %v615
        %v768 = vunpack.c.h.b16 %v615
        %v769 = vunpack.c.l.b16 %v616
        %v770 = vunpack.c.h.b16 %v616
        %v771 = vunpack.c.l.b16 %v617
        %v772 = vunpack.c.h.b16 %v617
        %v773 = vunpack.c.l.b16 %v618
        %v774 = vunpack.c.h.b16 %v618
        %v775 = vunpack.c.l.b16 %v619
        %v776 = vunpack.c.h.b16 %v619
        %v777 = vunpack.c.l.b16 %v620
        %v778 = vunpack.c.h.b16 %v620
        %v779 = vunpack.c.l.b16 %v621
        %v780 = vunpack.c.h.b16 %v621
        %v781 = vunpack.c.l.b16 %v622
        %v782 = vunpack.c.h.b16 %v622
        %v783 = vunpack.c.l.b16 %v623
        %v784 = vunpack.c.h.b16 %v623
        %v785 = vunpack.c.l.b16 %v624
        %v786 = vunpack.c.h.b16 %v624
        %v787 = vunpack.c.l.b16 %v625
        %v788 = vunpack.c.h.b16 %v625
        %v789 = vunpack.c.l.b16 %v626
        %v790 = vunpack.c.h.b16 %v626
        %v791 = vunpack.c.l.b16 %v627
        %v792 = vunpack.c.h.b16 %v627
        %v793 = vunpack.c.l.b16 %v628
        %v794 = vunpack.c.h.b16 %v628
        %v795 = vunpack.c.l.b16 %v629
        %v796 = vunpack.c.h.b16 %v629
        %v797 = vunpack.c.l.b16 %v630
        %v798 = vunpack.c.h.b16 %v630
        %v799 = vunpack.c.l.b16 %v631
        %v800 = vunpack.c.h.b16 %v631
        %v801 = vunpack.c.l.b16 %v632
        %v802 = vunpack.c.h.b16 %v632
        %v803 = vunpack.c.l.b16 %v633
        %v804 = vunpack.c.h.b16 %v633
        %v805 = vunpack.c.l.b16 %v634
        %v806 = vunpack.c.h.b16 %v634
        %v807 = vunpack.c.l.b16 %v635
        %v808 = vunpack.c.h.b16 %v635
        %v809 = vunpack.c.l.b16 %v636
        %v810 = vunpack.c.h.b16 %v636
        %v811 = vunpack.c.l.b16 %v637
        %v812 = vunpack.c.h.b16 %v637
        %v813 = vunpack.c.l.b16 %v638
        %v814 = vunpack.c.h.b16 %v638
        %v815 = vunpack.c.l.b16 %v639
        %v816 = vunpack.c.h.b16 %v639
        %v817 = vunpack.c.l.b16 %v640
        %v818 = vunpack.c.h.b16 %v640
        %v819 = vunpack.c.l.b16 %v641
        %v820 = vunpack.c.h.b16 %v641
        %v821 = vunpack.c.l.b16 %v642
        %v822 = vunpack.c.h.b16 %v642
        %v823 = vunpack.c.l.b16 %v643
        %v824 = vunpack.c.h.b16 %v643
        %v825 = vunpack.c.l.b16 %v644
        %v826 = vunpack.c.h.b16 %v644
        %v827 = vunpack.c.l.b16 %v645
        %v828 = vunpack.c.h.b16 %v645
        %v829 = vunpack.c.l.b16 %v646
        %v830 = vunpack.c.h.b16 %v646
        %v831 = vunpack.c.l.b16 %v647
        %v832 = vunpack.c.h.b16 %v647
        %v833 = vunpack.c.l.b16 %v648
        %v834 = vunpack.c.h.b16 %v648
        %v835 = vunpack.c.l.b16 %v649
        %v836 = vunpack.c.h.b16 %v649
        %v837 = vunpack.c.l.b16 %v650
        %v838 = vunpack.c.h.b16 %v650
        %v839 = vunpack.c.l.b16 %v651
        %v840 = vunpack.c.h.b16 %v651
        %v841 = vunpack.c.l.b16 %v652
        %v842 = vunpack.c.h.b16 %v652
        %v843 = vunpack.c.l.b16 %v653
        %v844 = vunpack.c.h.b16 %v653
        %v845 = vunpack.c.l.b16 %v654
        %v846 = vunpack.c.h.b16 %v654
        %v847 = vunpack.c.l.b16 %v655
        %v848 = vunpack.c.h.b16 %v655
        %v849 = vunpack.c.l.b16 %v656
        %v850 = vunpack.c.h.b16 %v656
        %v851 = vunpack.c.l.b16 %v657
        %v852 = vunpack.c.h.b16 %v657
        %v853 = vunpack.c.l.b16 %v658
        %v854 = vunpack.c.h.b16 %v658
        %v855 = vunpack.c.l.b16 %v659
        %v856 = vunpack.c.h.b16 %v659
        %v857 = vunpack.c.l.b16 %v660
        %v858 = vunpack.c.h.b16 %v660
        %v859 = vunpack.c.l.b16 %v661
        %v860 = vunpack.c.h.b16 %v661
        %v861 = vunpack.c.l.b16 %v662
        %v862 = vunpack.c.h.b16 %v662
        %v863 = vunpack.c.l.b16 %v663
        %v864 = vunpack.c.h.b16 %v663
        %v865 = vunpack.c.l.b16 %v664
        %v866 = vunpack.c.h.b16 %v664
        %v867 = vunpack.c.l.b16 %v665
        %v868 = vunpack.c.h.b16 %v665
        %v869 = vunpack.c.l.b16 %v666
        %v870 = vunpack.c.h.b16 %v666
        %v871 = vpack.c.b16 %v745, %v743
        %v872 = vpack.c.b16 %v746, %v744
        %v873 = vpack.c.b16 %v749, %v747
        %v874 = vpack.c.b16 %v750, %v748
        %v875 = vpack.c.b16 %v753, %v751
        %v876 = vpack.c.b16 %v754, %v752
        %v877 = vpack.c.b16 %v757, %v755
        %v878 = vpack.c.b16 %v758, %v756
        %v879 = vpack.c.b16 %v761, %v759
        %v880 = vpack.c.b16 %v762, %v760
        %v881 = vpack.c.b16 %v765, %v763
        %v882 = vpack.c.b16 %v766, %v764
        %v883 = vpack.c.b16 %v769, %v767
        %v884 = vpack.c.b16 %v770, %v768
        %v885 = vpack.c.b16 %v773, %v771
        %v886 = vpack.c.b16 %v774, %v772
        %v887 = vpack.c.b16 %v777, %v775
        %v888 = vpack.c.b16 %v778, %v776
        %v889 = vpack.c.b16 %v781, %v779
        %v890 = vpack.c.b16 %v782, %v780
        %v891 = vpack.c.b16 %v785, %v783
        %v892 = vpack.c.b16 %v786, %v784
        %v893 = vpack.c.b16 %v789, %v787
        %v894 = vpack.c.b16 %v790, %v788
        %v895 = vpack.c.b16 %v793, %v791
        %v896 = vpack.c.b16 %v794, %v792
        %v897 = vpack.c.b16 %v797, %v795
        %v898 = vpack.c.b16 %v798, %v796
        %v899 = vpack.c.b16 %v801, %v799
        %v900 = vpack.c.b16 %v802, %v800
        %v901 = vpack.c.b16 %v805, %v803
        %v902 = vpack.c.b16 %v806, %v804
        %v903 = vpack.c.b16 %v809, %v807
        %v904 = vpack.c.b16 %v810, %v808
        %v905 = vpack.c.b16 %v813, %v811
        %v906 = vpack.c.b16 %v814, %v812
        %v907 = vpack.c.b16 %v817, %v815
        %v908 = vpack.c.b16 %v818, %v816
        %v909 = vpack.c.b16 %v821, %v819
        %v910 = vpack.c.b16 %v822, %v820
        %v911 = vpack.c.b16 %v825, %v823
        %v912 = vpack.c.b16 %v826, %v824
        %v913 = vpack.c.b16 %v829, %v827
        %v914 = vpack.c.b16 %v830, %v828
        %v915 = vpack.c.b16 %v833, %v831
        %v916 = vpack.c.b16 %v834, %v832
        %v917 = vpack.c.b16 %v837, %v835
        %v918 = vpack.c.b16 %v838, %v836
        %v919 = vpack.c.b16 %v841, %v839
        %v920 = vpack.c.b16 %v842, %v840
        %v921 = vpack.c.b16 %v845, %v843
        %v922 = vpack.c.b16 %v846, %v844
        %v923 = vpack.c.b16 %v849, %v847
        %v924 = vpack.c.b16 %v850, %v848
        %v925 = vpack.c.b16 %v853, %v851
        %v926 = vpack.c.b16 %v854, %v852
        %v927 = vpack.c.b16 %v857, %v855
        %v928 = vpack.c.b16 %v858, %v856
        %v929 = vpack.c.b16 %v861, %v859
        %v930 = vpack.c.b16 %v862, %v860
        %v931 = vpack.c.b16 %v865, %v863
        %v932 = vpack.c.b16 %v866, %v864
        %v933 = vpack.c.b16 %v869, %v867
        %v934 = vpack.c.b16 %v870, %v868
        %999 = vmatprep.subr.bf16.mxu0 %v872
        %1000 = vmatpush1.bf16.msra.mxu0 %v871
        %1001 = vmatprep.subr.bf16.mxu0 %v874
        %1002 = vmatpush1.bf16.msra.mxu0 %v873
        %1003 = vmatprep.subr.bf16.mxu0 %v876
        %1004 = vmatpush1.bf16.msra.mxu0 %v875
        %1005 = vmatprep.subr.bf16.mxu0 %v878
        %1006 = vmatpush1.bf16.msra.mxu0 %v877
        %1007 = vmatprep.subr.bf16.mxu0 %v880
        %1008 = vmatpush1.bf16.msra.mxu0 %v879
        %1009 = vmatprep.subr.bf16.mxu0 %v882
        %1010 = vmatpush1.bf16.msra.mxu0 %v881
        %1011 = vmatprep.subr.bf16.mxu0 %v884
        %1012 = vmatpush1.bf16.msra.mxu0 %v883
        %1013 = vmatprep.subr.bf16.mxu0 %v886
        %1014 = vmatpush1.bf16.msra.mxu0 %v885
        %1015 = vmatprep.subr.bf16.mxu0 %v888
        %1016 = vmatpush1.bf16.msra.mxu0 %v887
        %1017 = vmatprep.subr.bf16.mxu0 %v890
        %1018 = vmatpush1.bf16.msra.mxu0 %v889
        %1019 = vmatprep.subr.bf16.mxu0 %v892
        %1020 = vmatpush1.bf16.msra.mxu0 %v891
        %1021 = vmatprep.subr.bf16.mxu0 %v894
        %1022 = vmatpush1.bf16.msra.mxu0 %v893
        %1023 = vmatprep.subr.bf16.mxu0 %v896
        %1024 = vmatpush1.bf16.msra.mxu0 %v895
        %1025 = vmatprep.subr.bf16.mxu0 %v898
        %1026 = vmatpush1.bf16.msra.mxu0 %v897
        %1027 = vmatprep.subr.bf16.mxu0 %v900
        %1028 = vmatpush1.bf16.msra.mxu0 %v899
        %1029 = vmatprep.subr.bf16.mxu0 %v902
        %1030 = vmatpush1.bf16.msra.mxu0 %v901
        %1031 = vmatprep.mubr.bf16.mxu0 %v540
        %1032 = vmatmul.mubr.bf16.gmra.mrb[0].mxu0 %v539
        %v1033 = vpop.f32.mrb[0].mxu0
        %v1034 = vadd.f32 %v672, %v1033
        %v1035 = vpop.f32.mrb[0].mxu0
        %v1036 = vadd.f32 %v676, %v1035
        %v1037 = vpop.f32.mrb[0].mxu0
        %v1038 = vadd.f32 %v672, %v1037
        %v1039 = vpop.f32.mrb[0].mxu0
        %v1040 = vadd.f32 %v676, %v1039
        %1041 = vmatprep.mubr.bf16.mxu0 %v544
        %1042 = vmatmul.mubr.bf16.gmra.mrb[0].mxu0 %v543
        %v1043 = vpop.f32.mrb[0].mxu0
        %v1044 = vadd.f32 %v672, %v1043
        %v1045 = vpop.f32.mrb[0].mxu0
        %v1046 = vadd.f32 %v676, %v1045
        %v1047 = vpop.f32.mrb[0].mxu0
        %v1048 = vadd.f32 %v672, %v1047
        %v1049 = vpop.f32.mrb[0].mxu0
        %v1050 = vadd.f32 %v676, %v1049
        %1051 = vmatprep.mubr.bf16.mxu0 %v548
        %1052 = vmatmul.mubr.bf16.gmra.mrb[0].mxu0 %v547
        %v1053 = vpop.f32.mrb[0].mxu0
        %v1054 = vadd.f32 %v672, %v1053
        %v1055 = vpop.f32.mrb[0].mxu0
        %v1056 = vadd.f32 %v676, %v1055
        %v1057 = vpop.f32.mrb[0].mxu0
        %v1058 = vadd.f32 %v672, %v1057
        %v1059 = vpop.f32.mrb[0].mxu0
        %v1060 = vadd.f32 %v676, %v1059
        %1061 = vmatprep.mubr.bf16.mxu0 %v552
        %1062 = vmatmul.mubr.bf16.gmra.mrb[0].mxu0 %v551
        %v1063 = vpop.f32.mrb[0].mxu0
        %v1064 = vadd.f32 %v672, %v1063
        %v1065 = vpop.f32.mrb[0].mxu0
        %v1066 = vadd.f32 %v676, %v1065
        %v1067 = vpop.f32.mrb[0].mxu0
        %v1068 = vadd.f32 %v672, %v1067
        %v1069 = vpop.f32.mrb[0].mxu0
        %v1070 = vadd.f32 %v676, %v1069
        %1071 = vmatprep.mubr.bf16.mxu0 %v556
        %1072 = vmatmul.mubr.bf16.gmra.mrb[0].mxu0 %v555
        %v1073 = vpop.f32.mrb[0].mxu0
        %v1074 = vadd.f32 %v672, %v1073
        %v1075 = vpop.f32.mrb[0].mxu0
        %v1076 = vadd.f32 %v676, %v1075
        %v1077 = vpop.f32.mrb[0].mxu0
        %v1078 = vadd.f32 %v672, %v1077
        %v1079 = vpop.f32.mrb[0].mxu0
        %v1080 = vadd.f32 %v676, %v1079
        %1081 = vmatprep.mubr.bf16.mxu0 %v560
        %1082 = vmatmul.mubr.bf16.gmra.mrb[0].mxu0 %v559
        %v1083 = vpop.f32.mrb[0].mxu0
        %v1084 = vadd.f32 %v672, %v1083
        %v1085 = vpop.f32.mrb[0].mxu0
        %v1086 = vadd.f32 %v676, %v1085
        %v1087 = vpop.f32.mrb[0].mxu0
        %v1088 = vadd.f32 %v672, %v1087
        %v1089 = vpop.f32.mrb[0].mxu0
        %v1090 = vadd.f32 %v676, %v1089
        %1091 = vmatprep.mubr.bf16.mxu0 %v564
        %1092 = vmatmul.mubr.bf16.gmra.mrb[0].mxu0 %v563
        %v1093 = vpop.f32.mrb[0].mxu0
        %v1094 = vadd.f32 %v672, %v1093
        %v1095 = vpop.f32.mrb[0].mxu0
        %v1096 = vadd.f32 %v676, %v1095
        %v1097 = vpop.f32.mrb[0].mxu0
        %v1098 = vadd.f32 %v672, %v1097
        %v1099 = vpop.f32.mrb[0].mxu0
        %v1100 = vadd.f32 %v676, %v1099
        %1101 = vmatprep.mubr.bf16.mxu0 %v568
        %1102 = vmatmul.mubr.bf16.gmra.mrb[0].mxu0 %v567
        %v1103 = vpop.f32.mrb[0].mxu0
        %v1104 = vadd.f32 %v672, %v1103
        %v1105 = vpop.f32.mrb[0].mxu0
        %v1106 = vadd.f32 %v676, %v1105
        %v1107 = vpop.f32.mrb[0].mxu0
        %v1108 = vadd.f32 %v672, %v1107
        %v1109 = vpop.f32.mrb[0].mxu0
        %v1110 = vadd.f32 %v676, %v1109
        %1111 = vmatprep.mubr.bf16.mxu0 %v572
        %1112 = vmatmul.mubr.bf16.gmra.mrb[0].mxu0 %v571
        %v1113 = vpop.f32.mrb[0].mxu0
        %v1114 = vadd.f32 %v672, %v1113
        %v1115 = vpop.f32.mrb[0].mxu0
        %v1116 = vadd.f32 %v676, %v1115
        %v1117 = vpop.f32.mrb[0].mxu0
        %v1118 = vadd.f32 %v672, %v1117
        %v1119 = vpop.f32.mrb[0].mxu0
        %v1120 = vadd.f32 %v676, %v1119
        %1121 = vmatprep.mubr.bf16.mxu0 %v576
        %1122 = vmatmul.mubr.bf16.gmra.mrb[0].mxu0 %v575
        %v1123 = vpop.f32.mrb[0].mxu0
        %v1124 = vadd.f32 %v672, %v1123
        %v1125 = vpop.f32.mrb[0].mxu0
        %v1126 = vadd.f32 %v676, %v1125
        %v1127 = vpop.f32.mrb[0].mxu0
        %v1128 = vadd.f32 %v672, %v1127
        %v1129 = vpop.f32.mrb[0].mxu0
        %v1130 = vadd.f32 %v676, %v1129
        %1131 = vmatprep.mubr.bf16.mxu0 %v580
        %1132 = vmatmul.mubr.bf16.gmra.mrb[0].mxu0 %v579
        %v1133 = vpop.f32.mrb[0].mxu0
        %v1134 = vadd.f32 %v672, %v1133
        %v1135 = vpop.f32.mrb[0].mxu0
        %v1136 = vadd.f32 %v676, %v1135
        %v1137 = vpop.f32.mrb[0].mxu0
        %v1138 = vadd.f32 %v672, %v1137
        %v1139 = vpop.f32.mrb[0].mxu0
        %v1140 = vadd.f32 %v676, %v1139
        %1141 = vmatprep.mubr.bf16.mxu0 %v584
        %1142 = vmatmul.mubr.bf16.gmra.mrb[0].mxu0 %v583
        %v1143 = vpop.f32.mrb[0].mxu0
        %v1144 = vadd.f32 %v672, %v1143
        %v1145 = vpop.f32.mrb[0].mxu0
        %v1146 = vadd.f32 %v676, %v1145
        %v1147 = vpop.f32.mrb[0].mxu0
        %v1148 = vadd.f32 %v672, %v1147
        %v1149 = vpop.f32.mrb[0].mxu0
        %v1150 = vadd.f32 %v676, %v1149
        %1151 = vmatprep.mubr.bf16.mxu0 %v588
        %1152 = vmatmul.mubr.bf16.gmra.mrb[0].mxu0 %v587
        %v1153 = vpop.f32.mrb[0].mxu0
        %v1154 = vadd.f32 %v672, %v1153
        %v1155 = vpop.f32.mrb[0].mxu0
        %v1156 = vadd.f32 %v676, %v1155
        %v1157 = vpop.f32.mrb[0].mxu0
        %v1158 = vadd.f32 %v672, %v1157
        %v1159 = vpop.f32.mrb[0].mxu0
        %v1160 = vadd.f32 %v676, %v1159
        %1161 = vmatprep.mubr.bf16.mxu0 %v592
        %1162 = vmatmul.mubr.bf16.gmra.mrb[0].mxu0 %v591
        %v1163 = vpop.f32.mrb[0].mxu0
        %v1164 = vadd.f32 %v672, %v1163
        %v1165 = vpop.f32.mrb[0].mxu0
        %v1166 = vadd.f32 %v676, %v1165
        %v1167 = vpop.f32.mrb[0].mxu0
        %v1168 = vadd.f32 %v672, %v1167
        %v1169 = vpop.f32.mrb[0].mxu0
        %v1170 = vadd.f32 %v676, %v1169
        %1171 = vmatprep.mubr.bf16.mxu0 %v596
        %1172 = vmatmul.mubr.bf16.gmra.mrb[0].mxu0 %v595
        %v1173 = vpop.f32.mrb[0].mxu0
        %v1174 = vadd.f32 %v672, %v1173
        %v1175 = vpop.f32.mrb[0].mxu0
        %v1176 = vadd.f32 %v676, %v1175
        %v1177 = vpop.f32.mrb[0].mxu0
        %v1178 = vadd.f32 %v672, %v1177
        %v1179 = vpop.f32.mrb[0].mxu0
        %v1180 = vadd.f32 %v676, %v1179
        %1181 = vmatprep.mubr.bf16.mxu0 %v600
        %1182 = vmatmul.mubr.bf16.gmra.mrb[0].mxu0 %v599
        %v1183 = vpop.f32.mrb[0].mxu0
        %v1184 = vadd.f32 %v672, %v1183
        %v1185 = vpop.f32.mrb[0].mxu0
        %v1186 = vadd.f32 %v676, %v1185
        %v1187 = vpop.f32.mrb[0].mxu0
        %v1188 = vadd.f32 %v672, %v1187
        %v1189 = vpop.f32.mrb[0].mxu0
        %v1190 = vadd.f32 %v676, %v1189
        %1191 = vdwg.mxu0
        %1192 = vmatprep.subr.bf16.mxu0 %v904
        %1193 = vmatpush1.bf16.msra.mxu0 %v903
        %1194 = vmatprep.subr.bf16.mxu0 %v906
        %1195 = vmatpush1.bf16.msra.mxu0 %v905
        %1196 = vmatprep.subr.bf16.mxu0 %v908
        %1197 = vmatpush1.bf16.msra.mxu0 %v907
        %1198 = vmatprep.subr.bf16.mxu0 %v910
        %1199 = vmatpush1.bf16.msra.mxu0 %v909
        %1200 = vmatprep.subr.bf16.mxu0 %v912
        %1201 = vmatpush1.bf16.msra.mxu0 %v911
        %1202 = vmatprep.subr.bf16.mxu0 %v914
        %1203 = vmatpush1.bf16.msra.mxu0 %v913
        %1204 = vmatprep.subr.bf16.mxu0 %v916
        %1205 = vmatpush1.bf16.msra.mxu0 %v915
        %1206 = vmatprep.subr.bf16.mxu0 %v918
        %1207 = vmatpush1.bf16.msra.mxu0 %v917
        %1208 = vmatprep.subr.bf16.mxu0 %v920
        %1209 = vmatpush1.bf16.msra.mxu0 %v919
        %1210 = vmatprep.subr.bf16.mxu0 %v922
        %1211 = vmatpush1.bf16.msra.mxu0 %v921
        %1212 = vmatprep.subr.bf16.mxu0 %v924
        %1213 = vmatpush1.bf16.msra.mxu0 %v923
        %1214 = vmatprep.subr.bf16.mxu0 %v926
        %1215 = vmatpush1.bf16.msra.mxu0 %v925
        %1216 = vmatprep.subr.bf16.mxu0 %v928
        %1217 = vmatpush1.bf16.msra.mxu0 %v927
        %1218 = vmatprep.subr.bf16.mxu0 %v930
        %1219 = vmatpush1.bf16.msra.mxu0 %v929
        %1220 = vmatprep.subr.bf16.mxu0 %v932
        %1221 = vmatpush1.bf16.msra.mxu0 %v931
        %1222 = vmatprep.subr.bf16.mxu0 %v934
        %1223 = vmatpush1.bf16.msra.mxu0 %v933
        %1224 = vmatprep.mubr.bf16.mxu0 %v542
        %1225 = vmatmul.mubr.bf16.gmra.mrb[0].mxu0 %v541
        %v1226 = vpop.f32.mrb[0].mxu0
        %v1227 = vadd.f32 %v1034, %v1226
        %v1228 = vpop.f32.mrb[0].mxu0
        %v1229 = vadd.f32 %v1036, %v1228
        %v1230 = vpop.f32.mrb[0].mxu0
        %v1231 = vadd.f32 %v1038, %v1230
        %v1232 = vpop.f32.mrb[0].mxu0
        %v1233 = vadd.f32 %v1040, %v1232
        %1234 = vmatprep.mubr.bf16.mxu0 %v546
        %1235 = vmatmul.mubr.bf16.gmra.mrb[0].mxu0 %v545
        %v1236 = vpop.f32.mrb[0].mxu0
        %v1237 = vadd.f32 %v1044, %v1236
        %v1238 = vpop.f32.mrb[0].mxu0
        %v1239 = vadd.f32 %v1046, %v1238
        %v1240 = vpop.f32.mrb[0].mxu0
        %v1241 = vadd.f32 %v1048, %v1240
        %v1242 = vpop.f32.mrb[0].mxu0
        %v1243 = vadd.f32 %v1050, %v1242
        %1244 = vmatprep.mubr.bf16.mxu0 %v550
        %1245 = vmatmul.mubr.bf16.gmra.mrb[0].mxu0 %v549
        %v1246 = vpop.f32.mrb[0].mxu0
        %v1247 = vadd.f32 %v1054, %v1246
        %v1248 = vpop.f32.mrb[0].mxu0
        %v1249 = vadd.f32 %v1056, %v1248
        %v1250 = vpop.f32.mrb[0].mxu0
        %v1251 = vadd.f32 %v1058, %v1250
        %v1252 = vpop.f32.mrb[0].mxu0
        %v1253 = vadd.f32 %v1060, %v1252
        %1254 = vmatprep.mubr.bf16.mxu0 %v554
        %1255 = vmatmul.mubr.bf16.gmra.mrb[0].mxu0 %v553
        %v1256 = vpop.f32.mrb[0].mxu0
        %v1257 = vadd.f32 %v1064, %v1256
        %v1258 = vpop.f32.mrb[0].mxu0
        %v1259 = vadd.f32 %v1066, %v1258
        %v1260 = vpop.f32.mrb[0].mxu0
        %v1261 = vadd.f32 %v1068, %v1260
        %v1262 = vpop.f32.mrb[0].mxu0
        %v1263 = vadd.f32 %v1070, %v1262
        %1264 = vmatprep.mubr.bf16.mxu0 %v558
        %1265 = vmatmul.mubr.bf16.gmra.mrb[0].mxu0 %v557
        %v1266 = vpop.f32.mrb[0].mxu0
        %v1267 = vadd.f32 %v1074, %v1266
        %v1268 = vpop.f32.mrb[0].mxu0
        %v1269 = vadd.f32 %v1076, %v1268
        %v1270 = vpop.f32.mrb[0].mxu0
        %v1271 = vadd.f32 %v1078, %v1270
        %v1272 = vpop.f32.mrb[0].mxu0
        %v1273 = vadd.f32 %v1080, %v1272
        %1274 = vmatprep.mubr.bf16.mxu0 %v562
        %1275 = vmatmul.mubr.bf16.gmra.mrb[0].mxu0 %v561
        %v1276 = vpop.f32.mrb[0].mxu0
        %v1277 = vadd.f32 %v1084, %v1276
        %v1278 = vpop.f32.mrb[0].mxu0
        %v1279 = vadd.f32 %v1086, %v1278
        %v1280 = vpop.f32.mrb[0].mxu0
        %v1281 = vadd.f32 %v1088, %v1280
        %v1282 = vpop.f32.mrb[0].mxu0
        %v1283 = vadd.f32 %v1090, %v1282
        %1284 = vmatprep.mubr.bf16.mxu0 %v566
        %1285 = vmatmul.mubr.bf16.gmra.mrb[0].mxu0 %v565
        %v1286 = vpop.f32.mrb[0].mxu0
        %v1287 = vadd.f32 %v1094, %v1286
        %v1288 = vpop.f32.mrb[0].mxu0
        %v1289 = vadd.f32 %v1096, %v1288
        %v1290 = vpop.f32.mrb[0].mxu0
        %v1291 = vadd.f32 %v1098, %v1290
        %v1292 = vpop.f32.mrb[0].mxu0
        %v1293 = vadd.f32 %v1100, %v1292
        %1294 = vmatprep.mubr.bf16.mxu0 %v570
        %1295 = vmatmul.mubr.bf16.gmra.mrb[0].mxu0 %v569
        %v1296 = vpop.f32.mrb[0].mxu0
        %v1297 = vadd.f32 %v1104, %v1296
        %v1298 = vpop.f32.mrb[0].mxu0
        %v1299 = vadd.f32 %v1106, %v1298
        %v1300 = vpop.f32.mrb[0].mxu0
        %v1301 = vadd.f32 %v1108, %v1300
        %v1302 = vpop.f32.mrb[0].mxu0
        %v1303 = vadd.f32 %v1110, %v1302
        %1304 = vmatprep.mubr.bf16.mxu0 %v574
        %1305 = vmatmul.mubr.bf16.gmra.mrb[0].mxu0 %v573
        %v1306 = vpop.f32.mrb[0].mxu0
        %v1307 = vadd.f32 %v1114, %v1306
        %v1308 = vpop.f32.mrb[0].mxu0
        %v1309 = vadd.f32 %v1116, %v1308
        %v1310 = vpop.f32.mrb[0].mxu0
        %v1311 = vadd.f32 %v1118, %v1310
        %v1312 = vpop.f32.mrb[0].mxu0
        %v1313 = vadd.f32 %v1120, %v1312
        %1314 = vmatprep.mubr.bf16.mxu0 %v578
        %1315 = vmatmul.mubr.bf16.gmra.mrb[0].mxu0 %v577
        %v1316 = vpop.f32.mrb[0].mxu0
        %v1317 = vadd.f32 %v1124, %v1316
        %v1318 = vpop.f32.mrb[0].mxu0
        %v1319 = vadd.f32 %v1126, %v1318
        %v1320 = vpop.f32.mrb[0].mxu0
        %v1321 = vadd.f32 %v1128, %v1320
        %v1322 = vpop.f32.mrb[0].mxu0
        %v1323 = vadd.f32 %v1130, %v1322
        %1324 = vmatprep.mubr.bf16.mxu0 %v582
        %1325 = vmatmul.mubr.bf16.gmra.mrb[0].mxu0 %v581
        %v1326 = vpop.f32.mrb[0].mxu0
        %v1327 = vadd.f32 %v1134, %v1326
        %v1328 = vpop.f32.mrb[0].mxu0
        %v1329 = vadd.f32 %v1136, %v1328
        %v1330 = vpop.f32.mrb[0].mxu0
        %v1331 = vadd.f32 %v1138, %v1330
        %v1332 = vpop.f32.mrb[0].mxu0
        %v1333 = vadd.f32 %v1140, %v1332
        %1334 = vmatprep.mubr.bf16.mxu0 %v586
        %1335 = vmatmul.mubr.bf16.gmra.mrb[0].mxu0 %v585
        %v1336 = vpop.f32.mrb[0].mxu0
        %v1337 = vadd.f32 %v1144, %v1336
        %v1338 = vpop.f32.mrb[0].mxu0
        %v1339 = vadd.f32 %v1146, %v1338
        %v1340 = vpop.f32.mrb[0].mxu0
        %v1341 = vadd.f32 %v1148, %v1340
        %v1342 = vpop.f32.mrb[0].mxu0
        %v1343 = vadd.f32 %v1150, %v1342
        %1344 = vmatprep.mubr.bf16.mxu0 %v590
        %1345 = vmatmul.mubr.bf16.gmra.mrb[0].mxu0 %v589
        %v1346 = vpop.f32.mrb[0].mxu0
        %v1347 = vadd.f32 %v1154, %v1346
        %v1348 = vpop.f32.mrb[0].mxu0
        %v1349 = vadd.f32 %v1156, %v1348
        %v1350 = vpop.f32.mrb[0].mxu0
        %v1351 = vadd.f32 %v1158, %v1350
        %v1352 = vpop.f32.mrb[0].mxu0
        %v1353 = vadd.f32 %v1160, %v1352
        %1354 = vmatprep.mubr.bf16.mxu0 %v594
        %1355 = vmatmul.mubr.bf16.gmra.mrb[0].mxu0 %v593
        %v1356 = vpop.f32.mrb[0].mxu0
        %v1357 = vadd.f32 %v1164, %v1356
        %v1358 = vpop.f32.mrb[0].mxu0
        %v1359 = vadd.f32 %v1166, %v1358
        %v1360 = vpop.f32.mrb[0].mxu0
        %v1361 = vadd.f32 %v1168, %v1360
        %v1362 = vpop.f32.mrb[0].mxu0
        %v1363 = vadd.f32 %v1170, %v1362
        %1364 = vmatprep.mubr.bf16.mxu0 %v598
        %1365 = vmatmul.mubr.bf16.gmra.mrb[0].mxu0 %v597
        %v1366 = vpop.f32.mrb[0].mxu0
        %v1367 = vadd.f32 %v1174, %v1366
        %v1368 = vpop.f32.mrb[0].mxu0
        %v1369 = vadd.f32 %v1176, %v1368
        %v1370 = vpop.f32.mrb[0].mxu0
        %v1371 = vadd.f32 %v1178, %v1370
        %v1372 = vpop.f32.mrb[0].mxu0
        %v1373 = vadd.f32 %v1180, %v1372
        %1374 = vmatprep.mubr.bf16.mxu0 %v602
        %1375 = vmatmul.mubr.bf16.gmra.mrb[0].mxu0 %v601
        %v1376 = vpop.f32.mrb[0].mxu0
        %v1377 = vadd.f32 %v1184, %v1376
        %v1378 = vpop.f32.mrb[0].mxu0
        %v1379 = vadd.f32 %v1186, %v1378
        %v1380 = vpop.f32.mrb[0].mxu0
        %v1381 = vadd.f32 %v1188, %v1380
        %v1382 = vpop.f32.mrb[0].mxu0
        %v1383 = vadd.f32 %v1190, %v1382
        %1384 = vdwg.mxu0
        %v1385 = vmax.f32 %v1227, 0.0
        %v1386 = vmax.f32 %v1229, 0.0
        %v1387 = vmax.f32 %v1231, 0.0
        %v1388 = vmax.f32 %v1233, 0.0
        %v1389 = vmax.f32 %v1237, 0.0
        %v1390 = vmax.f32 %v1239, 0.0
        %v1391 = vmax.f32 %v1241, 0.0
        %v1392 = vmax.f32 %v1243, 0.0
        %v1393 = vmax.f32 %v1247, 0.0
        %v1394 = vmax.f32 %v1249, 0.0
        %v1395 = vmax.f32 %v1251, 0.0
        %v1396 = vmax.f32 %v1253, 0.0
        %v1397 = vmax.f32 %v1257, 0.0
        %v1398 = vmax.f32 %v1259, 0.0
        %v1399 = vmax.f32 %v1261, 0.0
        %v1400 = vmax.f32 %v1263, 0.0
        %v1401 = vmax.f32 %v1267, 0.0
        %v1402 = vmax.f32 %v1269, 0.0
        %v1403 = vmax.f32 %v1271, 0.0
        %v1404 = vmax.f32 %v1273, 0.0
        %v1405 = vmax.f32 %v1277, 0.0
        %v1406 = vmax.f32 %v1279, 0.0
        %v1407 = vmax.f32 %v1281, 0.0
        %v1408 = vmax.f32 %v1283, 0.0
        %v1409 = vmax.f32 %v1287, 0.0
        %v1410 = vmax.f32 %v1289, 0.0
        %v1411 = vmax.f32 %v1291, 0.0
        %v1412 = vmax.f32 %v1293, 0.0
        %v1413 = vmax.f32 %v1297, 0.0
        %v1414 = vmax.f32 %v1299, 0.0
        %v1415 = vmax.f32 %v1301, 0.0
        %v1416 = vmax.f32 %v1303, 0.0
        %v1417 = vmax.f32 %v1307, 0.0
        %v1418 = vmax.f32 %v1309, 0.0
        %v1419 = vmax.f32 %v1311, 0.0
        %v1420 = vmax.f32 %v1313, 0.0
        %v1421 = vmax.f32 %v1317, 0.0
        %v1422 = vmax.f32 %v1319, 0.0
        %v1423 = vmax.f32 %v1321, 0.0
        %v1424 = vmax.f32 %v1323, 0.0
        %v1425 = vmax.f32 %v1327, 0.0
        %v1426 = vmax.f32 %v1329, 0.0
        %v1427 = vmax.f32 %v1331, 0.0
        %v1428 = vmax.f32 %v1333, 0.0
        %v1429 = vmax.f32 %v1337, 0.0
        %v1430 = vmax.f32 %v1339, 0.0
        %v1431 = vmax.f32 %v1341, 0.0
        %v1432 = vmax.f32 %v1343, 0.0
        %v1433 = vmax.f32 %v1347, 0.0
        %v1434 = vmax.f32 %v1349, 0.0
        %v1435 = vmax.f32 %v1351, 0.0
        %v1436 = vmax.f32 %v1353, 0.0
        %v1437 = vmax.f32 %v1357, 0.0
        %v1438 = vmax.f32 %v1359, 0.0
        %v1439 = vmax.f32 %v1361, 0.0
        %v1440 = vmax.f32 %v1363, 0.0
        %v1441 = vmax.f32 %v1367, 0.0
        %v1442 = vmax.f32 %v1369, 0.0
        %v1443 = vmax.f32 %v1371, 0.0
        %v1444 = vmax.f32 %v1373, 0.0
        %v1445 = vmax.f32 %v1377, 0.0
        %v1446 = vmax.f32 %v1379, 0.0
        %v1447 = vmax.f32 %v1381, 0.0
        %v1448 = vmax.f32 %v1383, 0.0
        %v1449 = vpack.c.bf16 %v1387, %v1385
        %v1450 = vpack.c.bf16 %v1388, %v1386
        %v1451 = vpack.c.bf16 %v1391, %v1389
        %v1452 = vpack.c.bf16 %v1392, %v1390
        %v1453 = vpack.c.bf16 %v1395, %v1393
        %v1454 = vpack.c.bf16 %v1396, %v1394
        %v1455 = vpack.c.bf16 %v1399, %v1397
        %v1456 = vpack.c.bf16 %v1400, %v1398
        %v1457 = vpack.c.bf16 %v1403, %v1401
        %v1458 = vpack.c.bf16 %v1404, %v1402
        %v1459 = vpack.c.bf16 %v1407, %v1405
        %v1460 = vpack.c.bf16 %v1408, %v1406
        %v1461 = vpack.c.bf16 %v1411, %v1409
        %v1462 = vpack.c.bf16 %v1412, %v1410
        %v1463 = vpack.c.bf16 %v1415, %v1413
        %v1464 = vpack.c.bf16 %v1416, %v1414
        %v1465 = vpack.c.bf16 %v1419, %v1417
        %v1466 = vpack.c.bf16 %v1420, %v1418
        %v1467 = vpack.c.bf16 %v1423, %v1421
        %v1468 = vpack.c.bf16 %v1424, %v1422
        %v1469 = vpack.c.bf16 %v1427, %v1425
        %v1470 = vpack.c.bf16 %v1428, %v1426
        %v1471 = vpack.c.bf16 %v1431, %v1429
        %v1472 = vpack.c.bf16 %v1432, %v1430
        %v1473 = vpack.c.bf16 %v1435, %v1433
        %v1474 = vpack.c.bf16 %v1436, %v1434
        %v1475 = vpack.c.bf16 %v1439, %v1437
        %v1476 = vpack.c.bf16 %v1440, %v1438
        %v1477 = vpack.c.bf16 %v1443, %v1441
        %v1478 = vpack.c.bf16 %v1444, %v1442
        %v1479 = vpack.c.bf16 %v1447, %v1445
        %v1480 = vpack.c.bf16 %v1448, %v1446
        %v1481 = vld [vmem:[#allocation6] sm:$0xff]
        %v1482 = vld [vmem:[#allocation6 + $0x8] sm:$0xff]
        %v1483 = vld [vmem:[#allocation6 + $0x10] sm:$0xff]
        %v1484 = vld [vmem:[#allocation6 + $0x18] sm:$0xff]
        %v1485 = vld [vmem:[#allocation6 + $0x20] sm:$0xff]
        %v1486 = vld [vmem:[#allocation6 + $0x28] sm:$0xff]
        %v1487 = vld [vmem:[#allocation6 + $0x30] sm:$0xff]
        %v1488 = vld [vmem:[#allocation6 + $0x38] sm:$0xff]
        %v1489 = vld [vmem:[#allocation6 + $0x40] sm:$0xff]
        %v1490 = vld [vmem:[#allocation6 + $0x48] sm:$0xff]
        %v1491 = vld [vmem:[#allocation6 + $0x50] sm:$0xff]
        %v1492 = vld [vmem:[#allocation6 + $0x58] sm:$0xff]
        %v1493 = vld [vmem:[#allocation6 + $0x60] sm:$0xff]
        %v1494 = vld [vmem:[#allocation6 + $0x68] sm:$0xff]
        %v1495 = vld [vmem:[#allocation6 + $0x70] sm:$0xff]
        %v1496 = vld [vmem:[#allocation6 + $0x78] sm:$0xff]
        %v1497 = vld [vmem:[#allocation6 + $0x80] sm:$0xff]
        %v1498 = vld [vmem:[#allocation6 + $0x88] sm:$0xff]
        %v1499 = vld [vmem:[#allocation6 + $0x90] sm:$0xff]
        %v1500 = vld [vmem:[#allocation6 + $0x98] sm:$0xff]
        %v1501 = vld [vmem:[#allocation6 + $0xa0] sm:$0xff]
        %v1502 = vld [vmem:[#allocation6 + $0xa8] sm:$0xff]
        %v1503 = vld [vmem:[#allocation6 + $0xb0] sm:$0xff]
        %v1504 = vld [vmem:[#allocation6 + $0xb8] sm:$0xff]
        %v1505 = vld [vmem:[#allocation6 + $0xc0] sm:$0xff]
        %v1506 = vld [vmem:[#allocation6 + $0xc8] sm:$0xff]
        %v1507 = vld [vmem:[#allocation6 + $0xd0] sm:$0xff]
        %v1508 = vld [vmem:[#allocation6 + $0xd8] sm:$0xff]
        %v1509 = vld [vmem:[#allocation6 + $0xe0] sm:$0xff]
        %v1510 = vld [vmem:[#allocation6 + $0xe8] sm:$0xff]
        %v1511 = vld [vmem:[#allocation6 + $0xf0] sm:$0xff]
        %v1512 = vld [vmem:[#allocation6 + $0xf8] sm:$0xff]
        %v1513 = vld [vmem:[%s4] sm:$0x3]
        %v1515 = vlaneseq
        %v1516 = vshrl.u32 %v1515, 7
        %v1517 = vsub.s32 0, %v1516
        %v1518 = vrot.slane %v1513, %v1517
        %v1519 = vlaneseq
        %v1520 = vshrl.u32 %v1519, 7
        %v1521 = vsub.s32 1, %v1520
        %v1522 = vrot.slane %v1513, %v1521
        %v1557 = vunpack.c.l.b16 %v1481
        %v1558 = vunpack.c.h.b16 %v1481
        %v1559 = vunpack.c.l.b16 %v1482
        %v1560 = vunpack.c.h.b16 %v1482
        %v1561 = vunpack.c.l.b16 %v1483
        %v1562 = vunpack.c.h.b16 %v1483
        %v1563 = vunpack.c.l.b16 %v1484
        %v1564 = vunpack.c.h.b16 %v1484
        %v1565 = vunpack.c.l.b16 %v1485
        %v1566 = vunpack.c.h.b16 %v1485
        %v1567 = vunpack.c.l.b16 %v1486
        %v1568 = vunpack.c.h.b16 %v1486
        %v1569 = vunpack.c.l.b16 %v1487
        %v1570 = vunpack.c.h.b16 %v1487
        %v1571 = vunpack.c.l.b16 %v1488
        %v1572 = vunpack.c.h.b16 %v1488
        %v1573 = vunpack.c.l.b16 %v1489
        %v1574 = vunpack.c.h.b16 %v1489
        %v1575 = vunpack.c.l.b16 %v1490
        %v1576 = vunpack.c.h.b16 %v1490
        %v1577 = vunpack.c.l.b16 %v1491
        %v1578 = vunpack.c.h.b16 %v1491
        %v1579 = vunpack.c.l.b16 %v1492
        %v1580 = vunpack.c.h.b16 %v1492
        %v1581 = vunpack.c.l.b16 %v1493
        %v1582 = vunpack.c.h.b16 %v1493
        %v1583 = vunpack.c.l.b16 %v1494
        %v1584 = vunpack.c.h.b16 %v1494
        %v1585 = vunpack.c.l.b16 %v1495
        %v1586 = vunpack.c.h.b16 %v1495
        %v1587 = vunpack.c.l.b16 %v1496
        %v1588 = vunpack.c.h.b16 %v1496
        %v1589 = vunpack.c.l.b16 %v1497
        %v1590 = vunpack.c.h.b16 %v1497
        %v1591 = vunpack.c.l.b16 %v1498
        %v1592 = vunpack.c.h.b16 %v1498
        %v1593 = vunpack.c.l.b16 %v1499
        %v1594 = vunpack.c.h.b16 %v1499
        %v1595 = vunpack.c.l.b16 %v1500
        %v1596 = vunpack.c.h.b16 %v1500
        %v1597 = vunpack.c.l.b16 %v1501
        %v1598 = vunpack.c.h.b16 %v1501
        %v1599 = vunpack.c.l.b16 %v1502
        %v1600 = vunpack.c.h.b16 %v1502
        %v1601 = vunpack.c.l.b16 %v1503
        %v1602 = vunpack.c.h.b16 %v1503
        %v1603 = vunpack.c.l.b16 %v1504
        %v1604 = vunpack.c.h.b16 %v1504
        %v1605 = vunpack.c.l.b16 %v1505
        %v1606 = vunpack.c.h.b16 %v1505
        %v1607 = vunpack.c.l.b16 %v1506
        %v1608 = vunpack.c.h.b16 %v1506
        %v1609 = vunpack.c.l.b16 %v1507
        %v1610 = vunpack.c.h.b16 %v1507
        %v1611 = vunpack.c.l.b16 %v1508
        %v1612 = vunpack.c.h.b16 %v1508
        %v1613 = vunpack.c.l.b16 %v1509
        %v1614 = vunpack.c.h.b16 %v1509
        %v1615 = vunpack.c.l.b16 %v1510
        %v1616 = vunpack.c.h.b16 %v1510
        %v1617 = vunpack.c.l.b16 %v1511
        %v1618 = vunpack.c.h.b16 %v1511
        %v1619 = vunpack.c.l.b16 %v1512
        %v1620 = vunpack.c.h.b16 %v1512
        %v1621 = vpack.c.b16 %v1559, %v1557
        %v1622 = vpack.c.b16 %v1560, %v1558
        %v1623 = vpack.c.b16 %v1563, %v1561
        %v1624 = vpack.c.b16 %v1564, %v1562
        %v1625 = vpack.c.b16 %v1567, %v1565
        %v1626 = vpack.c.b16 %v1568, %v1566
        %v1627 = vpack.c.b16 %v1571, %v1569
        %v1628 = vpack.c.b16 %v1572, %v1570
        %v1629 = vpack.c.b16 %v1575, %v1573
        %v1630 = vpack.c.b16 %v1576, %v1574
        %v1631 = vpack.c.b16 %v1579, %v1577
        %v1632 = vpack.c.b16 %v1580, %v1578
        %v1633 = vpack.c.b16 %v1583, %v1581
        %v1634 = vpack.c.b16 %v1584, %v1582
        %v1635 = vpack.c.b16 %v1587, %v1585
        %v1636 = vpack.c.b16 %v1588, %v1586
        %v1637 = vpack.c.b16 %v1591, %v1589
        %v1638 = vpack.c.b16 %v1592, %v1590
        %v1639 = vpack.c.b16 %v1595, %v1593
        %v1640 = vpack.c.b16 %v1596, %v1594
        %v1641 = vpack.c.b16 %v1599, %v1597
        %v1642 = vpack.c.b16 %v1600, %v1598
        %v1643 = vpack.c.b16 %v1603, %v1601
        %v1644 = vpack.c.b16 %v1604, %v1602
        %v1645 = vpack.c.b16 %v1607, %v1605
        %v1646 = vpack.c.b16 %v1608, %v1606
        %v1647 = vpack.c.b16 %v1611, %v1609
        %v1648 = vpack.c.b16 %v1612, %v1610
        %v1649 = vpack.c.b16 %v1615, %v1613
        %v1650 = vpack.c.b16 %v1616, %v1614
        %v1651 = vpack.c.b16 %v1619, %v1617
        %v1652 = vpack.c.b16 %v1620, %v1618
        %1685 = vmatprep.subr.bf16.mxu0 %v1622
        %1686 = vmatpush1.bf16.msra.mxu0 %v1621
        %1687 = vmatprep.subr.bf16.mxu0 %v1624
        %1688 = vmatpush1.bf16.msra.mxu0 %v1623
        %1689 = vmatprep.subr.bf16.mxu0 %v1626
        %1690 = vmatpush1.bf16.msra.mxu0 %v1625
        %1691 = vmatprep.subr.bf16.mxu0 %v1628
        %1692 = vmatpush1.bf16.msra.mxu0 %v1627
        %1693 = vmatprep.subr.bf16.mxu0 %v1630
        %1694 = vmatpush1.bf16.msra.mxu0 %v1629
        %1695 = vmatprep.subr.bf16.mxu0 %v1632
        %1696 = vmatpush1.bf16.msra.mxu0 %v1631
        %1697 = vmatprep.subr.bf16.mxu0 %v1634
        %1698 = vmatpush1.bf16.msra.mxu0 %v1633
        %1699 = vmatprep.subr.bf16.mxu0 %v1636
        %1700 = vmatpush1.bf16.msra.mxu0 %v1635
        %1701 = vmatprep.subr.bf16.mxu0 %v1638
        %1702 = vmatpush1.bf16.msra.mxu0 %v1637
        %1703 = vmatprep.subr.bf16.mxu0 %v1640
        %1704 = vmatpush1.bf16.msra.mxu0 %v1639
        %1705 = vmatprep.subr.bf16.mxu0 %v1642
        %1706 = vmatpush1.bf16.msra.mxu0 %v1641
        %1707 = vmatprep.subr.bf16.mxu0 %v1644
        %1708 = vmatpush1.bf16.msra.mxu0 %v1643
        %1709 = vmatprep.subr.bf16.mxu0 %v1646
        %1710 = vmatpush1.bf16.msra.mxu0 %v1645
        %1711 = vmatprep.subr.bf16.mxu0 %v1648
        %1712 = vmatpush1.bf16.msra.mxu0 %v1647
        %1713 = vmatprep.subr.bf16.mxu0 %v1650
        %1714 = vmatpush1.bf16.msra.mxu0 %v1649
        %1715 = vmatprep.subr.bf16.mxu0 %v1652
        %1716 = vmatpush1.bf16.msra.mxu0 %v1651
        %1717 = vmatprep.mubr.bf16.mxu0 %v1450
        %1718 = vmatmul.mubr.bf16.gmra.mrb[0].mxu0 %v1449
        %v1719 = vpop.f32.mrb[0].mxu0
        %v1720 = vadd.f32 %v1518, %v1719
        %v1721 = vpop.f32.mrb[0].mxu0
        %v1722 = vadd.f32 %v1522, %v1721
        %v1723 = vpop.f32.mrb[0].mxu0
        %v1724 = vadd.f32 %v1518, %v1723
        %v1725 = vpop.f32.mrb[0].mxu0
        %v1726 = vadd.f32 %v1522, %v1725
        %1727 = vmatprep.mubr.bf16.mxu0 %v1452
        %1728 = vmatmul.mubr.bf16.gmra.mrb[0].mxu0 %v1451
        %v1729 = vpop.f32.mrb[0].mxu0
        %v1730 = vadd.f32 %v1518, %v1729
        %v1731 = vpop.f32.mrb[0].mxu0
        %v1732 = vadd.f32 %v1522, %v1731
        %v1733 = vpop.f32.mrb[0].mxu0
        %v1734 = vadd.f32 %v1518, %v1733
        %v1735 = vpop.f32.mrb[0].mxu0
        %v1736 = vadd.f32 %v1522, %v1735
        %1737 = vmatprep.mubr.bf16.mxu0 %v1454
        %1738 = vmatmul.mubr.bf16.gmra.mrb[0].mxu0 %v1453
        %v1739 = vpop.f32.mrb[0].mxu0
        %v1740 = vadd.f32 %v1518, %v1739
        %v1741 = vpop.f32.mrb[0].mxu0
        %v1742 = vadd.f32 %v1522, %v1741
        %v1743 = vpop.f32.mrb[0].mxu0
        %v1744 = vadd.f32 %v1518, %v1743
        %v1745 = vpop.f32.mrb[0].mxu0
        %v1746 = vadd.f32 %v1522, %v1745
        %1747 = vmatprep.mubr.bf16.mxu0 %v1456
        %1748 = vmatmul.mubr.bf16.gmra.mrb[0].mxu0 %v1455
        %v1749 = vpop.f32.mrb[0].mxu0
        %v1750 = vadd.f32 %v1518, %v1749
        %v1751 = vpop.f32.mrb[0].mxu0
        %v1752 = vadd.f32 %v1522, %v1751
        %v1753 = vpop.f32.mrb[0].mxu0
        %v1754 = vadd.f32 %v1518, %v1753
        %v1755 = vpop.f32.mrb[0].mxu0
        %v1756 = vadd.f32 %v1522, %v1755
        %1757 = vmatprep.mubr.bf16.mxu0 %v1458
        %1758 = vmatmul.mubr.bf16.gmra.mrb[0].mxu0 %v1457
        %v1759 = vpop.f32.mrb[0].mxu0
        %v1760 = vadd.f32 %v1518, %v1759
        %v1761 = vpop.f32.mrb[0].mxu0
        %v1762 = vadd.f32 %v1522, %v1761
        %v1763 = vpop.f32.mrb[0].mxu0
        %v1764 = vadd.f32 %v1518, %v1763
        %v1765 = vpop.f32.mrb[0].mxu0
        %v1766 = vadd.f32 %v1522, %v1765
        %1767 = vmatprep.mubr.bf16.mxu0 %v1460
        %1768 = vmatmul.mubr.bf16.gmra.mrb[0].mxu0 %v1459
        %v1769 = vpop.f32.mrb[0].mxu0
        %v1770 = vadd.f32 %v1518, %v1769
        %v1771 = vpop.f32.mrb[0].mxu0
        %v1772 = vadd.f32 %v1522, %v1771
        %v1773 = vpop.f32.mrb[0].mxu0
        %v1774 = vadd.f32 %v1518, %v1773
        %v1775 = vpop.f32.mrb[0].mxu0
        %v1776 = vadd.f32 %v1522, %v1775
        %1777 = vmatprep.mubr.bf16.mxu0 %v1462
        %1778 = vmatmul.mubr.bf16.gmra.mrb[0].mxu0 %v1461
        %v1779 = vpop.f32.mrb[0].mxu0
        %v1780 = vadd.f32 %v1518, %v1779
        %v1781 = vpop.f32.mrb[0].mxu0
        %v1782 = vadd.f32 %v1522, %v1781
        %v1783 = vpop.f32.mrb[0].mxu0
        %v1784 = vadd.f32 %v1518, %v1783
        %v1785 = vpop.f32.mrb[0].mxu0
        %v1786 = vadd.f32 %v1522, %v1785
        %1787 = vmatprep.mubr.bf16.mxu0 %v1464
        %1788 = vmatmul.mubr.bf16.gmra.mrb[0].mxu0 %v1463
        %v1789 = vpop.f32.mrb[0].mxu0
        %v1790 = vadd.f32 %v1518, %v1789
        %v1791 = vpop.f32.mrb[0].mxu0
        %v1792 = vadd.f32 %v1522, %v1791
        %v1793 = vpop.f32.mrb[0].mxu0
        %v1794 = vadd.f32 %v1518, %v1793
        %v1795 = vpop.f32.mrb[0].mxu0
        %v1796 = vadd.f32 %v1522, %v1795
        %1797 = vmatprep.mubr.bf16.mxu0 %v1466
        %1798 = vmatmul.mubr.bf16.gmra.mrb[0].mxu0 %v1465
        %v1799 = vpop.f32.mrb[0].mxu0
        %v1800 = vadd.f32 %v1518, %v1799
        %v1801 = vpop.f32.mrb[0].mxu0
        %v1802 = vadd.f32 %v1522, %v1801
        %v1803 = vpop.f32.mrb[0].mxu0
        %v1804 = vadd.f32 %v1518, %v1803
        %v1805 = vpop.f32.mrb[0].mxu0
        %v1806 = vadd.f32 %v1522, %v1805
        %1807 = vmatprep.mubr.bf16.mxu0 %v1468
        %1808 = vmatmul.mubr.bf16.gmra.mrb[0].mxu0 %v1467
        %v1809 = vpop.f32.mrb[0].mxu0
        %v1810 = vadd.f32 %v1518, %v1809
        %v1811 = vpop.f32.mrb[0].mxu0
        %v1812 = vadd.f32 %v1522, %v1811
        %v1813 = vpop.f32.mrb[0].mxu0
        %v1814 = vadd.f32 %v1518, %v1813
        %v1815 = vpop.f32.mrb[0].mxu0
        %v1816 = vadd.f32 %v1522, %v1815
        %1817 = vmatprep.mubr.bf16.mxu0 %v1470
        %1818 = vmatmul.mubr.bf16.gmra.mrb[0].mxu0 %v1469
        %v1819 = vpop.f32.mrb[0].mxu0
        %v1820 = vadd.f32 %v1518, %v1819
        %v1821 = vpop.f32.mrb[0].mxu0
        %v1822 = vadd.f32 %v1522, %v1821
        %v1823 = vpop.f32.mrb[0].mxu0
        %v1824 = vadd.f32 %v1518, %v1823
        %v1825 = vpop.f32.mrb[0].mxu0
        %v1826 = vadd.f32 %v1522, %v1825
        %1827 = vmatprep.mubr.bf16.mxu0 %v1472
        %1828 = vmatmul.mubr.bf16.gmra.mrb[0].mxu0 %v1471
        %v1829 = vpop.f32.mrb[0].mxu0
        %v1830 = vadd.f32 %v1518, %v1829
        %v1831 = vpop.f32.mrb[0].mxu0
        %v1832 = vadd.f32 %v1522, %v1831
        %v1833 = vpop.f32.mrb[0].mxu0
        %v1834 = vadd.f32 %v1518, %v1833
        %v1835 = vpop.f32.mrb[0].mxu0
        %v1836 = vadd.f32 %v1522, %v1835
        %1837 = vmatprep.mubr.bf16.mxu0 %v1474
        %1838 = vmatmul.mubr.bf16.gmra.mrb[0].mxu0 %v1473
        %v1839 = vpop.f32.mrb[0].mxu0
        %v1840 = vadd.f32 %v1518, %v1839
        %v1841 = vpop.f32.mrb[0].mxu0
        %v1842 = vadd.f32 %v1522, %v1841
        %v1843 = vpop.f32.mrb[0].mxu0
        %v1844 = vadd.f32 %v1518, %v1843
        %v1845 = vpop.f32.mrb[0].mxu0
        %v1846 = vadd.f32 %v1522, %v1845
        %1847 = vmatprep.mubr.bf16.mxu0 %v1476
        %1848 = vmatmul.mubr.bf16.gmra.mrb[0].mxu0 %v1475
        %v1849 = vpop.f32.mrb[0].mxu0
        %v1850 = vadd.f32 %v1518, %v1849
        %v1851 = vpop.f32.mrb[0].mxu0
        %v1852 = vadd.f32 %v1522, %v1851
        %v1853 = vpop.f32.mrb[0].mxu0
        %v1854 = vadd.f32 %v1518, %v1853
        %v1855 = vpop.f32.mrb[0].mxu0
        %v1856 = vadd.f32 %v1522, %v1855
        %1857 = vmatprep.mubr.bf16.mxu0 %v1478
        %1858 = vmatmul.mubr.bf16.gmra.mrb[0].mxu0 %v1477
        %v1859 = vpop.f32.mrb[0].mxu0
        %v1860 = vadd.f32 %v1518, %v1859
        %v1861 = vpop.f32.mrb[0].mxu0
        %v1862 = vadd.f32 %v1522, %v1861
        %v1863 = vpop.f32.mrb[0].mxu0
        %v1864 = vadd.f32 %v1518, %v1863
        %v1865 = vpop.f32.mrb[0].mxu0
        %v1866 = vadd.f32 %v1522, %v1865
        %1867 = vmatprep.mubr.bf16.mxu0 %v1480
        %1868 = vmatmul.mubr.bf16.gmra.mrb[0].mxu0 %v1479
        %v1869 = vpop.f32.mrb[0].mxu0
        %v1870 = vadd.f32 %v1518, %v1869
        %v1871 = vpop.f32.mrb[0].mxu0
        %v1872 = vadd.f32 %v1522, %v1871
        %v1873 = vpop.f32.mrb[0].mxu0
        %v1874 = vadd.f32 %v1518, %v1873
        %v1875 = vpop.f32.mrb[0].mxu0
        %v1876 = vadd.f32 %v1522, %v1875
        %1877 = vdwg.mxu0
        %v1878 = vmax.f32 %v1720, 0.0
        %v1879 = vmax.f32 %v1722, 0.0
        %v1880 = vmax.f32 %v1724, 0.0
        %v1881 = vmax.f32 %v1726, 0.0
        %v1882 = vmax.f32 %v1730, 0.0
        %v1883 = vmax.f32 %v1732, 0.0
        %v1884 = vmax.f32 %v1734, 0.0
        %v1885 = vmax.f32 %v1736, 0.0
        %v1886 = vmax.f32 %v1740, 0.0
        %v1887 = vmax.f32 %v1742, 0.0
        %v1888 = vmax.f32 %v1744, 0.0
        %v1889 = vmax.f32 %v1746, 0.0
        %v1890 = vmax.f32 %v1750, 0.0
        %v1891 = vmax.f32 %v1752, 0.0
        %v1892 = vmax.f32 %v1754, 0.0
        %v1893 = vmax.f32 %v1756, 0.0
        %v1894 = vmax.f32 %v1760, 0.0
        %v1895 = vmax.f32 %v1762, 0.0
        %v1896 = vmax.f32 %v1764, 0.0
        %v1897 = vmax.f32 %v1766, 0.0
        %v1898 = vmax.f32 %v1770, 0.0
        %v1899 = vmax.f32 %v1772, 0.0
        %v1900 = vmax.f32 %v1774, 0.0
        %v1901 = vmax.f32 %v1776, 0.0
        %v1902 = vmax.f32 %v1780, 0.0
        %v1903 = vmax.f32 %v1782, 0.0
        %v1904 = vmax.f32 %v1784, 0.0
        %v1905 = vmax.f32 %v1786, 0.0
        %v1906 = vmax.f32 %v1790, 0.0
        %v1907 = vmax.f32 %v1792, 0.0
        %v1908 = vmax.f32 %v1794, 0.0
        %v1909 = vmax.f32 %v1796, 0.0
        %v1910 = vmax.f32 %v1800, 0.0
        %v1911 = vmax.f32 %v1802, 0.0
        %v1912 = vmax.f32 %v1804, 0.0
        %v1913 = vmax.f32 %v1806, 0.0
        %v1914 = vmax.f32 %v1810, 0.0
        %v1915 = vmax.f32 %v1812, 0.0
        %v1916 = vmax.f32 %v1814, 0.0
        %v1917 = vmax.f32 %v1816, 0.0
        %v1918 = vmax.f32 %v1820, 0.0
        %v1919 = vmax.f32 %v1822, 0.0
        %v1920 = vmax.f32 %v1824, 0.0
        %v1921 = vmax.f32 %v1826, 0.0
        %v1922 = vmax.f32 %v1830, 0.0
        %v1923 = vmax.f32 %v1832, 0.0
        %v1924 = vmax.f32 %v1834, 0.0
        %v1925 = vmax.f32 %v1836, 0.0
        %v1926 = vmax.f32 %v1840, 0.0
        %v1927 = vmax.f32 %v1842, 0.0
        %v1928 = vmax.f32 %v1844, 0.0
        %v1929 = vmax.f32 %v1846, 0.0
        %v1930 = vmax.f32 %v1850, 0.0
        %v1931 = vmax.f32 %v1852, 0.0
        %v1932 = vmax.f32 %v1854, 0.0
        %v1933 = vmax.f32 %v1856, 0.0
        %v1934 = vmax.f32 %v1860, 0.0
        %v1935 = vmax.f32 %v1862, 0.0
        %v1936 = vmax.f32 %v1864, 0.0
        %v1937 = vmax.f32 %v1866, 0.0
        %v1938 = vmax.f32 %v1870, 0.0
        %v1939 = vmax.f32 %v1872, 0.0
        %v1940 = vmax.f32 %v1874, 0.0
        %v1941 = vmax.f32 %v1876, 0.0
        %v1942 = vpack.c.bf16 %v1880, %v1878
        %v1943 = vpack.c.bf16 %v1881, %v1879
        %v1944 = vpack.c.bf16 %v1884, %v1882
        %v1945 = vpack.c.bf16 %v1885, %v1883
        %v1946 = vpack.c.bf16 %v1888, %v1886
        %v1947 = vpack.c.bf16 %v1889, %v1887
        %v1948 = vpack.c.bf16 %v1892, %v1890
        %v1949 = vpack.c.bf16 %v1893, %v1891
        %v1950 = vpack.c.bf16 %v1896, %v1894
        %v1951 = vpack.c.bf16 %v1897, %v1895
        %v1952 = vpack.c.bf16 %v1900, %v1898
        %v1953 = vpack.c.bf16 %v1901, %v1899
        %v1954 = vpack.c.bf16 %v1904, %v1902
        %v1955 = vpack.c.bf16 %v1905, %v1903
        %v1956 = vpack.c.bf16 %v1908, %v1906
        %v1957 = vpack.c.bf16 %v1909, %v1907
        %v1958 = vpack.c.bf16 %v1912, %v1910
        %v1959 = vpack.c.bf16 %v1913, %v1911
        %v1960 = vpack.c.bf16 %v1916, %v1914
        %v1961 = vpack.c.bf16 %v1917, %v1915
        %v1962 = vpack.c.bf16 %v1920, %v1918
        %v1963 = vpack.c.bf16 %v1921, %v1919
        %v1964 = vpack.c.bf16 %v1924, %v1922
        %v1965 = vpack.c.bf16 %v1925, %v1923
        %v1966 = vpack.c.bf16 %v1928, %v1926
        %v1967 = vpack.c.bf16 %v1929, %v1927
        %v1968 = vpack.c.bf16 %v1932, %v1930
        %v1969 = vpack.c.bf16 %v1933, %v1931
        %v1970 = vpack.c.bf16 %v1936, %v1934
        %v1971 = vpack.c.bf16 %v1937, %v1935
        %v1972 = vpack.c.bf16 %v1940, %v1938
        %v1973 = vpack.c.bf16 %v1941, %v1939
        %v1974 = vld [vmem:[#allocation7] sm:$0xff]
        %v1975 = vld [vmem:[#allocation7 + $0x8] sm:$0xff]
        %v1976 = vld [vmem:[#allocation7 + $0x10] sm:$0xff]
        %v1977 = vld [vmem:[#allocation7 + $0x18] sm:$0xff]
        %v1978 = vld [vmem:[#allocation7 + $0x20] sm:$0xff]
        %v1979 = vld [vmem:[#allocation7 + $0x28] sm:$0xff]
        %v1980 = vld [vmem:[#allocation7 + $0x30] sm:$0xff]
        %v1981 = vld [vmem:[#allocation7 + $0x38] sm:$0xff]
        %v1982 = vld [vmem:[#allocation7 + $0x40] sm:$0xff]
        %v1983 = vld [vmem:[#allocation7 + $0x48] sm:$0xff]
        %v1984 = vld [vmem:[#allocation7 + $0x50] sm:$0xff]
        %v1985 = vld [vmem:[#allocation7 + $0x58] sm:$0xff]
        %v1986 = vld [vmem:[#allocation7 + $0x60] sm:$0xff]
        %v1987 = vld [vmem:[#allocation7 + $0x68] sm:$0xff]
        %v1988 = vld [vmem:[#allocation7 + $0x70] sm:$0xff]
        %v1989 = vld [vmem:[#allocation7 + $0x78] sm:$0xff]
        %v1990 = vld [vmem:[#allocation7 + $0x80] sm:$0xff]
        %v1991 = vld [vmem:[#allocation7 + $0x88] sm:$0xff]
        %v1992 = vld [vmem:[#allocation7 + $0x90] sm:$0xff]
        %v1993 = vld [vmem:[#allocation7 + $0x98] sm:$0xff]
        %v1994 = vld [vmem:[#allocation7 + $0xa0] sm:$0xff]
        %v1995 = vld [vmem:[#allocation7 + $0xa8] sm:$0xff]
        %v1996 = vld [vmem:[#allocation7 + $0xb0] sm:$0xff]
        %v1997 = vld [vmem:[#allocation7 + $0xb8] sm:$0xff]
        %v1998 = vld [vmem:[#allocation7 + $0xc0] sm:$0xff]
        %v1999 = vld [vmem:[#allocation7 + $0xc8] sm:$0xff]
        %v2000 = vld [vmem:[#allocation7 + $0xd0] sm:$0xff]
        %v2001 = vld [vmem:[#allocation7 + $0xd8] sm:$0xff]
        %v2002 = vld [vmem:[#allocation7 + $0xe0] sm:$0xff]
        %v2003 = vld [vmem:[#allocation7 + $0xe8] sm:$0xff]
        %v2004 = vld [vmem:[#allocation7 + $0xf0] sm:$0xff]
        %v2005 = vld [vmem:[#allocation7 + $0xf8] sm:$0xff]
        %v2006 = vld [vmem:[%s6] sm:$0x3]
        %v2008 = vlaneseq
        %v2009 = vshrl.u32 %v2008, 7
        %v2010 = vsub.s32 0, %v2009
        %v2011 = vrot.slane %v2006, %v2010
        %v2012 = vlaneseq
        %v2013 = vshrl.u32 %v2012, 7
        %v2014 = vsub.s32 1, %v2013
        %v2015 = vrot.slane %v2006, %v2014
        %v2050 = vunpack.c.l.b16 %v1974
        %v2051 = vunpack.c.h.b16 %v1974
        %v2052 = vunpack.c.l.b16 %v1975
        %v2053 = vunpack.c.h.b16 %v1975
        %v2054 = vunpack.c.l.b16 %v1976
        %v2055 = vunpack.c.h.b16 %v1976
        %v2056 = vunpack.c.l.b16 %v1977
        %v2057 = vunpack.c.h.b16 %v1977
        %v2058 = vunpack.c.l.b16 %v1978
        %v2059 = vunpack.c.h.b16 %v1978
        %v2060 = vunpack.c.l.b16 %v1979
        %v2061 = vunpack.c.h.b16 %v1979
        %v2062 = vunpack.c.l.b16 %v1980
        %v2063 = vunpack.c.h.b16 %v1980
        %v2064 = vunpack.c.l.b16 %v1981
        %v2065 = vunpack.c.h.b16 %v1981
        %v2066 = vunpack.c.l.b16 %v1982
        %v2067 = vunpack.c.h.b16 %v1982
        %v2068 = vunpack.c.l.b16 %v1983
        %v2069 = vunpack.c.h.b16 %v1983
        %v2070 = vunpack.c.l.b16 %v1984
        %v2071 = vunpack.c.h.b16 %v1984
        %v2072 = vunpack.c.l.b16 %v1985
        %v2073 = vunpack.c.h.b16 %v1985
        %v2074 = vunpack.c.l.b16 %v1986
        %v2075 = vunpack.c.h.b16 %v1986
        %v2076 = vunpack.c.l.b16 %v1987
        %v2077 = vunpack.c.h.b16 %v1987
        %v2078 = vunpack.c.l.b16 %v1988
        %v2079 = vunpack.c.h.b16 %v1988
        %v2080 = vunpack.c.l.b16 %v1989
        %v2081 = vunpack.c.h.b16 %v1989
        %v2082 = vunpack.c.l.b16 %v1990
        %v2083 = vunpack.c.h.b16 %v1990
        %v2084 = vunpack.c.l.b16 %v1991
        %v2085 = vunpack.c.h.b16 %v1991
        %v2086 = vunpack.c.l.b16 %v1992
        %v2087 = vunpack.c.h.b16 %v1992
        %v2088 = vunpack.c.l.b16 %v1993
        %v2089 = vunpack.c.h.b16 %v1993
        %v2090 = vunpack.c.l.b16 %v1994
        %v2091 = vunpack.c.h.b16 %v1994
        %v2092 = vunpack.c.l.b16 %v1995
        %v2093 = vunpack.c.h.b16 %v1995
        %v2094 = vunpack.c.l.b16 %v1996
        %v2095 = vunpack.c.h.b16 %v1996
        %v2096 = vunpack.c.l.b16 %v1997
        %v2097 = vunpack.c.h.b16 %v1997
        %v2098 = vunpack.c.l.b16 %v1998
        %v2099 = vunpack.c.h.b16 %v1998
        %v2100 = vunpack.c.l.b16 %v1999
        %v2101 = vunpack.c.h.b16 %v1999
        %v2102 = vunpack.c.l.b16 %v2000
        %v2103 = vunpack.c.h.b16 %v2000
        %v2104 = vunpack.c.l.b16 %v2001
        %v2105 = vunpack.c.h.b16 %v2001
        %v2106 = vunpack.c.l.b16 %v2002
        %v2107 = vunpack.c.h.b16 %v2002
        %v2108 = vunpack.c.l.b16 %v2003
        %v2109 = vunpack.c.h.b16 %v2003
        %v2110 = vunpack.c.l.b16 %v2004
        %v2111 = vunpack.c.h.b16 %v2004
        %v2112 = vunpack.c.l.b16 %v2005
        %v2113 = vunpack.c.h.b16 %v2005
        %v2114 = vpack.c.b16 %v2052, %v2050
        %v2115 = vpack.c.b16 %v2053, %v2051
        %v2116 = vpack.c.b16 %v2056, %v2054
        %v2117 = vpack.c.b16 %v2057, %v2055
        %v2118 = vpack.c.b16 %v2060, %v2058
        %v2119 = vpack.c.b16 %v2061, %v2059
        %v2120 = vpack.c.b16 %v2064, %v2062
        %v2121 = vpack.c.b16 %v2065, %v2063
        %v2122 = vpack.c.b16 %v2068, %v2066
        %v2123 = vpack.c.b16 %v2069, %v2067
        %v2124 = vpack.c.b16 %v2072, %v2070
        %v2125 = vpack.c.b16 %v2073, %v2071
        %v2126 = vpack.c.b16 %v2076, %v2074
        %v2127 = vpack.c.b16 %v2077, %v2075
        %v2128 = vpack.c.b16 %v2080, %v2078
        %v2129 = vpack.c.b16 %v2081, %v2079
        %v2130 = vpack.c.b16 %v2084, %v2082
        %v2131 = vpack.c.b16 %v2085, %v2083
        %v2132 = vpack.c.b16 %v2088, %v2086
        %v2133 = vpack.c.b16 %v2089, %v2087
        %v2134 = vpack.c.b16 %v2092, %v2090
        %v2135 = vpack.c.b16 %v2093, %v2091
        %v2136 = vpack.c.b16 %v2096, %v2094
        %v2137 = vpack.c.b16 %v2097, %v2095
        %v2138 = vpack.c.b16 %v2100, %v2098
        %v2139 = vpack.c.b16 %v2101, %v2099
        %v2140 = vpack.c.b16 %v2104, %v2102
        %v2141 = vpack.c.b16 %v2105, %v2103
        %v2142 = vpack.c.b16 %v2108, %v2106
        %v2143 = vpack.c.b16 %v2109, %v2107
        %v2144 = vpack.c.b16 %v2112, %v2110
        %v2145 = vpack.c.b16 %v2113, %v2111
        %2178 = vmatprep.subr.bf16.mxu0 %v2115
        %2179 = vmatpush1.bf16.msra.mxu0 %v2114
        %2180 = vmatprep.subr.bf16.mxu0 %v2117
        %2181 = vmatpush1.bf16.msra.mxu0 %v2116
        %2182 = vmatprep.subr.bf16.mxu0 %v2119
        %2183 = vmatpush1.bf16.msra.mxu0 %v2118
        %2184 = vmatprep.subr.bf16.mxu0 %v2121
        %2185 = vmatpush1.bf16.msra.mxu0 %v2120
        %2186 = vmatprep.subr.bf16.mxu0 %v2123
        %2187 = vmatpush1.bf16.msra.mxu0 %v2122
        %2188 = vmatprep.subr.bf16.mxu0 %v2125
        %2189 = vmatpush1.bf16.msra.mxu0 %v2124
        %2190 = vmatprep.subr.bf16.mxu0 %v2127
        %2191 = vmatpush1.bf16.msra.mxu0 %v2126
        %2192 = vmatprep.subr.bf16.mxu0 %v2129
        %2193 = vmatpush1.bf16.msra.mxu0 %v2128
        %2194 = vmatprep.subr.bf16.mxu0 %v2131
        %2195 = vmatpush1.bf16.msra.mxu0 %v2130
        %2196 = vmatprep.subr.bf16.mxu0 %v2133
        %2197 = vmatpush1.bf16.msra.mxu0 %v2132
        %2198 = vmatprep.subr.bf16.mxu0 %v2135
        %2199 = vmatpush1.bf16.msra.mxu0 %v2134
        %2200 = vmatprep.subr.bf16.mxu0 %v2137
        %2201 = vmatpush1.bf16.msra.mxu0 %v2136
        %2202 = vmatprep.subr.bf16.mxu0 %v2139
        %2203 = vmatpush1.bf16.msra.mxu0 %v2138
        %2204 = vmatprep.subr.bf16.mxu0 %v2141
        %2205 = vmatpush1.bf16.msra.mxu0 %v2140
        %2206 = vmatprep.subr.bf16.mxu0 %v2143
        %2207 = vmatpush1.bf16.msra.mxu0 %v2142
        %2208 = vmatprep.subr.bf16.mxu0 %v2145
        %2209 = vmatpush1.bf16.msra.mxu0 %v2144
        %2210 = vmatprep.mubr.bf16.mxu0 %v1943
        %2211 = vmatmul.mubr.bf16.gmra.mrb[0].mxu0 %v1942
        %v2212 = vpop.f32.mrb[0].mxu0
        %v2213 = vadd.f32 %v2011, %v2212
        %v2214 = vpop.f32.mrb[0].mxu0
        %v2215 = vadd.f32 %v2015, %v2214
        %v2216 = vpop.f32.mrb[0].mxu0
        %v2217 = vadd.f32 %v2011, %v2216
        %v2218 = vpop.f32.mrb[0].mxu0
        %v2219 = vadd.f32 %v2015, %v2218
        %2220 = vmatprep.mubr.bf16.mxu0 %v1945
        %2221 = vmatmul.mubr.bf16.gmra.mrb[0].mxu0 %v1944
        %v2222 = vpop.f32.mrb[0].mxu0
        %v2223 = vadd.f32 %v2011, %v2222
        %v2224 = vpop.f32.mrb[0].mxu0
        %v2225 = vadd.f32 %v2015, %v2224
        %v2226 = vpop.f32.mrb[0].mxu0
        %v2227 = vadd.f32 %v2011, %v2226
        %v2228 = vpop.f32.mrb[0].mxu0
        %v2229 = vadd.f32 %v2015, %v2228
        %2230 = vmatprep.mubr.bf16.mxu0 %v1947
        %2231 = vmatmul.mubr.bf16.gmra.mrb[0].mxu0 %v1946
        %v2232 = vpop.f32.mrb[0].mxu0
        %v2233 = vadd.f32 %v2011, %v2232
        %v2234 = vpop.f32.mrb[0].mxu0
        %v2235 = vadd.f32 %v2015, %v2234
        %v2236 = vpop.f32.mrb[0].mxu0
        %v2237 = vadd.f32 %v2011, %v2236
        %v2238 = vpop.f32.mrb[0].mxu0
        %v2239 = vadd.f32 %v2015, %v2238
        %2240 = vmatprep.mubr.bf16.mxu0 %v1949
        %2241 = vmatmul.mubr.bf16.gmra.mrb[0].mxu0 %v1948
        %v2242 = vpop.f32.mrb[0].mxu0
        %v2243 = vadd.f32 %v2011, %v2242
        %v2244 = vpop.f32.mrb[0].mxu0
        %v2245 = vadd.f32 %v2015, %v2244
        %v2246 = vpop.f32.mrb[0].mxu0
        %v2247 = vadd.f32 %v2011, %v2246
        %v2248 = vpop.f32.mrb[0].mxu0
        %v2249 = vadd.f32 %v2015, %v2248
        %2250 = vmatprep.mubr.bf16.mxu0 %v1951
        %2251 = vmatmul.mubr.bf16.gmra.mrb[0].mxu0 %v1950
        %v2252 = vpop.f32.mrb[0].mxu0
        %v2253 = vadd.f32 %v2011, %v2252
        %v2254 = vpop.f32.mrb[0].mxu0
        %v2255 = vadd.f32 %v2015, %v2254
        %v2256 = vpop.f32.mrb[0].mxu0
        %v2257 = vadd.f32 %v2011, %v2256
        %v2258 = vpop.f32.mrb[0].mxu0
        %v2259 = vadd.f32 %v2015, %v2258
        %2260 = vmatprep.mubr.bf16.mxu0 %v1953
        %2261 = vmatmul.mubr.bf16.gmra.mrb[0].mxu0 %v1952
        %v2262 = vpop.f32.mrb[0].mxu0
        %v2263 = vadd.f32 %v2011, %v2262
        %v2264 = vpop.f32.mrb[0].mxu0
        %v2265 = vadd.f32 %v2015, %v2264
        %v2266 = vpop.f32.mrb[0].mxu0
        %v2267 = vadd.f32 %v2011, %v2266
        %v2268 = vpop.f32.mrb[0].mxu0
        %v2269 = vadd.f32 %v2015, %v2268
        %2270 = vmatprep.mubr.bf16.mxu0 %v1955
        %2271 = vmatmul.mubr.bf16.gmra.mrb[0].mxu0 %v1954
        %v2272 = vpop.f32.mrb[0].mxu0
        %v2273 = vadd.f32 %v2011, %v2272
        %v2274 = vpop.f32.mrb[0].mxu0
        %v2275 = vadd.f32 %v2015, %v2274
        %v2276 = vpop.f32.mrb[0].mxu0
        %v2277 = vadd.f32 %v2011, %v2276
        %v2278 = vpop.f32.mrb[0].mxu0
        %v2279 = vadd.f32 %v2015, %v2278
        %2280 = vmatprep.mubr.bf16.mxu0 %v1957
        %2281 = vmatmul.mubr.bf16.gmra.mrb[0].mxu0 %v1956
        %v2282 = vpop.f32.mrb[0].mxu0
        %v2283 = vadd.f32 %v2011, %v2282
        %v2284 = vpop.f32.mrb[0].mxu0
        %v2285 = vadd.f32 %v2015, %v2284
        %v2286 = vpop.f32.mrb[0].mxu0
        %v2287 = vadd.f32 %v2011, %v2286
        %v2288 = vpop.f32.mrb[0].mxu0
        %v2289 = vadd.f32 %v2015, %v2288
        %2290 = vmatprep.mubr.bf16.mxu0 %v1959
        %2291 = vmatmul.mubr.bf16.gmra.mrb[0].mxu0 %v1958
        %v2292 = vpop.f32.mrb[0].mxu0
        %v2293 = vadd.f32 %v2011, %v2292
        %v2294 = vpop.f32.mrb[0].mxu0
        %v2295 = vadd.f32 %v2015, %v2294
        %v2296 = vpop.f32.mrb[0].mxu0
        %v2297 = vadd.f32 %v2011, %v2296
        %v2298 = vpop.f32.mrb[0].mxu0
        %v2299 = vadd.f32 %v2015, %v2298
        %2300 = vmatprep.mubr.bf16.mxu0 %v1961
        %2301 = vmatmul.mubr.bf16.gmra.mrb[0].mxu0 %v1960
        %v2302 = vpop.f32.mrb[0].mxu0
        %v2303 = vadd.f32 %v2011, %v2302
        %v2304 = vpop.f32.mrb[0].mxu0
        %v2305 = vadd.f32 %v2015, %v2304
        %v2306 = vpop.f32.mrb[0].mxu0
        %v2307 = vadd.f32 %v2011, %v2306
        %v2308 = vpop.f32.mrb[0].mxu0
        %v2309 = vadd.f32 %v2015, %v2308
        %2310 = vmatprep.mubr.bf16.mxu0 %v1963
        %2311 = vmatmul.mubr.bf16.gmra.mrb[0].mxu0 %v1962
        %v2312 = vpop.f32.mrb[0].mxu0
        %v2313 = vadd.f32 %v2011, %v2312
        %v2314 = vpop.f32.mrb[0].mxu0
        %v2315 = vadd.f32 %v2015, %v2314
        %v2316 = vpop.f32.mrb[0].mxu0
        %v2317 = vadd.f32 %v2011, %v2316
        %v2318 = vpop.f32.mrb[0].mxu0
        %v2319 = vadd.f32 %v2015, %v2318
        %2320 = vmatprep.mubr.bf16.mxu0 %v1965
        %2321 = vmatmul.mubr.bf16.gmra.mrb[0].mxu0 %v1964
        %v2322 = vpop.f32.mrb[0].mxu0
        %v2323 = vadd.f32 %v2011, %v2322
        %v2324 = vpop.f32.mrb[0].mxu0
        %v2325 = vadd.f32 %v2015, %v2324
        %v2326 = vpop.f32.mrb[0].mxu0
        %v2327 = vadd.f32 %v2011, %v2326
        %v2328 = vpop.f32.mrb[0].mxu0
        %v2329 = vadd.f32 %v2015, %v2328
        %2330 = vmatprep.mubr.bf16.mxu0 %v1967
        %2331 = vmatmul.mubr.bf16.gmra.mrb[0].mxu0 %v1966
        %v2332 = vpop.f32.mrb[0].mxu0
        %v2333 = vadd.f32 %v2011, %v2332
        %v2334 = vpop.f32.mrb[0].mxu0
        %v2335 = vadd.f32 %v2015, %v2334
        %v2336 = vpop.f32.mrb[0].mxu0
        %v2337 = vadd.f32 %v2011, %v2336
        %v2338 = vpop.f32.mrb[0].mxu0
        %v2339 = vadd.f32 %v2015, %v2338
        %2340 = vmatprep.mubr.bf16.mxu0 %v1969
        %2341 = vmatmul.mubr.bf16.gmra.mrb[0].mxu0 %v1968
        %v2342 = vpop.f32.mrb[0].mxu0
        %v2343 = vadd.f32 %v2011, %v2342
        %v2344 = vpop.f32.mrb[0].mxu0
        %v2345 = vadd.f32 %v2015, %v2344
        %v2346 = vpop.f32.mrb[0].mxu0
        %v2347 = vadd.f32 %v2011, %v2346
        %v2348 = vpop.f32.mrb[0].mxu0
        %v2349 = vadd.f32 %v2015, %v2348
        %2350 = vmatprep.mubr.bf16.mxu0 %v1971
        %2351 = vmatmul.mubr.bf16.gmra.mrb[0].mxu0 %v1970
        %v2352 = vpop.f32.mrb[0].mxu0
        %v2353 = vadd.f32 %v2011, %v2352
        %v2354 = vpop.f32.mrb[0].mxu0
        %v2355 = vadd.f32 %v2015, %v2354
        %v2356 = vpop.f32.mrb[0].mxu0
        %v2357 = vadd.f32 %v2011, %v2356
        %v2358 = vpop.f32.mrb[0].mxu0
        %v2359 = vadd.f32 %v2015, %v2358
        %2360 = vmatprep.mubr.bf16.mxu0 %v1973
        %2361 = vmatmul.mubr.bf16.gmra.mrb[0].mxu0 %v1972
        %v2362 = vpop.f32.mrb[0].mxu0
        %v2363 = vadd.f32 %v2011, %v2362
        %v2364 = vpop.f32.mrb[0].mxu0
        %v2365 = vadd.f32 %v2015, %v2364
        %v2366 = vpop.f32.mrb[0].mxu0
        %v2367 = vadd.f32 %v2011, %v2366
        %v2368 = vpop.f32.mrb[0].mxu0
        %v2369 = vadd.f32 %v2015, %v2368
        %2370 = vdwg.mxu0
        %v2371 = vmax.f32 %v2213, 0.0
        %v2372 = vmax.f32 %v2215, 0.0
        %v2373 = vmax.f32 %v2217, 0.0
        %v2374 = vmax.f32 %v2219, 0.0
        %v2375 = vmax.f32 %v2223, 0.0
        %v2376 = vmax.f32 %v2225, 0.0
        %v2377 = vmax.f32 %v2227, 0.0
        %v2378 = vmax.f32 %v2229, 0.0
        %v2379 = vmax.f32 %v2233, 0.0
        %v2380 = vmax.f32 %v2235, 0.0
        %v2381 = vmax.f32 %v2237, 0.0
        %v2382 = vmax.f32 %v2239, 0.0
        %v2383 = vmax.f32 %v2243, 0.0
        %v2384 = vmax.f32 %v2245, 0.0
        %v2385 = vmax.f32 %v2247, 0.0
        %v2386 = vmax.f32 %v2249, 0.0
        %v2387 = vmax.f32 %v2253, 0.0
        %v2388 = vmax.f32 %v2255, 0.0
        %v2389 = vmax.f32 %v2257, 0.0
        %v2390 = vmax.f32 %v2259, 0.0
        %v2391 = vmax.f32 %v2263, 0.0
        %v2392 = vmax.f32 %v2265, 0.0
        %v2393 = vmax.f32 %v2267, 0.0
        %v2394 = vmax.f32 %v2269, 0.0
        %v2395 = vmax.f32 %v2273, 0.0
        %v2396 = vmax.f32 %v2275, 0.0
        %v2397 = vmax.f32 %v2277, 0.0
        %v2398 = vmax.f32 %v2279, 0.0
        %v2399 = vmax.f32 %v2283, 0.0
        %v2400 = vmax.f32 %v2285, 0.0
        %v2401 = vmax.f32 %v2287, 0.0
        %v2402 = vmax.f32 %v2289, 0.0
        %v2403 = vmax.f32 %v2293, 0.0
        %v2404 = vmax.f32 %v2295, 0.0
        %v2405 = vmax.f32 %v2297, 0.0
        %v2406 = vmax.f32 %v2299, 0.0
        %v2407 = vmax.f32 %v2303, 0.0
        %v2408 = vmax.f32 %v2305, 0.0
        %v2409 = vmax.f32 %v2307, 0.0
        %v2410 = vmax.f32 %v2309, 0.0
        %v2411 = vmax.f32 %v2313, 0.0
        %v2412 = vmax.f32 %v2315, 0.0
        %v2413 = vmax.f32 %v2317, 0.0
        %v2414 = vmax.f32 %v2319, 0.0
        %v2415 = vmax.f32 %v2323, 0.0
        %v2416 = vmax.f32 %v2325, 0.0
        %v2417 = vmax.f32 %v2327, 0.0
        %v2418 = vmax.f32 %v2329, 0.0
        %v2419 = vmax.f32 %v2333, 0.0
        %v2420 = vmax.f32 %v2335, 0.0
        %v2421 = vmax.f32 %v2337, 0.0
        %v2422 = vmax.f32 %v2339, 0.0
        %v2423 = vmax.f32 %v2343, 0.0
        %v2424 = vmax.f32 %v2345, 0.0
        %v2425 = vmax.f32 %v2347, 0.0
        %v2426 = vmax.f32 %v2349, 0.0
        %v2427 = vmax.f32 %v2353, 0.0
        %v2428 = vmax.f32 %v2355, 0.0
        %v2429 = vmax.f32 %v2357, 0.0
        %v2430 = vmax.f32 %v2359, 0.0
        %v2431 = vmax.f32 %v2363, 0.0
        %v2432 = vmax.f32 %v2365, 0.0
        %v2433 = vmax.f32 %v2367, 0.0
        %v2434 = vmax.f32 %v2369, 0.0
        %v2435 = vpack.c.bf16 %v2373, %v2371
        %v2436 = vpack.c.bf16 %v2374, %v2372
        %v2437 = vpack.c.bf16 %v2377, %v2375
        %v2438 = vpack.c.bf16 %v2378, %v2376
        %v2439 = vpack.c.bf16 %v2381, %v2379
        %v2440 = vpack.c.bf16 %v2382, %v2380
        %v2441 = vpack.c.bf16 %v2385, %v2383
        %v2442 = vpack.c.bf16 %v2386, %v2384
        %v2443 = vpack.c.bf16 %v2389, %v2387
        %v2444 = vpack.c.bf16 %v2390, %v2388
        %v2445 = vpack.c.bf16 %v2393, %v2391
        %v2446 = vpack.c.bf16 %v2394, %v2392
        %v2447 = vpack.c.bf16 %v2397, %v2395
        %v2448 = vpack.c.bf16 %v2398, %v2396
        %v2449 = vpack.c.bf16 %v2401, %v2399
        %v2450 = vpack.c.bf16 %v2402, %v2400
        %v2451 = vpack.c.bf16 %v2405, %v2403
        %v2452 = vpack.c.bf16 %v2406, %v2404
        %v2453 = vpack.c.bf16 %v2409, %v2407
        %v2454 = vpack.c.bf16 %v2410, %v2408
        %v2455 = vpack.c.bf16 %v2413, %v2411
        %v2456 = vpack.c.bf16 %v2414, %v2412
        %v2457 = vpack.c.bf16 %v2417, %v2415
        %v2458 = vpack.c.bf16 %v2418, %v2416
        %v2459 = vpack.c.bf16 %v2421, %v2419
        %v2460 = vpack.c.bf16 %v2422, %v2420
        %v2461 = vpack.c.bf16 %v2425, %v2423
        %v2462 = vpack.c.bf16 %v2426, %v2424
        %v2463 = vpack.c.bf16 %v2429, %v2427
        %v2464 = vpack.c.bf16 %v2430, %v2428
        %v2465 = vpack.c.bf16 %v2433, %v2431
        %v2466 = vpack.c.bf16 %v2434, %v2432
        %v2467 = vld [vmem:[%s7] sm:$0xf]
        %v2468 = vld [vmem:[%s7 + $0x4] sm:$0xf]
        %v2469 = vld [vmem:[%s7 + $0x8] sm:$0xf]
        %v2470 = vld [vmem:[%s7 + $0xc] sm:$0xf]
        %v2471 = vld [vmem:[%s7 + $0x10] sm:$0xf]
        %v2472 = vld [vmem:[%s7 + $0x14] sm:$0xf]
        %v2473 = vld [vmem:[%s7 + $0x18] sm:$0xf]
        %v2474 = vld [vmem:[%s7 + $0x1c] sm:$0xf]
        %v2475 = vld [vmem:[%s7 + $0x20] sm:$0xf]
        %v2476 = vld [vmem:[%s7 + $0x24] sm:$0xf]
        %v2477 = vld [vmem:[%s7 + $0x28] sm:$0xf]
        %v2478 = vld [vmem:[%s7 + $0x2c] sm:$0xf]
        %v2479 = vld [vmem:[%s7 + $0x30] sm:$0xf]
        %v2480 = vld [vmem:[%s7 + $0x34] sm:$0xf]
        %v2481 = vld [vmem:[%s7 + $0x38] sm:$0xf]
        %v2482 = vld [vmem:[%s7 + $0x3c] sm:$0xf]
        %v2483 = vld [vmem:[%s7 + $0x40] sm:$0xf]
        %v2484 = vld [vmem:[%s7 + $0x44] sm:$0xf]
        %v2485 = vld [vmem:[%s7 + $0x48] sm:$0xf]
        %v2486 = vld [vmem:[%s7 + $0x4c] sm:$0xf]
        %v2487 = vld [vmem:[%s7 + $0x50] sm:$0xf]
        %v2488 = vld [vmem:[%s7 + $0x54] sm:$0xf]
        %v2489 = vld [vmem:[%s7 + $0x58] sm:$0xf]
        %v2490 = vld [vmem:[%s7 + $0x5c] sm:$0xf]
        %v2491 = vld [vmem:[%s7 + $0x60] sm:$0xf]
        %v2492 = vld [vmem:[%s7 + $0x64] sm:$0xf]
        %v2493 = vld [vmem:[%s7 + $0x68] sm:$0xf]
        %v2494 = vld [vmem:[%s7 + $0x6c] sm:$0xf]
        %v2495 = vld [vmem:[%s7 + $0x70] sm:$0xf]
        %v2496 = vld [vmem:[%s7 + $0x74] sm:$0xf]
        %v2497 = vld [vmem:[%s7 + $0x78] sm:$0xf]
        %v2498 = vld [vmem:[%s7 + $0x7c] sm:$0xf]
        %v2499 = vld [vmem:[%s8] sm:$0x1]
        %v2501 = vlaneseq
        %v2502 = vshrl.u32 %v2501, 7
        %v2503 = vsub.s32 0, %v2502
        %v2504 = vrot.slane %v2499, %v2503
        %v2538 = vunpack.c.l.b16 %v2467
        %v2539 = vunpack.c.l.b16 %v2468
        %v2540 = vunpack.c.l.b16 %v2469
        %v2541 = vunpack.c.l.b16 %v2470
        %v2542 = vunpack.c.l.b16 %v2471
        %v2543 = vunpack.c.l.b16 %v2472
        %v2544 = vunpack.c.l.b16 %v2473
        %v2545 = vunpack.c.l.b16 %v2474
        %v2546 = vunpack.c.l.b16 %v2475
        %v2547 = vunpack.c.l.b16 %v2476
        %v2548 = vunpack.c.l.b16 %v2477
        %v2549 = vunpack.c.l.b16 %v2478
        %v2550 = vunpack.c.l.b16 %v2479
        %v2551 = vunpack.c.l.b16 %v2480
        %v2552 = vunpack.c.l.b16 %v2481
        %v2553 = vunpack.c.l.b16 %v2482
        %v2554 = vunpack.c.l.b16 %v2483
        %v2555 = vunpack.c.l.b16 %v2484
        %v2556 = vunpack.c.l.b16 %v2485
        %v2557 = vunpack.c.l.b16 %v2486
        %v2558 = vunpack.c.l.b16 %v2487
        %v2559 = vunpack.c.l.b16 %v2488
        %v2560 = vunpack.c.l.b16 %v2489
        %v2561 = vunpack.c.l.b16 %v2490
        %v2562 = vunpack.c.l.b16 %v2491
        %v2563 = vunpack.c.l.b16 %v2492
        %v2564 = vunpack.c.l.b16 %v2493
        %v2565 = vunpack.c.l.b16 %v2494
        %v2566 = vunpack.c.l.b16 %v2495
        %v2567 = vunpack.c.l.b16 %v2496
        %v2568 = vunpack.c.l.b16 %v2497
        %v2569 = vunpack.c.l.b16 %v2498
        %v2570 = vpack.c.b16 %v2539, %v2538
        %v2571 = vpack.c.b16 %v2541, %v2540
        %v2572 = vpack.c.b16 %v2543, %v2542
        %v2573 = vpack.c.b16 %v2545, %v2544
        %v2574 = vpack.c.b16 %v2547, %v2546
        %v2575 = vpack.c.b16 %v2549, %v2548
        %v2576 = vpack.c.b16 %v2551, %v2550
        %v2577 = vpack.c.b16 %v2553, %v2552
        %v2578 = vpack.c.b16 %v2555, %v2554
        %v2579 = vpack.c.b16 %v2557, %v2556
        %v2580 = vpack.c.b16 %v2559, %v2558
        %v2581 = vpack.c.b16 %v2561, %v2560
        %v2582 = vpack.c.b16 %v2563, %v2562
        %v2583 = vpack.c.b16 %v2565, %v2564
        %v2584 = vpack.c.b16 %v2567, %v2566
        %v2585 = vpack.c.b16 %v2569, %v2568
        %2602 = vmatprep.subr.bf16.mxu0 0
        %2603 = vmatpush1.bf16.msra.mxu0 %v2570
        %2604 = vmatprep.subr.bf16.mxu0 0
        %2605 = vmatpush1.bf16.msra.mxu0 %v2571
        %2606 = vmatprep.subr.bf16.mxu0 0
        %2607 = vmatpush1.bf16.msra.mxu0 %v2572
        %2608 = vmatprep.subr.bf16.mxu0 0
        %2609 = vmatpush1.bf16.msra.mxu0 %v2573
        %2610 = vmatprep.subr.bf16.mxu0 0
        %2611 = vmatpush1.bf16.msra.mxu0 %v2574
        %2612 = vmatprep.subr.bf16.mxu0 0
        %2613 = vmatpush1.bf16.msra.mxu0 %v2575
        %2614 = vmatprep.subr.bf16.mxu0 0
        %2615 = vmatpush1.bf16.msra.mxu0 %v2576
        %2616 = vmatprep.subr.bf16.mxu0 0
        %2617 = vmatpush1.bf16.msra.mxu0 %v2577
        %2618 = vmatprep.subr.bf16.mxu0 0
        %2619 = vmatpush1.bf16.msra.mxu0 %v2578
        %2620 = vmatprep.subr.bf16.mxu0 0
        %2621 = vmatpush1.bf16.msra.mxu0 %v2579
        %2622 = vmatprep.subr.bf16.mxu0 0
        %2623 = vmatpush1.bf16.msra.mxu0 %v2580
        %2624 = vmatprep.subr.bf16.mxu0 0
        %2625 = vmatpush1.bf16.msra.mxu0 %v2581
        %2626 = vmatprep.subr.bf16.mxu0 0
        %2627 = vmatpush1.bf16.msra.mxu0 %v2582
        %2628 = vmatprep.subr.bf16.mxu0 0
        %2629 = vmatpush1.bf16.msra.mxu0 %v2583
        %2630 = vmatprep.subr.bf16.mxu0 0
        %2631 = vmatpush1.bf16.msra.mxu0 %v2584
        %2632 = vmatprep.subr.bf16.mxu0 0
        %2633 = vmatpush1.bf16.msra.mxu0 %v2585
        %2634 = vmatprep.mubr.bf16.mxu0 %v2436
        %2635 = vmatmul.mubr.bf16.gmra.mrb[0].mxu0 %v2435
        %v2636 = vpop.f32.mrb[0].mxu0
        %v2637 = vadd.f32 %v2504, %v2636
        %v2638 = vpop.f32.mrb[0].mxu0
        %v2639 = vpop.f32.mrb[0].mxu0
        %v2640 = vadd.f32 %v2504, %v2639
        %v2641 = vpop.f32.mrb[0].mxu0
        %2642 = vmatprep.mubr.bf16.mxu0 %v2438
        %2643 = vmatmul.mubr.bf16.gmra.mrb[0].mxu0 %v2437
        %v2644 = vpop.f32.mrb[0].mxu0
        %v2645 = vadd.f32 %v2504, %v2644
        %v2646 = vpop.f32.mrb[0].mxu0
        %v2647 = vpop.f32.mrb[0].mxu0
        %v2648 = vadd.f32 %v2504, %v2647
        %v2649 = vpop.f32.mrb[0].mxu0
        %2650 = vmatprep.mubr.bf16.mxu0 %v2440
        %2651 = vmatmul.mubr.bf16.gmra.mrb[0].mxu0 %v2439
        %v2652 = vpop.f32.mrb[0].mxu0
        %v2653 = vadd.f32 %v2504, %v2652
        %v2654 = vpop.f32.mrb[0].mxu0
        %v2655 = vpop.f32.mrb[0].mxu0
        %v2656 = vadd.f32 %v2504, %v2655
        %v2657 = vpop.f32.mrb[0].mxu0
        %2658 = vmatprep.mubr.bf16.mxu0 %v2442
        %2659 = vmatmul.mubr.bf16.gmra.mrb[0].mxu0 %v2441
        %v2660 = vpop.f32.mrb[0].mxu0
        %v2661 = vadd.f32 %v2504, %v2660
        %v2662 = vpop.f32.mrb[0].mxu0
        %v2663 = vpop.f32.mrb[0].mxu0
        %v2664 = vadd.f32 %v2504, %v2663
        %v2665 = vpop.f32.mrb[0].mxu0
        %2666 = vmatprep.mubr.bf16.mxu0 %v2444
        %2667 = vmatmul.mubr.bf16.gmra.mrb[0].mxu0 %v2443
        %v2668 = vpop.f32.mrb[0].mxu0
        %v2669 = vadd.f32 %v2504, %v2668
        %v2670 = vpop.f32.mrb[0].mxu0
        %v2671 = vpop.f32.mrb[0].mxu0
        %v2672 = vadd.f32 %v2504, %v2671
        %v2673 = vpop.f32.mrb[0].mxu0
        %2674 = vmatprep.mubr.bf16.mxu0 %v2446
        %2675 = vmatmul.mubr.bf16.gmra.mrb[0].mxu0 %v2445
        %v2676 = vpop.f32.mrb[0].mxu0
        %v2677 = vadd.f32 %v2504, %v2676
        %v2678 = vpop.f32.mrb[0].mxu0
        %v2679 = vpop.f32.mrb[0].mxu0
        %v2680 = vadd.f32 %v2504, %v2679
        %v2681 = vpop.f32.mrb[0].mxu0
        %2682 = vmatprep.mubr.bf16.mxu0 %v2448
        %2683 = vmatmul.mubr.bf16.gmra.mrb[0].mxu0 %v2447
        %v2684 = vpop.f32.mrb[0].mxu0
        %v2685 = vadd.f32 %v2504, %v2684
        %v2686 = vpop.f32.mrb[0].mxu0
        %v2687 = vpop.f32.mrb[0].mxu0
        %v2688 = vadd.f32 %v2504, %v2687
        %v2689 = vpop.f32.mrb[0].mxu0
        %2690 = vmatprep.mubr.bf16.mxu0 %v2450
        %2691 = vmatmul.mubr.bf16.gmra.mrb[0].mxu0 %v2449
        %v2692 = vpop.f32.mrb[0].mxu0
        %v2693 = vadd.f32 %v2504, %v2692
        %v2694 = vpop.f32.mrb[0].mxu0
        %v2695 = vpop.f32.mrb[0].mxu0
        %v2696 = vadd.f32 %v2504, %v2695
        %v2697 = vpop.f32.mrb[0].mxu0
        %2698 = vmatprep.mubr.bf16.mxu0 %v2452
        %2699 = vmatmul.mubr.bf16.gmra.mrb[0].mxu0 %v2451
        %v2700 = vpop.f32.mrb[0].mxu0
        %v2701 = vadd.f32 %v2504, %v2700
        %v2702 = vpop.f32.mrb[0].mxu0
        %v2703 = vpop.f32.mrb[0].mxu0
        %v2704 = vadd.f32 %v2504, %v2703
        %v2705 = vpop.f32.mrb[0].mxu0
        %2706 = vmatprep.mubr.bf16.mxu0 %v2454
        %2707 = vmatmul.mubr.bf16.gmra.mrb[0].mxu0 %v2453
        %v2708 = vpop.f32.mrb[0].mxu0
        %v2709 = vadd.f32 %v2504, %v2708
        %v2710 = vpop.f32.mrb[0].mxu0
        %v2711 = vpop.f32.mrb[0].mxu0
        %v2712 = vadd.f32 %v2504, %v2711
        %v2713 = vpop.f32.mrb[0].mxu0
        %2714 = vmatprep.mubr.bf16.mxu0 %v2456
        %2715 = vmatmul.mubr.bf16.gmra.mrb[0].mxu0 %v2455
        %v2716 = vpop.f32.mrb[0].mxu0
        %v2717 = vadd.f32 %v2504, %v2716
        %v2718 = vpop.f32.mrb[0].mxu0
        %v2719 = vpop.f32.mrb[0].mxu0
        %v2720 = vadd.f32 %v2504, %v2719
        %v2721 = vpop.f32.mrb[0].mxu0
        %2722 = vmatprep.mubr.bf16.mxu0 %v2458
        %2723 = vmatmul.mubr.bf16.gmra.mrb[0].mxu0 %v2457
        %v2724 = vpop.f32.mrb[0].mxu0
        %v2725 = vadd.f32 %v2504, %v2724
        %v2726 = vpop.f32.mrb[0].mxu0
        %v2727 = vpop.f32.mrb[0].mxu0
        %v2728 = vadd.f32 %v2504, %v2727
        %v2729 = vpop.f32.mrb[0].mxu0
        %2730 = vmatprep.mubr.bf16.mxu0 %v2460
        %2731 = vmatmul.mubr.bf16.gmra.mrb[0].mxu0 %v2459
        %v2732 = vpop.f32.mrb[0].mxu0
        %v2733 = vadd.f32 %v2504, %v2732
        %v2734 = vpop.f32.mrb[0].mxu0
        %v2735 = vpop.f32.mrb[0].mxu0
        %v2736 = vadd.f32 %v2504, %v2735
        %v2737 = vpop.f32.mrb[0].mxu0
        %2738 = vmatprep.mubr.bf16.mxu0 %v2462
        %2739 = vmatmul.mubr.bf16.gmra.mrb[0].mxu0 %v2461
        %v2740 = vpop.f32.mrb[0].mxu0
        %v2741 = vadd.f32 %v2504, %v2740
        %v2742 = vpop.f32.mrb[0].mxu0
        %v2743 = vpop.f32.mrb[0].mxu0
        %v2744 = vadd.f32 %v2504, %v2743
        %v2745 = vpop.f32.mrb[0].mxu0
        %2746 = vmatprep.mubr.bf16.mxu0 %v2464
        %2747 = vmatmul.mubr.bf16.gmra.mrb[0].mxu0 %v2463
        %v2748 = vpop.f32.mrb[0].mxu0
        %v2749 = vadd.f32 %v2504, %v2748
        %v2750 = vpop.f32.mrb[0].mxu0
        %v2751 = vpop.f32.mrb[0].mxu0
        %v2752 = vadd.f32 %v2504, %v2751
        %v2753 = vpop.f32.mrb[0].mxu0
        %2754 = vmatprep.mubr.bf16.mxu0 %v2466
        %2755 = vmatmul.mubr.bf16.gmra.mrb[0].mxu0 %v2465
        %v2756 = vpop.f32.mrb[0].mxu0
        %v2757 = vadd.f32 %v2504, %v2756
        %v2758 = vpop.f32.mrb[0].mxu0
        %v2759 = vpop.f32.mrb[0].mxu0
        %v2760 = vadd.f32 %v2504, %v2759
        %v2761 = vpop.f32.mrb[0].mxu0
        %2762 = vdwg.mxu0
        %vm2763 = vcmask 654336
        %2764 = vst.msk [vmem:[%s398] sm:$0xff] %vm2763, %v2637
        %2765 = vst.msk [vmem:[%s398 + $0x8] sm:$0xff] %vm2763, %v2640
        %2766 = vst.msk [vmem:[%s398 + $0x10] sm:$0xff] %vm2763, %v2645
        %2767 = vst.msk [vmem:[%s398 + $0x18] sm:$0xff] %vm2763, %v2648
        %2768 = vst.msk [vmem:[%s398 + $0x20] sm:$0xff] %vm2763, %v2653
        %2769 = vst.msk [vmem:[%s398 + $0x28] sm:$0xff] %vm2763, %v2656
        %2770 = vst.msk [vmem:[%s398 + $0x30] sm:$0xff] %vm2763, %v2661
        %2771 = vst.msk [vmem:[%s398 + $0x38] sm:$0xff] %vm2763, %v2664
        %2772 = vst.msk [vmem:[%s398 + $0x40] sm:$0xff] %vm2763, %v2669
        %2773 = vst.msk [vmem:[%s398 + $0x48] sm:$0xff] %vm2763, %v2672
        %2774 = vst.msk [vmem:[%s398 + $0x50] sm:$0xff] %vm2763, %v2677
        %2775 = vst.msk [vmem:[%s398 + $0x58] sm:$0xff] %vm2763, %v2680
        %2776 = vst.msk [vmem:[%s398 + $0x60] sm:$0xff] %vm2763, %v2685
        %2777 = vst.msk [vmem:[%s398 + $0x68] sm:$0xff] %vm2763, %v2688
        %2778 = vst.msk [vmem:[%s398 + $0x70] sm:$0xff] %vm2763, %v2693
        %2779 = vst.msk [vmem:[%s398 + $0x78] sm:$0xff] %vm2763, %v2696
        %2780 = vst.msk [vmem:[%s398 + $0x80] sm:$0xff] %vm2763, %v2701
        %2781 = vst.msk [vmem:[%s398 + $0x88] sm:$0xff] %vm2763, %v2704
        %2782 = vst.msk [vmem:[%s398 + $0x90] sm:$0xff] %vm2763, %v2709
        %2783 = vst.msk [vmem:[%s398 + $0x98] sm:$0xff] %vm2763, %v2712
        %2784 = vst.msk [vmem:[%s398 + $0xa0] sm:$0xff] %vm2763, %v2717
        %2785 = vst.msk [vmem:[%s398 + $0xa8] sm:$0xff] %vm2763, %v2720
        %2786 = vst.msk [vmem:[%s398 + $0xb0] sm:$0xff] %vm2763, %v2725
        %2787 = vst.msk [vmem:[%s398 + $0xb8] sm:$0xff] %vm2763, %v2728
        %2788 = vst.msk [vmem:[%s398 + $0xc0] sm:$0xff] %vm2763, %v2733
        %2789 = vst.msk [vmem:[%s398 + $0xc8] sm:$0xff] %vm2763, %v2736
        %2790 = vst.msk [vmem:[%s398 + $0xd0] sm:$0xff] %vm2763, %v2741
        %2791 = vst.msk [vmem:[%s398 + $0xd8] sm:$0xff] %vm2763, %v2744
        %2792 = vst.msk [vmem:[%s398 + $0xe0] sm:$0xff] %vm2763, %v2749
        %2793 = vst.msk [vmem:[%s398 + $0xe8] sm:$0xff] %vm2763, %v2752
        %2794 = vst.msk [vmem:[%s398 + $0xf0] sm:$0xff] %vm2763, %v2757
        %2795 = vst.msk [vmem:[%s398 + $0xf8] sm:$0xff] %vm2763, %v2760
        %s2796 = sand.u32 %s227, 1
        %s2797 = sand.u32 %s227, 1
        %s2798 = smul.addr %s2797, 256
        %s2799 = scalar_lea.vmem [#allocation9], %s2798
        // Predicated region
        $region73: #{tpu_custom_call.1} parent=55 // pred_check
          %p2800 = pneg %p237
        $region74: #{tpu_custom_call.1} parent=55 // pred_check_branch
          %2802 = sbr.rel (%p2800) target = $region76
        $region75: #{tpu_custom_call.1} parent=55 // pred_region
          %s2803 = smul.u32 32, %s25
          %s2804 = ssub.s32 63, %s2803
          %p2805 = scmp.lt.s32.totalorder %s2804, 32
          %s2806 = scalar_select %p2805, %s2804, 32
          %s2807 = smul.u32 128, %s2806
          %p2808 = scmp.ne.s32.totalorder 0, %s2807
          %s2809 = smul.addr %s2803, 8
          %s2810 = scalar_lea.vmem %s9, %s2809
          // Predicated region
          $region77: #{tpu_custom_call.1} parent=75 // pred_check
            %p2811 = pneg %p2808
          $region78: #{tpu_custom_call.1} parent=75 // pred_check_branch
            %2813 = sbr.rel (%p2811) target = $region80
          $region79: #{tpu_custom_call.1} parent=75 // pred_region
            // Predicated region
            $region81: #{tpu_custom_call.1} parent=79 // pred_check
              _
            $region82: #{tpu_custom_call.1} parent=79 // pred_check_branch
              %2815 = sbr.rel (0) target = $region84
            $region83: #{tpu_custom_call.1} parent=79 // pred_region
              // Predicated region
              $region103: #{tpu_custom_call.1} parent=83 // pred_check
                _
              $region104: #{tpu_custom_call.1} parent=83 // pred_check_branch
                %2926 = sbr.rel (0) target = $region106
              $region105: #{tpu_custom_call.1} parent=83 // pred_region
                %s2927 = sshrl.u32 %s2806, 5
                // While loop
                $region107: #{tpu_custom_call.1} parent=105 // loop_pre_header
                  _
                $region108: #{tpu_custom_call.1} parent=105 // loop_header
                  %s2929 = sphi 0, %s2931
                  %p2930 = scmp.ge.s32.totalorder %s2929, %s2927
                  %s2934 = sphi 0, %s3003
                  %s2935 = sphi %s2799, %s3006
                  %s2936 = sphi %s2810, %s3007
                $region109: #{tpu_custom_call.1} parent=105 // loop_header_branch
                  %2933 = sbr.rel (%p2930) target = $region113
                $region110: #{tpu_custom_call.1} parent=105 // loop_body
                  %v2937 = vld [vmem:[%s2935] sm:$0xff]
                  %2938 = vst [vmem:[%s2936] sm:$0xff] %v2937
                  %v2939 = vld [vmem:[%s2935 + $0x8] sm:$0xff]
                  %2940 = vst [vmem:[%s2936 + $0x8] sm:$0xff] %v2939
                  %v2941 = vld [vmem:[%s2935 + $0x10] sm:$0xff]
                  %2942 = vst [vmem:[%s2936 + $0x10] sm:$0xff] %v2941
                  %v2943 = vld [vmem:[%s2935 + $0x18] sm:$0xff]
                  %2944 = vst [vmem:[%s2936 + $0x18] sm:$0xff] %v2943
                  %v2945 = vld [vmem:[%s2935 + $0x20] sm:$0xff]
                  %2946 = vst [vmem:[%s2936 + $0x20] sm:$0xff] %v2945
                  %v2947 = vld [vmem:[%s2935 + $0x28] sm:$0xff]
                  %2948 = vst [vmem:[%s2936 + $0x28] sm:$0xff] %v2947
                  %v2949 = vld [vmem:[%s2935 + $0x30] sm:$0xff]
                  %2950 = vst [vmem:[%s2936 + $0x30] sm:$0xff] %v2949
                  %v2951 = vld [vmem:[%s2935 + $0x38] sm:$0xff]
                  %2952 = vst [vmem:[%s2936 + $0x38] sm:$0xff] %v2951
                  %v2953 = vld [vmem:[%s2935 + $0x40] sm:$0xff]
                  %2954 = vst [vmem:[%s2936 + $0x40] sm:$0xff] %v2953
                  %v2955 = vld [vmem:[%s2935 + $0x48] sm:$0xff]
                  %2956 = vst [vmem:[%s2936 + $0x48] sm:$0xff] %v2955
                  %v2957 = vld [vmem:[%s2935 + $0x50] sm:$0xff]
                  %2958 = vst [vmem:[%s2936 + $0x50] sm:$0xff] %v2957
                  %v2959 = vld [vmem:[%s2935 + $0x58] sm:$0xff]
                  %2960 = vst [vmem:[%s2936 + $0x58] sm:$0xff] %v2959
                  %v2961 = vld [vmem:[%s2935 + $0x60] sm:$0xff]
                  %2962 = vst [vmem:[%s2936 + $0x60] sm:$0xff] %v2961
                  %v2963 = vld [vmem:[%s2935 + $0x68] sm:$0xff]
                  %2964 = vst [vmem:[%s2936 + $0x68] sm:$0xff] %v2963
                  %v2965 = vld [vmem:[%s2935 + $0x70] sm:$0xff]
                  %2966 = vst [vmem:[%s2936 + $0x70] sm:$0xff] %v2965
                  %v2967 = vld [vmem:[%s2935 + $0x78] sm:$0xff]
                  %2968 = vst [vmem:[%s2936 + $0x78] sm:$0xff] %v2967
                  %v2969 = vld [vmem:[%s2935 + $0x80] sm:$0xff]
                  %2970 = vst [vmem:[%s2936 + $0x80] sm:$0xff] %v2969
                  %v2971 = vld [vmem:[%s2935 + $0x88] sm:$0xff]
                  %2972 = vst [vmem:[%s2936 + $0x88] sm:$0xff] %v2971
                  %v2973 = vld [vmem:[%s2935 + $0x90] sm:$0xff]
                  %2974 = vst [vmem:[%s2936 + $0x90] sm:$0xff] %v2973
                  %v2975 = vld [vmem:[%s2935 + $0x98] sm:$0xff]
                  %2976 = vst [vmem:[%s2936 + $0x98] sm:$0xff] %v2975
                  %v2977 = vld [vmem:[%s2935 + $0xa0] sm:$0xff]
                  %2978 = vst [vmem:[%s2936 + $0xa0] sm:$0xff] %v2977
                  %v2979 = vld [vmem:[%s2935 + $0xa8] sm:$0xff]
                  %2980 = vst [vmem:[%s2936 + $0xa8] sm:$0xff] %v2979
                  %v2981 = vld [vmem:[%s2935 + $0xb0] sm:$0xff]
                  %2982 = vst [vmem:[%s2936 + $0xb0] sm:$0xff] %v2981
                  %v2983 = vld [vmem:[%s2935 + $0xb8] sm:$0xff]
                  %2984 = vst [vmem:[%s2936 + $0xb8] sm:$0xff] %v2983
                  %v2985 = vld [vmem:[%s2935 + $0xc0] sm:$0xff]
                  %2986 = vst [vmem:[%s2936 + $0xc0] sm:$0xff] %v2985
                  %v2987 = vld [vmem:[%s2935 + $0xc8] sm:$0xff]
                  %2988 = vst [vmem:[%s2936 + $0xc8] sm:$0xff] %v2987
                  %v2989 = vld [vmem:[%s2935 + $0xd0] sm:$0xff]
                  %2990 = vst [vmem:[%s2936 + $0xd0] sm:$0xff] %v2989
                  %v2991 = vld [vmem:[%s2935 + $0xd8] sm:$0xff]
                  %2992 = vst [vmem:[%s2936 + $0xd8] sm:$0xff] %v2991
                  %v2993 = vld [vmem:[%s2935 + $0xe0] sm:$0xff]
                  %2994 = vst [vmem:[%s2936 + $0xe0] sm:$0xff] %v2993
                  %v2995 = vld [vmem:[%s2935 + $0xe8] sm:$0xff]
                  %2996 = vst [vmem:[%s2936 + $0xe8] sm:$0xff] %v2995
                  %v2997 = vld [vmem:[%s2935 + $0xf0] sm:$0xff]
                  %2998 = vst [vmem:[%s2936 + $0xf0] sm:$0xff] %v2997
                  %v2999 = vld [vmem:[%s2935 + $0xf8] sm:$0xff]
                  %3000 = vst [vmem:[%s2936 + $0xf8] sm:$0xff] %v2999
                  %s3001 = sadd.s32 1, %s2934
                  %p3002 = scmp.ge.s32.totalorder %s3001, %s2927
                  %s3003 = scalar_select %p3002, 0, %s3001
                  %s3004 = smul.u32 %s3003, 256
                  %s3005 = smul.u32 %s3003, 256
                  %s3006 = scalar_lea.vmem %s2799, %s3004 [#allocation9]
                  %s3007 = scalar_lea.vmem %s2810, %s3005
                $region111: #{tpu_custom_call.1} parent=105 // loop_footer
                  %s2931 = sadd.s32 %s2929, 1
                $region112: #{tpu_custom_call.1} parent=105 // loop_footer_branch
                  %2928 = sbr.rel target = $region108
                $region113: #{tpu_custom_call.1} parent=105 // loop_exit
                  _
                %s3008 = sshrl.u32 %s2806, 5
                %s3009 = sand.u32 %s2806, 31
                %s3010 = smul.u32 %s3008, 32
                %s3011 = smul.u32 8, %s3010
                %s3012 = scalar_lea.vmem %s2799, %s3011 [#allocation9]
                %s3013 = smul.u32 8, %s3010
                %s3014 = scalar_lea.vmem %s2810, %s3013
                // While loop
                $region114: #{tpu_custom_call.1} parent=105 // loop_pre_header
                  _
                $region115: #{tpu_custom_call.1} parent=105 // loop_header
                  %s3016 = sphi 0, %s3018
                  %p3017 = scmp.ge.s32.totalorder %s3016, %s3009
                  %s3021 = sphi 0, %s3028
                  %s3022 = sphi %s3012, %s3031
                  %s3023 = sphi %s3014, %s3032
                $region116: #{tpu_custom_call.1} parent=105 // loop_header_branch
                  %3020 = sbr.rel (%p3017) target = $region120
                $region117: #{tpu_custom_call.1} parent=105 // loop_body
                  %v3024 = vld [vmem:[%s3022] sm:$0xff]
                  %3025 = vst [vmem:[%s3023] sm:$0xff] %v3024
                  %s3026 = sadd.s32 1, %s3021
                  %p3027 = scmp.ge.s32.totalorder %s3026, %s3009
                  %s3028 = scalar_select %p3027, 0, %s3026
                  %s3029 = smul.u32 %s3028, 8
                  %s3030 = smul.u32 %s3028, 8
                  %s3031 = scalar_lea.vmem %s3012, %s3029 [#allocation9]
                  %s3032 = scalar_lea.vmem %s3014, %s3030
                $region118: #{tpu_custom_call.1} parent=105 // loop_footer
                  %s3018 = sadd.s32 %s3016, 1
                $region119: #{tpu_custom_call.1} parent=105 // loop_footer_branch
                  %3015 = sbr.rel target = $region115
                $region120: #{tpu_custom_call.1} parent=105 // loop_exit
                  _
              $region106: #{tpu_custom_call.1} parent=83 // pred_fallthru
                _
              // Predicated region
              $region121: #{tpu_custom_call.1} parent=83 // pred_check
                _
              $region122: #{tpu_custom_call.1} parent=83 // pred_check_branch
                %3034 = sbr.rel target = $region124
              $region123: #{tpu_custom_call.1} parent=83 // pred_region
                _
              $region124: #{tpu_custom_call.1} parent=83 // pred_fallthru
                _
            $region84: #{tpu_custom_call.1} parent=79 // pred_fallthru
              _
            // Predicated region
            $region85: #{tpu_custom_call.1} parent=79 // pred_check
              _
            $region86: #{tpu_custom_call.1} parent=79 // pred_check_branch
              %2817 = sbr.rel target = $region88
            $region87: #{tpu_custom_call.1} parent=79 // pred_region
              %s2819 = sshrl.u32 %s2806, 5
              // While loop
              $region89: #{tpu_custom_call.1} parent=87 // loop_pre_header
                _
              $region90: #{tpu_custom_call.1} parent=87 // loop_header
                %s2821 = sphi 0, %s2823
                %p2822 = scmp.ge.s32.totalorder %s2821, %s2819
                %s2826 = sphi 0, %s2895
                %s2827 = sphi %s2799, %s2898
                %s2828 = sphi %s2810, %s2899
              $region91: #{tpu_custom_call.1} parent=87 // loop_header_branch
                %2825 = sbr.rel (%p2822) target = $region95
              $region92: #{tpu_custom_call.1} parent=87 // loop_body
                %v2829 = vld [vmem:[%s2827] sm:$0xff]
                %2830 = vst [vmem:[%s2828] sm:$0xff] %v2829
                %v2831 = vld [vmem:[%s2827 + $0x8] sm:$0xff]
                %2832 = vst [vmem:[%s2828 + $0x8] sm:$0xff] %v2831
                %v2833 = vld [vmem:[%s2827 + $0x10] sm:$0xff]
                %2834 = vst [vmem:[%s2828 + $0x10] sm:$0xff] %v2833
                %v2835 = vld [vmem:[%s2827 + $0x18] sm:$0xff]
                %2836 = vst [vmem:[%s2828 + $0x18] sm:$0xff] %v2835
                %v2837 = vld [vmem:[%s2827 + $0x20] sm:$0xff]
                %2838 = vst [vmem:[%s2828 + $0x20] sm:$0xff] %v2837
                %v2839 = vld [vmem:[%s2827 + $0x28] sm:$0xff]
                %2840 = vst [vmem:[%s2828 + $0x28] sm:$0xff] %v2839
                %v2841 = vld [vmem:[%s2827 + $0x30] sm:$0xff]
                %2842 = vst [vmem:[%s2828 + $0x30] sm:$0xff] %v2841
                %v2843 = vld [vmem:[%s2827 + $0x38] sm:$0xff]
                %2844 = vst [vmem:[%s2828 + $0x38] sm:$0xff] %v2843
                %v2845 = vld [vmem:[%s2827 + $0x40] sm:$0xff]
                %2846 = vst [vmem:[%s2828 + $0x40] sm:$0xff] %v2845
                %v2847 = vld [vmem:[%s2827 + $0x48] sm:$0xff]
                %2848 = vst [vmem:[%s2828 + $0x48] sm:$0xff] %v2847
                %v2849 = vld [vmem:[%s2827 + $0x50] sm:$0xff]
                %2850 = vst [vmem:[%s2828 + $0x50] sm:$0xff] %v2849
                %v2851 = vld [vmem:[%s2827 + $0x58] sm:$0xff]
                %2852 = vst [vmem:[%s2828 + $0x58] sm:$0xff] %v2851
                %v2853 = vld [vmem:[%s2827 + $0x60] sm:$0xff]
                %2854 = vst [vmem:[%s2828 + $0x60] sm:$0xff] %v2853
                %v2855 = vld [vmem:[%s2827 + $0x68] sm:$0xff]
                %2856 = vst [vmem:[%s2828 + $0x68] sm:$0xff] %v2855
                %v2857 = vld [vmem:[%s2827 + $0x70] sm:$0xff]
                %2858 = vst [vmem:[%s2828 + $0x70] sm:$0xff] %v2857
                %v2859 = vld [vmem:[%s2827 + $0x78] sm:$0xff]
                %2860 = vst [vmem:[%s2828 + $0x78] sm:$0xff] %v2859
                %v2861 = vld [vmem:[%s2827 + $0x80] sm:$0xff]
                %2862 = vst [vmem:[%s2828 + $0x80] sm:$0xff] %v2861
                %v2863 = vld [vmem:[%s2827 + $0x88] sm:$0xff]
                %2864 = vst [vmem:[%s2828 + $0x88] sm:$0xff] %v2863
                %v2865 = vld [vmem:[%s2827 + $0x90] sm:$0xff]
                %2866 = vst [vmem:[%s2828 + $0x90] sm:$0xff] %v2865
                %v2867 = vld [vmem:[%s2827 + $0x98] sm:$0xff]
                %2868 = vst [vmem:[%s2828 + $0x98] sm:$0xff] %v2867
                %v2869 = vld [vmem:[%s2827 + $0xa0] sm:$0xff]
                %2870 = vst [vmem:[%s2828 + $0xa0] sm:$0xff] %v2869
                %v2871 = vld [vmem:[%s2827 + $0xa8] sm:$0xff]
                %2872 = vst [vmem:[%s2828 + $0xa8] sm:$0xff] %v2871
                %v2873 = vld [vmem:[%s2827 + $0xb0] sm:$0xff]
                %2874 = vst [vmem:[%s2828 + $0xb0] sm:$0xff] %v2873
                %v2875 = vld [vmem:[%s2827 + $0xb8] sm:$0xff]
                %2876 = vst [vmem:[%s2828 + $0xb8] sm:$0xff] %v2875
                %v2877 = vld [vmem:[%s2827 + $0xc0] sm:$0xff]
                %2878 = vst [vmem:[%s2828 + $0xc0] sm:$0xff] %v2877
                %v2879 = vld [vmem:[%s2827 + $0xc8] sm:$0xff]
                %2880 = vst [vmem:[%s2828 + $0xc8] sm:$0xff] %v2879
                %v2881 = vld [vmem:[%s2827 + $0xd0] sm:$0xff]
                %2882 = vst [vmem:[%s2828 + $0xd0] sm:$0xff] %v2881
                %v2883 = vld [vmem:[%s2827 + $0xd8] sm:$0xff]
                %2884 = vst [vmem:[%s2828 + $0xd8] sm:$0xff] %v2883
                %v2885 = vld [vmem:[%s2827 + $0xe0] sm:$0xff]
                %2886 = vst [vmem:[%s2828 + $0xe0] sm:$0xff] %v2885
                %v2887 = vld [vmem:[%s2827 + $0xe8] sm:$0xff]
                %2888 = vst [vmem:[%s2828 + $0xe8] sm:$0xff] %v2887
                %v2889 = vld [vmem:[%s2827 + $0xf0] sm:$0xff]
                %2890 = vst [vmem:[%s2828 + $0xf0] sm:$0xff] %v2889
                %v2891 = vld [vmem:[%s2827 + $0xf8] sm:$0xff]
                %2892 = vst [vmem:[%s2828 + $0xf8] sm:$0xff] %v2891
                %s2893 = sadd.s32 1, %s2826
                %p2894 = scmp.ge.s32.totalorder %s2893, %s2819
                %s2895 = scalar_select %p2894, 0, %s2893
                %s2896 = smul.u32 %s2895, 256
                %s2897 = smul.u32 %s2895, 256
                %s2898 = scalar_lea.vmem %s2799, %s2896 [#allocation9]
                %s2899 = scalar_lea.vmem %s2810, %s2897
              $region93: #{tpu_custom_call.1} parent=87 // loop_footer
                %s2823 = sadd.s32 %s2821, 1
              $region94: #{tpu_custom_call.1} parent=87 // loop_footer_branch
                %2820 = sbr.rel target = $region90
              $region95: #{tpu_custom_call.1} parent=87 // loop_exit
                _
              %s2900 = sshrl.u32 %s2806, 5
              %s2901 = sand.u32 %s2806, 31
              %s2902 = smul.u32 %s2900, 32
              %s2903 = smul.u32 8, %s2902
              %s2904 = scalar_lea.vmem %s2799, %s2903 [#allocation9]
              %s2905 = smul.u32 8, %s2902
              %s2906 = scalar_lea.vmem %s2810, %s2905
              // While loop
              $region96: #{tpu_custom_call.1} parent=87 // loop_pre_header
                _
              $region97: #{tpu_custom_call.1} parent=87 // loop_header
                %s2908 = sphi 0, %s2910
                %p2909 = scmp.ge.s32.totalorder %s2908, %s2901
                %s2913 = sphi 0, %s2920
                %s2914 = sphi %s2904, %s2923
                %s2915 = sphi %s2906, %s2924
              $region98: #{tpu_custom_call.1} parent=87 // loop_header_branch
                %2912 = sbr.rel (%p2909) target = $region102
              $region99: #{tpu_custom_call.1} parent=87 // loop_body
                %v2916 = vld [vmem:[%s2914] sm:$0xff]
                %2917 = vst [vmem:[%s2915] sm:$0xff] %v2916
                %s2918 = sadd.s32 1, %s2913
                %p2919 = scmp.ge.s32.totalorder %s2918, %s2901
                %s2920 = scalar_select %p2919, 0, %s2918
                %s2921 = smul.u32 %s2920, 8
                %s2922 = smul.u32 %s2920, 8
                %s2923 = scalar_lea.vmem %s2904, %s2921 [#allocation9]
                %s2924 = scalar_lea.vmem %s2906, %s2922
              $region100: #{tpu_custom_call.1} parent=87 // loop_footer
                %s2910 = sadd.s32 %s2908, 1
              $region101: #{tpu_custom_call.1} parent=87 // loop_footer_branch
                %2907 = sbr.rel target = $region97
              $region102: #{tpu_custom_call.1} parent=87 // loop_exit
                _
            $region88: #{tpu_custom_call.1} parent=79 // pred_fallthru
              _
          $region80: #{tpu_custom_call.1} parent=75 // pred_fallthru
            _
          %3035 = vnop
        $region76: #{tpu_custom_call.1} parent=55 // pred_fallthru
          _
      $region56: #{tpu_custom_call.1} parent=5 // pred_fallthru
        _
      %p3036 = scmp.le.s32.totalorder 2, %s20
      // Predicated region
      $region125: #{tpu_custom_call.1} parent=5 // pred_check
        %p3037 = pneg %p3036
      $region126: #{tpu_custom_call.1} parent=5 // pred_check_branch
        %3039 = sbr.rel (%p3037) target = $region128
      $region127: #{tpu_custom_call.1} parent=5 // pred_region
        %s3040 = ssub.s32 %s20, 2
        // Predicated region
        $region129: #{tpu_custom_call.1} parent=127 // pred_check
          %p3041 = pneg %p243
        $region130: #{tpu_custom_call.1} parent=127 // pred_check_branch
          %3043 = sbr.rel (%p3041) target = $region132
        $region131: #{tpu_custom_call.1} parent=127 // pred_region
          %s3044 = sand.u32 %s228, 1
          %s3045 = sand.u32 %s228, 1
          %s3046 = smul.addr %s3045, 256
          %s3047 = scalar_lea.vmem [#allocation9], %s3046
        $region132: #{tpu_custom_call.1} parent=127 // pred_fallthru
          _
      $region128: #{tpu_custom_call.1} parent=5 // pred_fallthru
        _
    $region6: #{tpu_custom_call.1} parent=1 // loop_footer
      %s24 = sadd.s32 1, %s20
    $region7: #{tpu_custom_call.1} parent=1 // loop_footer_branch
      %19 = sbr.rel target = $region3
    $region8: #{tpu_custom_call.1} parent=1 // loop_exit
      _
    %3048 = vsyncpa [#allocation3], 1
    %s3049 = scalar_lea.sflag [#allocation3], 1
    %3050 = vsyncpa %s3049, 1
    %3051 = vsyncpa [#allocation5], 1
    %3052 = vsyncpa [#allocation8], 1

</llo_original>
